<compile_context>
chip_gen: v7x
topology: tpu7x:2x2x1
jax: 0.10.0
libtpu: 0.0.40
codegen_flags: <defaults>
</compile_context>

<pallas_src>
import jax
import jax.numpy as jnp
from jax.experimental import pallas as pl
from jax.experimental.pallas import tpu as pltpu

LOGICAL_DIMS = [784, 520, 320, 240, 120, 10]   # PyTorch Net layer widths
# Input dim kept at 784 (no pad); every out-feature dim rounded up to x128.
PADDED_DIMS = [784, 640, 384, 256, 128, 128]
DEFAULT_TB = 512                               # batch tile (MXU M dim)


def _round_up(n, m):
    return ((n + m - 1) // m) * m


def _mlp_kernel(x_ref,
                w1_ref, b1_ref,
                w2_ref, b2_ref,
                w3_ref, b3_ref,
                w4_ref, b4_ref,
                w5_ref, b5_ref,
                out_ref):
    def layer(h, w_ref, b_ref, relu):
        # bf16 x bf16 -> f32 accumulate on the MXU; bias + ReLU in f32 on the
        # VPU (portable to v5e, which has no bf16 VPU). astype is a no-op for
        # layer 1 since x is already bf16.
        acc = jnp.dot(h.astype(jnp.bfloat16), w_ref[...],
                      preferred_element_type=jnp.float32)
        acc = acc + b_ref[...]
        if relu:
            acc = jnp.maximum(acc, 0.0)
        return acc

    h = x_ref[...]                                   # (TB, 784) bf16
    h = layer(h, w1_ref, b1_ref, True)               # (TB, 640) f32
    h = layer(h, w2_ref, b2_ref, True)               # (TB, 384)
    h = layer(h, w3_ref, b3_ref, True)               # (TB, 256)
    h = layer(h, w4_ref, b4_ref, True)               # (TB, 128)
    out_ref[...] = layer(h, w5_ref, b5_ref, False)   # (TB, 128), cols 10.. are 0


def _pad_params(params):
    """Zero-pad logical (W:(in,out) f32, b:(out,) f32) params to PADDED_DIMS.
    Weights cast to bf16; biases kept f32 as (1, out_pad). Padding is exact:
    padded weight rows/cols and bias tails are zero, so padded lanes stay zero
    through every layer."""
    padded = []
    for i, (w, b) in enumerate(params):
        din, dout = PADDED_DIMS[i], PADDED_DIMS[i + 1]
        wp = jnp.pad(w.astype(jnp.bfloat16),
                     ((0, din - w.shape[0]), (0, dout - w.shape[1])))
        bv = b.reshape(1, -1).astype(jnp.float32)
        bp = jnp.pad(bv, ((0, 0), (0, dout - bv.shape[1])))
        padded.append((wp, bp))
    return padded


def net_forward(x, params, *, tile_b=DEFAULT_TB):
    """x: any shape flattening to (-1, 784) (e.g. (B,1,28,28)); params: list of
    (W:(in,out) f32, b:(out,) f32) per layer. Returns (B, 10) f32 logits."""
    x = x.reshape(-1, LOGICAL_DIMS[0]).astype(jnp.bfloat16)
    B = x.shape[0]

    # Pad batch only to a multiple of 8 (sublane); edge blocks handled by cdiv grid.
    b_pad = _round_up(B, 8)
    if b_pad != B:
        x = jnp.pad(x, ((0, b_pad - B), (0, 0)))

    tb = min(tile_b, b_pad)
    # When the batch allows >= 2 full 8-row steps, cap the tile so the grid has
    # at least 2 steps (feeds both TensorCores on v7x, limits over-padding).
    if b_pad > 8:
        tb = min(tb, _round_up(pl.cdiv(b_pad, 2), 8))
    grid = (pl.cdiv(b_pad, tb),)

    padded = _pad_params(params)

    flat_params = []
    in_specs = [pl.BlockSpec((tb, PADDED_DIMS[0]), lambda i: (i, 0))]
    for wp, bp in padded:
        flat_params.append(wp)
        flat_params.append(bp)
        # Constant index maps -> weights/biases stay resident in VMEM
        # (fetched once, not re-DMA'd per grid step).
        in_specs.append(pl.BlockSpec(wp.shape, lambda i: (0, 0)))
        in_specs.append(pl.BlockSpec(bp.shape, lambda i: (0, 0)))

    m_eff = grid[0] * tb
    flops = 2 * m_eff * sum(a * b for a, b in zip(PADDED_DIMS[:-1], PADDED_DIMS[1:]))
    bytes_accessed = (
        x.size * 2                                    # bf16 input stream
        + b_pad * PADDED_DIMS[-1] * 4                 # f32 output stream
        + sum(wp.size * 2 + bp.size * 4 for wp, bp in padded)
    )

    out = pl.pallas_call(
        _mlp_kernel,
        out_shape=jax.ShapeDtypeStruct((b_pad, PADDED_DIMS[-1]), jnp.float32),
        grid=grid,
        in_specs=in_specs,
        out_specs=pl.BlockSpec((tb, PADDED_DIMS[-1]), lambda i: (i, 0)),
        compiler_params=pltpu.CompilerParams(
            dimension_semantics=("parallel",),
        ),
        cost_estimate=pl.CostEstimate(
            flops=flops, transcendentals=0, bytes_accessed=bytes_accessed),
    )(x, *flat_params)

    return out[:B, : LOGICAL_DIMS[-1]]


def init_params(key):
    """Deterministic init mimicking nn.Linear default (U(-1/sqrt(fan_in), +)).
    Weights stored transposed as (in_features, out_features)."""
    params = []
    for i in range(len(LOGICAL_DIMS) - 1):
        fan_in, fan_out = LOGICAL_DIMS[i], LOGICAL_DIMS[i + 1]
        key, kw, kb = jax.random.split(key, 3)
        bound = 1.0 / jnp.sqrt(fan_in)
        w = jax.random.uniform(kw, (fan_in, fan_out), jnp.float32, -bound, bound)
        b = jax.random.uniform(kb, (fan_out,), jnp.float32, -bound, bound)
        params.append((w, b))
    return params


def reference_forward(x, params):
    """Pure-JAX reference with the same numerics as the kernel (bf16 matmul
    inputs, f32 accumulation, f32 bias/ReLU), using UNPADDED weights — so it
    also validates that the zero-padding is exact. Agreement with a pure-f32
    PyTorch reference would be ~1e-2 relative due to the bf16 inputs."""
    h = x.reshape(-1, LOGICAL_DIMS[0]).astype(jnp.float32)
    n = len(params)
    for i, (w, b) in enumerate(params):
        acc = jnp.dot(h.astype(jnp.bfloat16), w.astype(jnp.bfloat16),
                      preferred_element_type=jnp.float32) + b
        h = jnp.maximum(acc, 0.0) if i < n - 1 else acc
    return h


if __name__ == "__main__":
    key = jax.random.PRNGKey(0)
    key, kx = jax.random.split(key)
    # MNIST-like input; forward flattens to (-1, 784).
    x = jax.random.normal(kx, (8, 1, 28, 28), jnp.float32)

    params = init_params(jax.random.PRNGKey(0))

    out = jax.block_until_ready(net_forward(x, params))
    assert out.shape == (8, 10), out.shape

    ref = reference_forward(x, params)
    max_err = float(jnp.max(jnp.abs(out - ref)))
    assert jnp.allclose(out, ref, atol=5e-3, rtol=5e-3), f"mismatch, max_err={max_err}"

    print("KERNEL_OK")
</pallas_src>

<mosaic_0001>
module attributes {stable_mosaic.version = 11 : i64} {
  func.func @_mlp_kernel(%arg0: i32, %arg1: memref<8x784xbf16, #tpu.memory_space<vmem>>, %arg2: memref<784x640xbf16, #tpu.memory_space<vmem>>, %arg3: memref<1x640xf32, #tpu.memory_space<vmem>>, %arg4: memref<640x384xbf16, #tpu.memory_space<vmem>>, %arg5: memref<1x384xf32, #tpu.memory_space<vmem>>, %arg6: memref<384x256xbf16, #tpu.memory_space<vmem>>, %arg7: memref<1x256xf32, #tpu.memory_space<vmem>>, %arg8: memref<256x128xbf16, #tpu.memory_space<vmem>>, %arg9: memref<1x128xf32, #tpu.memory_space<vmem>>, %arg10: memref<128x128xbf16, #tpu.memory_space<vmem>>, %arg11: memref<1x128xf32, #tpu.memory_space<vmem>>, %arg12: memref<8x128xf32, #tpu.memory_space<vmem>>) attributes {dimension_semantics = [#tpu.dimension_semantics<parallel>], iteration_bounds = array<i64: 1>, scalar_prefetch = 0 : i64, scratch_operands = 0 : i64, tpu.core_type = #tpu.core_type<tc>, window_params = [{transform_indices = @transform_0, window_bounds = array<i64: 8, 784>}, {pipeline_mode = #tpu.pipeline_mode<synchronous>, transform_indices = @transform_1, window_bounds = array<i64: 784, 640>}, {pipeline_mode = #tpu.pipeline_mode<synchronous>, transform_indices = @transform_2, window_bounds = array<i64: 1, 640>}, {pipeline_mode = #tpu.pipeline_mode<synchronous>, transform_indices = @transform_3, window_bounds = array<i64: 640, 384>}, {pipeline_mode = #tpu.pipeline_mode<synchronous>, transform_indices = @transform_4, window_bounds = array<i64: 1, 384>}, {pipeline_mode = #tpu.pipeline_mode<synchronous>, transform_indices = @transform_5, window_bounds = array<i64: 384, 256>}, {pipeline_mode = #tpu.pipeline_mode<synchronous>, transform_indices = @transform_6, window_bounds = array<i64: 1, 256>}, {pipeline_mode = #tpu.pipeline_mode<synchronous>, transform_indices = @transform_7, window_bounds = array<i64: 256, 128>}, {pipeline_mode = #tpu.pipeline_mode<synchronous>, transform_indices = @transform_8, window_bounds = array<i64: 1, 128>}, {pipeline_mode = #tpu.pipeline_mode<synchronous>, transform_indices = @transform_9, window_bounds = array<i64: 128, 128>}, {pipeline_mode = #tpu.pipeline_mode<synchronous>, transform_indices = @transform_10, window_bounds = array<i64: 1, 128>}, {transform_indices = @transform_11, window_bounds = array<i64: 8, 128>}]} {
    %c0 = arith.constant 0 : index
    %c0_0 = arith.constant 0 : index
    %0 = vector.load %arg1[%c0, %c0_0] : memref<8x784xbf16, #tpu.memory_space<vmem>>, vector<8x784xbf16>
    %c0_1 = arith.constant 0 : index
    %c0_2 = arith.constant 0 : index
    %1 = vector.load %arg2[%c0_1, %c0_2] : memref<784x640xbf16, #tpu.memory_space<vmem>>, vector<784x640xbf16>
    %cst = arith.constant dense<0.000000e+00> : vector<8x640xf32>
    %2 = tpu.matmul %0, %1, %cst {dimension_numbers = #tpu.dot_dimension_numbers<[1], [0], [0], [1], [0, 0, 1, 1], [], []>} : vector<8x784xbf16>, vector<784x640xbf16>, vector<8x640xf32> -> vector<8x640xf32>
    %c0_3 = arith.constant 0 : index
    %c0_4 = arith.constant 0 : index
    %3 = vector.load %arg3[%c0_3, %c0_4] : memref<1x640xf32, #tpu.memory_space<vmem>>, vector<1x640xf32>
    %4 = vector.broadcast %3 : vector<1x640xf32> to vector<8x640xf32>
    %5 = arith.addf %2, %4 : vector<8x640xf32>
    %cst_5 = arith.constant 0.000000e+00 : f32
    %6 = vector.broadcast %cst_5 : f32 to vector<8x640xf32>
    %7 = arith.maximumf %5, %6 : vector<8x640xf32>
    %8 = arith.truncf %7 : vector<8x640xf32> to vector<8x640xbf16>
    %c0_6 = arith.constant 0 : index
    %c0_7 = arith.constant 0 : index
    %9 = vector.load %arg4[%c0_6, %c0_7] : memref<640x384xbf16, #tpu.memory_space<vmem>>, vector<640x384xbf16>
    %cst_8 = arith.constant dense<0.000000e+00> : vector<8x384xf32>
    %10 = tpu.matmul %8, %9, %cst_8 {dimension_numbers = #tpu.dot_dimension_numbers<[1], [0], [0], [1], [0, 0, 1, 1], [], []>} : vector<8x640xbf16>, vector<640x384xbf16>, vector<8x384xf32> -> vector<8x384xf32>
    %c0_9 = arith.constant 0 : index
    %c0_10 = arith.constant 0 : index
    %11 = vector.load %arg5[%c0_9, %c0_10] : memref<1x384xf32, #tpu.memory_space<vmem>>, vector<1x384xf32>
    %12 = vector.broadcast %11 : vector<1x384xf32> to vector<8x384xf32>
    %13 = arith.addf %10, %12 : vector<8x384xf32>
    %cst_11 = arith.constant 0.000000e+00 : f32
    %14 = vector.broadcast %cst_11 : f32 to vector<8x384xf32>
    %15 = arith.maximumf %13, %14 : vector<8x384xf32>
    %16 = arith.truncf %15 : vector<8x384xf32> to vector<8x384xbf16>
    %c0_12 = arith.constant 0 : index
    %c0_13 = arith.constant 0 : index
    %17 = vector.load %arg6[%c0_12, %c0_13] : memref<384x256xbf16, #tpu.memory_space<vmem>>, vector<384x256xbf16>
    %cst_14 = arith.constant dense<0.000000e+00> : vector<8x256xf32>
    %18 = tpu.matmul %16, %17, %cst_14 {dimension_numbers = #tpu.dot_dimension_numbers<[1], [0], [0], [1], [0, 0, 1, 1], [], []>} : vector<8x384xbf16>, vector<384x256xbf16>, vector<8x256xf32> -> vector<8x256xf32>
    %c0_15 = arith.constant 0 : index
    %c0_16 = arith.constant 0 : index
    %19 = vector.load %arg7[%c0_15, %c0_16] : memref<1x256xf32, #tpu.memory_space<vmem>>, vector<1x256xf32>
    %20 = vector.broadcast %19 : vector<1x256xf32> to vector<8x256xf32>
    %21 = arith.addf %18, %20 : vector<8x256xf32>
    %cst_17 = arith.constant 0.000000e+00 : f32
    %22 = vector.broadcast %cst_17 : f32 to vector<8x256xf32>
    %23 = arith.maximumf %21, %22 : vector<8x256xf32>
    %24 = arith.truncf %23 : vector<8x256xf32> to vector<8x256xbf16>
    %c0_18 = arith.constant 0 : index
    %c0_19 = arith.constant 0 : index
    %25 = vector.load %arg8[%c0_18, %c0_19] : memref<256x128xbf16, #tpu.memory_space<vmem>>, vector<256x128xbf16>
    %cst_20 = arith.constant dense<0.000000e+00> : vector<8x128xf32>
    %26 = tpu.matmul %24, %25, %cst_20 {dimension_numbers = #tpu.dot_dimension_numbers<[1], [0], [0], [1], [0, 0, 1, 1], [], []>} : vector<8x256xbf16>, vector<256x128xbf16>, vector<8x128xf32> -> vector<8x128xf32>
    %c0_21 = arith.constant 0 : index
    %c0_22 = arith.constant 0 : index
    %27 = vector.load %arg9[%c0_21, %c0_22] : memref<1x128xf32, #tpu.memory_space<vmem>>, vector<1x128xf32>
    %28 = vector.broadcast %27 : vector<1x128xf32> to vector<8x128xf32>
    %29 = arith.addf %26, %28 : vector<8x128xf32>
    %cst_23 = arith.constant 0.000000e+00 : f32
    %30 = vector.broadcast %cst_23 : f32 to vector<8x128xf32>
    %31 = arith.maximumf %29, %30 : vector<8x128xf32>
    %32 = arith.truncf %31 : vector<8x128xf32> to vector<8x128xbf16>
    %c0_24 = arith.constant 0 : index
    %c0_25 = arith.constant 0 : index
    %33 = vector.load %arg10[%c0_24, %c0_25] : memref<128x128xbf16, #tpu.memory_space<vmem>>, vector<128x128xbf16>
    %cst_26 = arith.constant dense<0.000000e+00> : vector<8x128xf32>
    %34 = tpu.matmul %32, %33, %cst_26 {dimension_numbers = #tpu.dot_dimension_numbers<[1], [0], [0], [1], [0, 0, 1, 1], [], []>} : vector<8x128xbf16>, vector<128x128xbf16>, vector<8x128xf32> -> vector<8x128xf32>
    %c0_27 = arith.constant 0 : index
    %c0_28 = arith.constant 0 : index
    %35 = vector.load %arg11[%c0_27, %c0_28] : memref<1x128xf32, #tpu.memory_space<vmem>>, vector<1x128xf32>
    %36 = vector.broadcast %35 : vector<1x128xf32> to vector<8x128xf32>
    %37 = arith.addf %34, %36 : vector<8x128xf32>
    %c0_29 = arith.constant 0 : index
    %c0_30 = arith.constant 0 : index
    %38 = vector.load %arg12[%c0_29, %c0_30] : memref<8x128xf32, #tpu.memory_space<vmem>>, vector<8x128xf32>
    tpu.vector_store %arg12[%c0_29, %c0_30], %37 {strides = array<i32>} : memref<8x128xf32, #tpu.memory_space<vmem>>, vector<8x128xf32>,
    return
  }
  func.func @transform_0(%arg0: i32) -> (i32, i32) {
    %c0_i32 = arith.constant 0 : i32
    %c0_i32_0 = arith.constant 0 : i32
    return %arg0, %c0_i32 : i32, i32
  }
  func.func @transform_1(%arg0: i32) -> (i32, i32) {
    %c0_i32 = arith.constant 0 : i32
    %c0_i32_0 = arith.constant 0 : i32
    %c0_i32_1 = arith.constant 0 : i32
    return %c0_i32, %c0_i32_0 : i32, i32
  }
  func.func @transform_2(%arg0: i32) -> (i32, i32) {
    %c0_i32 = arith.constant 0 : i32
    %c0_i32_0 = arith.constant 0 : i32
    %c0_i32_1 = arith.constant 0 : i32
    return %c0_i32, %c0_i32_0 : i32, i32
  }
  func.func @transform_3(%arg0: i32) -> (i32, i32) {
    %c0_i32 = arith.constant 0 : i32
    %c0_i32_0 = arith.constant 0 : i32
    %c0_i32_1 = arith.constant 0 : i32
    return %c0_i32, %c0_i32_0 : i32, i32
  }
  func.func @transform_4(%arg0: i32) -> (i32, i32) {
    %c0_i32 = arith.constant 0 : i32
    %c0_i32_0 = arith.constant 0 : i32
    %c0_i32_1 = arith.constant 0 : i32
    return %c0_i32, %c0_i32_0 : i32, i32
  }
  func.func @transform_5(%arg0: i32) -> (i32, i32) {
    %c0_i32 = arith.constant 0 : i32
    %c0_i32_0 = arith.constant 0 : i32
    %c0_i32_1 = arith.constant 0 : i32
    return %c0_i32, %c0_i32_0 : i32, i32
  }
  func.func @transform_6(%arg0: i32) -> (i32, i32) {
    %c0_i32 = arith.constant 0 : i32
    %c0_i32_0 = arith.constant 0 : i32
    %c0_i32_1 = arith.constant 0 : i32
    return %c0_i32, %c0_i32_0 : i32, i32
  }
  func.func @transform_7(%arg0: i32) -> (i32, i32) {
    %c0_i32 = arith.constant 0 : i32
    %c0_i32_0 = arith.constant 0 : i32
    %c0_i32_1 = arith.constant 0 : i32
    return %c0_i32, %c0_i32_0 : i32, i32
  }
  func.func @transform_8(%arg0: i32) -> (i32, i32) {
    %c0_i32 = arith.constant 0 : i32
    %c0_i32_0 = arith.constant 0 : i32
    %c0_i32_1 = arith.constant 0 : i32
    return %c0_i32, %c0_i32_0 : i32, i32
  }
  func.func @transform_9(%arg0: i32) -> (i32, i32) {
    %c0_i32 = arith.constant 0 : i32
    %c0_i32_0 = arith.constant 0 : i32
    %c0_i32_1 = arith.constant 0 : i32
    return %c0_i32, %c0_i32_0 : i32, i32
  }
  func.func @transform_10(%arg0: i32) -> (i32, i32) {
    %c0_i32 = arith.constant 0 : i32
    %c0_i32_0 = arith.constant 0 : i32
    %c0_i32_1 = arith.constant 0 : i32
    return %c0_i32, %c0_i32_0 : i32, i32
  }
  func.func @transform_11(%arg0: i32) -> (i32, i32) {
    %c0_i32 = arith.constant 0 : i32
    %c0_i32_0 = arith.constant 0 : i32
    return %arg0, %c0_i32 : i32, i32
  }
}

</mosaic_0001>

<llo_original>
// kernel: tpu_custom_call.1
$region0: #{tpu_custom_call.1}
  #allocation0 [shape = 'u32[]', space=smem, size = 0x4, offset = 0x4, fixed_abs, tag = 'smem constant byte address 0x4 - core index']
  #allocation1 [shape = 'u32[144,128]{1,0:T(1,128)}', space=vmem, size = 0x12000, scoped, tag = 'internal scratch']
  %s0 = inlined_call_operand.hbm [shape: bf16[8,784], index: 0, kind: input, shape index: {}]
  %s1 = inlined_call_operand.hbm [shape: bf16[784,640], index: 1, kind: input, shape index: {}]
  %s2 = inlined_call_operand.vmem [shape: f32[1,640], index: 2, kind: input, shape index: {}]
  %s3 = inlined_call_operand.hbm [shape: bf16[640,384], index: 3, kind: input, shape index: {}]
  %s4 = inlined_call_operand.vmem [shape: f32[1,384], index: 4, kind: input, shape index: {}]
  %s5 = inlined_call_operand.hbm [shape: bf16[384,256], index: 5, kind: input, shape index: {}]
  %s6 = inlined_call_operand.vmem [shape: f32[1,256], index: 6, kind: input, shape index: {}]
  %s7 = inlined_call_operand.hbm [shape: bf16[256,128], index: 7, kind: input, shape index: {}]
  %s8 = inlined_call_operand.vmem [shape: f32[1,128], index: 8, kind: input, shape index: {}]
  %s9 = inlined_call_operand.hbm [shape: bf16[128,128], index: 9, kind: input, shape index: {}]
  %s10 = inlined_call_operand.vmem [shape: f32[1,128], index: 10, kind: input, shape index: {}]
  %s11 = inlined_call_operand.hbm [shape: f32[8,128], index: 11, kind: output, shape index: {}]
  %s12 = sld [smem:[#allocation0]]
  $region78: #{tpu_custom_call.1} parent=0
    _
  %s14 = ssub.s32 1, %s12
  %s15 = scalar_select 0, %s14, %s12
  $region1: #{tpu_custom_call.1} parent=0
    #allocation2 [shape = 'u8[14336]{0}', space=vmem, size = 0x3800, scoped, tag = 'input window, operand 0, single buffered']
    #allocation3 [shape = 's32[1]{0}', space=sflag, size = 0x4, scoped, tag = 'scoped memory for tpu_custom_call.1']
    #allocation4 [shape = 's32[1]{0}', space=sflag, size = 0x4, scoped, tag = 'scoped memory for tpu_custom_call.1']
    #allocation5 [shape = 'u8[1003520]{0}', space=vmem, size = 0xf5000, scoped, tag = 'input window, operand 1, single buffered']
    #allocation6 [shape = 's32[1]{0}', space=sflag, size = 0x4, scoped, tag = 'scoped memory for tpu_custom_call.1']
    #allocation7 [shape = 'u8[491520]{0}', space=vmem, size = 0x78000, scoped, tag = 'input window, operand 3, single buffered']
    #allocation8 [shape = 'u8[196608]{0}', space=vmem, size = 0x30000, scoped, tag = 'input window, operand 5, single buffered']
    #allocation9 [shape = 's32[1]{0}', space=sflag, size = 0x4, scoped, tag = 'scoped memory for tpu_custom_call.1']
    #allocation10 [shape = 'u8[65536]{0}', space=vmem, size = 0x10000, scoped, tag = 'input window, operand 7, single buffered']
    #allocation11 [shape = 'u8[32768]{0}', space=vmem, size = 0x8000, scoped, tag = 'input window, operand 9, single buffered']
    #allocation12 [shape = 's32[1]{0}', space=sflag, size = 0x4, scoped, tag = 'scoped memory for tpu_custom_call.1']
    #allocation13 [shape = 'u8[4096]{0}', space=vmem, size = 0x1000, scoped, tag = 'output window, operand 0, single buffered']
    %16 = vsyncpa [#allocation3], 0
    %17 = vsyncpa [#allocation6], 0
    %18 = vsyncpa [#allocation9], 0
    %19 = vsyncpa [#allocation12], 0
    %20 = vsyncpa [#allocation4], 0
    // Predicated region
    $region2: #{tpu_custom_call.1} parent=1 // pred_check
      _
    $region3: #{tpu_custom_call.1} parent=1 // pred_check_branch
      %22 = sbr.rel (0) target = $region5
    $region4: #{tpu_custom_call.1} parent=1 // pred_region
      %s24 = ssub.s32 448, 448
      %25 = vsyncadd [#allocation3], %s24
      %s27 = sshll.u32 [#allocation2], 4
      %s28 = int_to_ptr.vmem [resolvable:$true] %s27
      %30 = dma.hbm_to_vmem [thread:$0]  %s0, 448, %s28, [#allocation3]
    $region5: #{tpu_custom_call.1} parent=1 // pred_fallthru
      _
    // Predicated region
    $region6: #{tpu_custom_call.1} parent=1 // pred_check
      _
    $region7: #{tpu_custom_call.1} parent=1 // pred_check_branch
      %32 = sbr.rel (0) target = $region9
    $region8: #{tpu_custom_call.1} parent=1 // pred_region
      %s34 = ssub.s32 31360, 31360
      %35 = vsyncadd [#allocation6], %s34
      %s36 = sshll.u32 [#allocation5], 4
      %s37 = int_to_ptr.vmem [resolvable:$true] %s36
      %42 = dma.hbm_to_vmem [thread:$0]  %s1, 31360, %s37, [#allocation6], 320, 320, 20
    $region9: #{tpu_custom_call.1} parent=1 // pred_fallthru
      _
    // Predicated region
    $region10: #{tpu_custom_call.1} parent=1 // pred_check
      _
    $region11: #{tpu_custom_call.1} parent=1 // pred_check_branch
      %44 = sbr.rel (0) target = $region13
    $region12: #{tpu_custom_call.1} parent=1 // pred_region
      _
    $region13: #{tpu_custom_call.1} parent=1 // pred_fallthru
      _
    // Predicated region
    $region14: #{tpu_custom_call.1} parent=1 // pred_check
      _
    $region15: #{tpu_custom_call.1} parent=1 // pred_check_branch
      %46 = sbr.rel (0) target = $region17
    $region16: #{tpu_custom_call.1} parent=1 // pred_region
      %s48 = ssub.s32 15360, 15360
      %49 = vsyncadd [#allocation6], %s48
      %s50 = sshll.u32 [#allocation7], 4
      %s51 = int_to_ptr.vmem [resolvable:$true] %s50
      %56 = dma.hbm_to_vmem [thread:$0]  %s3, 15360, %s51, [#allocation6], 192, 192, 12
    $region17: #{tpu_custom_call.1} parent=1 // pred_fallthru
      _
    // Predicated region
    $region18: #{tpu_custom_call.1} parent=1 // pred_check
      _
    $region19: #{tpu_custom_call.1} parent=1 // pred_check_branch
      %58 = sbr.rel (0) target = $region21
    $region20: #{tpu_custom_call.1} parent=1 // pred_region
      _
    $region21: #{tpu_custom_call.1} parent=1 // pred_fallthru
      _
    // Predicated region
    $region22: #{tpu_custom_call.1} parent=1 // pred_check
      _
    $region23: #{tpu_custom_call.1} parent=1 // pred_check_branch
      %60 = sbr.rel (0) target = $region25
    $region24: #{tpu_custom_call.1} parent=1 // pred_region
      %s62 = ssub.s32 6144, 6144
      %63 = vsyncadd [#allocation9], %s62
      %s64 = sshll.u32 [#allocation8], 4
      %s65 = int_to_ptr.vmem [resolvable:$true] %s64
      %70 = dma.hbm_to_vmem [thread:$0]  %s5, 6144, %s65, [#allocation9], 128, 128, 8
    $region25: #{tpu_custom_call.1} parent=1 // pred_fallthru
      _
    // Predicated region
    $region26: #{tpu_custom_call.1} parent=1 // pred_check
      _
    $region27: #{tpu_custom_call.1} parent=1 // pred_check_branch
      %72 = sbr.rel (0) target = $region29
    $region28: #{tpu_custom_call.1} parent=1 // pred_region
      _
    $region29: #{tpu_custom_call.1} parent=1 // pred_fallthru
      _
    // Predicated region
    $region30: #{tpu_custom_call.1} parent=1 // pred_check
      _
    $region31: #{tpu_custom_call.1} parent=1 // pred_check_branch
      %74 = sbr.rel (0) target = $region33
    $region32: #{tpu_custom_call.1} parent=1 // pred_region
      %s76 = ssub.s32 2048, 2048
      %77 = vsyncadd [#allocation9], %s76
      %s78 = sshll.u32 [#allocation10], 4
      %s79 = int_to_ptr.vmem [resolvable:$true] %s78
      %84 = dma.hbm_to_vmem [thread:$0]  %s7, 2048, %s79, [#allocation9], 64, 64, 4
    $region33: #{tpu_custom_call.1} parent=1 // pred_fallthru
      _
    // Predicated region
    $region34: #{tpu_custom_call.1} parent=1 // pred_check
      _
    $region35: #{tpu_custom_call.1} parent=1 // pred_check_branch
      %86 = sbr.rel (0) target = $region37
    $region36: #{tpu_custom_call.1} parent=1 // pred_region
      _
    $region37: #{tpu_custom_call.1} parent=1 // pred_fallthru
      _
    // Predicated region
    $region38: #{tpu_custom_call.1} parent=1 // pred_check
      _
    $region39: #{tpu_custom_call.1} parent=1 // pred_check_branch
      %88 = sbr.rel (0) target = $region41
    $region40: #{tpu_custom_call.1} parent=1 // pred_region
      %s90 = ssub.s32 1024, 1024
      %91 = vsyncadd [#allocation12], %s90
      %s92 = sshll.u32 [#allocation11], 4
      %s93 = int_to_ptr.vmem [resolvable:$true] %s92
      %98 = dma.hbm_to_vmem [thread:$0]  %s9, 1024, %s93, [#allocation12], 64, 64, 4
    $region41: #{tpu_custom_call.1} parent=1 // pred_fallthru
      _
    // Predicated region
    $region42: #{tpu_custom_call.1} parent=1 // pred_check
      _
    $region43: #{tpu_custom_call.1} parent=1 // pred_check_branch
      %100 = sbr.rel (0) target = $region45
    $region44: #{tpu_custom_call.1} parent=1 // pred_region
      _
    $region45: #{tpu_custom_call.1} parent=1 // pred_fallthru
      _
    // Predicated region
    $region46: #{tpu_custom_call.1} parent=1 // pred_check
      _
    $region47: #{tpu_custom_call.1} parent=1 // pred_check_branch
      %102 = sbr.rel (0) target = $region49
    $region48: #{tpu_custom_call.1} parent=1 // pred_region
      %103 = dma.done [#allocation3], 448
    $region49: #{tpu_custom_call.1} parent=1 // pred_fallthru
      _
    // Predicated region
    $region50: #{tpu_custom_call.1} parent=1 // pred_check
      _
    $region51: #{tpu_custom_call.1} parent=1 // pred_check_branch
      %105 = sbr.rel (0) target = $region53
    $region52: #{tpu_custom_call.1} parent=1 // pred_region
      %106 = dma.done [#allocation6], 31360
    $region53: #{tpu_custom_call.1} parent=1 // pred_fallthru
      _
    // Predicated region
    $region54: #{tpu_custom_call.1} parent=1 // pred_check
      _
    $region55: #{tpu_custom_call.1} parent=1 // pred_check_branch
      %108 = sbr.rel (0) target = $region57
    $region56: #{tpu_custom_call.1} parent=1 // pred_region
      %109 = dma.done [#allocation6], 15360
    $region57: #{tpu_custom_call.1} parent=1 // pred_fallthru
      _
    // Predicated region
    $region58: #{tpu_custom_call.1} parent=1 // pred_check
      _
    $region59: #{tpu_custom_call.1} parent=1 // pred_check_branch
      %111 = sbr.rel (0) target = $region61
    $region60: #{tpu_custom_call.1} parent=1 // pred_region
      %112 = dma.done [#allocation9], 6144
    $region61: #{tpu_custom_call.1} parent=1 // pred_fallthru
      _
    // Predicated region
    $region62: #{tpu_custom_call.1} parent=1 // pred_check
      _
    $region63: #{tpu_custom_call.1} parent=1 // pred_check_branch
      %114 = sbr.rel (0) target = $region65
    $region64: #{tpu_custom_call.1} parent=1 // pred_region
      %115 = dma.done [#allocation9], 2048
    $region65: #{tpu_custom_call.1} parent=1 // pred_fallthru
      _
    // Predicated region
    $region66: #{tpu_custom_call.1} parent=1 // pred_check
      _
    $region67: #{tpu_custom_call.1} parent=1 // pred_check_branch
      %117 = sbr.rel (0) target = $region69
    $region68: #{tpu_custom_call.1} parent=1 // pred_region
      %118 = dma.done [#allocation12], 1024
    $region69: #{tpu_custom_call.1} parent=1 // pred_fallthru
      _
    %v120 = vld [vmem:[#allocation2] sm:$0xff]
    %v121 = vld [vmem:[#allocation2 + $0x8] sm:$0xff]
    %v122 = vld [vmem:[#allocation2 + $0x10] sm:$0xff]
    %v123 = vld [vmem:[#allocation2 + $0x18] sm:$0xf]
    %v124 = vld [vmem:[#allocation5] sm:$0xff]
    %v125 = vld [vmem:[#allocation5 + $0x8] sm:$0xff]
    %v126 = vld [vmem:[#allocation5 + $0x10] sm:$0xf]
    %v127 = vld [vmem:[#allocation5 + $0x14] sm:$0xff]
    %v128 = vld [vmem:[#allocation5 + $0x1c] sm:$0xff]
    %v129 = vld [vmem:[#allocation5 + $0x24] sm:$0xf]
    %v130 = vld [vmem:[#allocation5 + $0x28] sm:$0xff]
    %v131 = vld [vmem:[#allocation5 + $0x30] sm:$0xff]
    %v132 = vld [vmem:[#allocation5 + $0x38] sm:$0xf]
    %v133 = vld [vmem:[#allocation5 + $0x3c] sm:$0xff]
    %v134 = vld [vmem:[#allocation5 + $0x44] sm:$0xff]
    %v135 = vld [vmem:[#allocation5 + $0x4c] sm:$0xf]
    %v136 = vld [vmem:[#allocation5 + $0x50] sm:$0xff]
    %v137 = vld [vmem:[#allocation5 + $0x58] sm:$0xff]
    %v138 = vld [vmem:[#allocation5 + $0x60] sm:$0xf]
    %v139 = vld [vmem:[#allocation5 + $0x64] sm:$0xff]
    %v140 = vld [vmem:[#allocation5 + $0x6c] sm:$0xff]
    %v141 = vld [vmem:[#allocation5 + $0x74] sm:$0xf]
    %v142 = vld [vmem:[#allocation5 + $0x78] sm:$0xff]
    %v143 = vld [vmem:[#allocation5 + $0x80] sm:$0xff]
    %v144 = vld [vmem:[#allocation5 + $0x88] sm:$0xf]
    %v145 = vld [vmem:[#allocation5 + $0x8c] sm:$0xff]
    %v146 = vld [vmem:[#allocation5 + $0x94] sm:$0xff]
    %v147 = vld [vmem:[#allocation5 + $0x9c] sm:$0xf]
    %v148 = vld [vmem:[#allocation5 + $0xa0] sm:$0xff]
    %v149 = vld [vmem:[#allocation5 + $0xa8] sm:$0xff]
    %v150 = vld [vmem:[#allocation5 + $0xb0] sm:$0xf]
    %v151 = vld [vmem:[#allocation5 + $0xb4] sm:$0xff]
    %v152 = vld [vmem:[#allocation5 + $0xbc] sm:$0xff]
    %v153 = vld [vmem:[#allocation5 + $0xc4] sm:$0xf]
    %v154 = vld [vmem:[#allocation5 + $0xc8] sm:$0xff]
    %v155 = vld [vmem:[#allocation5 + $0xd0] sm:$0xff]
    %v156 = vld [vmem:[#allocation5 + $0xd8] sm:$0xf]
    %v157 = vld [vmem:[#allocation5 + $0xdc] sm:$0xff]
    %v158 = vld [vmem:[#allocation5 + $0xe4] sm:$0xff]
    %v159 = vld [vmem:[#allocation5 + $0xec] sm:$0xf]
    %v160 = vld [vmem:[#allocation5 + $0xf0] sm:$0xff]
    %v161 = vld [vmem:[#allocation5 + $0xf8] sm:$0xff]
    %v162 = vld [vmem:[#allocation5 + $0x100] sm:$0xf]
    %v163 = vld [vmem:[#allocation5 + $0x104] sm:$0xff]
    %v164 = vld [vmem:[#allocation5 + $0x10c] sm:$0xff]
    %v165 = vld [vmem:[#allocation5 + $0x114] sm:$0xf]
    %v166 = vld [vmem:[#allocation5 + $0x118] sm:$0xff]
    %v167 = vld [vmem:[#allocation5 + $0x120] sm:$0xff]
    %v168 = vld [vmem:[#allocation5 + $0x128] sm:$0xf]
    %v169 = vld [vmem:[#allocation5 + $0x12c] sm:$0xff]
    %v170 = vld [vmem:[#allocation5 + $0x134] sm:$0xff]
    %v171 = vld [vmem:[#allocation5 + $0x13c] sm:$0xf]
    %v172 = vld [vmem:[#allocation5 + $0x140] sm:$0xff]
    %v173 = vld [vmem:[#allocation5 + $0x148] sm:$0xff]
    %v174 = vld [vmem:[#allocation5 + $0x150] sm:$0xf]
    %v175 = vld [vmem:[#allocation5 + $0x154] sm:$0xff]
    %v176 = vld [vmem:[#allocation5 + $0x15c] sm:$0xff]
    %v177 = vld [vmem:[#allocation5 + $0x164] sm:$0xf]
    %v178 = vld [vmem:[#allocation5 + $0x168] sm:$0xff]
    %v179 = vld [vmem:[#allocation5 + $0x170] sm:$0xff]
    %v180 = vld [vmem:[#allocation5 + $0x178] sm:$0xf]
    %v181 = vld [vmem:[#allocation5 + $0x17c] sm:$0xff]
    %v182 = vld [vmem:[#allocation5 + $0x184] sm:$0xff]
    %v183 = vld [vmem:[#allocation5 + $0x18c] sm:$0xf]
    %v184 = vld [vmem:[#allocation5 + $0x190] sm:$0xff]
    %v185 = vld [vmem:[#allocation5 + $0x198] sm:$0xff]
    %v186 = vld [vmem:[#allocation5 + $0x1a0] sm:$0xf]
    %v187 = vld [vmem:[#allocation5 + $0x1a4] sm:$0xff]
    %v188 = vld [vmem:[#allocation5 + $0x1ac] sm:$0xff]
    %v189 = vld [vmem:[#allocation5 + $0x1b4] sm:$0xf]
    %v190 = vld [vmem:[#allocation5 + $0x1b8] sm:$0xff]
    %v191 = vld [vmem:[#allocation5 + $0x1c0] sm:$0xff]
    %v192 = vld [vmem:[#allocation5 + $0x1c8] sm:$0xf]
    %v193 = vld [vmem:[#allocation5 + $0x1cc] sm:$0xff]
    %v194 = vld [vmem:[#allocation5 + $0x1d4] sm:$0xff]
    %v195 = vld [vmem:[#allocation5 + $0x1dc] sm:$0xf]
    %v196 = vld [vmem:[#allocation5 + $0x1e0] sm:$0xff]
    %v197 = vld [vmem:[#allocation5 + $0x1e8] sm:$0xff]
    %v198 = vld [vmem:[#allocation5 + $0x1f0] sm:$0xf]
    %v199 = vld [vmem:[#allocation5 + $0x1f4] sm:$0xff]
    %v200 = vld [vmem:[#allocation5 + $0x1fc] sm:$0xff]
    %v201 = vld [vmem:[#allocation5 + $0x204] sm:$0xf]
    %v202 = vld [vmem:[#allocation5 + $0x208] sm:$0xff]
    %v203 = vld [vmem:[#allocation5 + $0x210] sm:$0xff]
    %v204 = vld [vmem:[#allocation5 + $0x218] sm:$0xf]
    %v205 = vld [vmem:[#allocation5 + $0x21c] sm:$0xff]
    %v206 = vld [vmem:[#allocation5 + $0x224] sm:$0xff]
    %v207 = vld [vmem:[#allocation5 + $0x22c] sm:$0xf]
    %v208 = vld [vmem:[#allocation5 + $0x230] sm:$0xff]
    %v209 = vld [vmem:[#allocation5 + $0x238] sm:$0xff]
    %v210 = vld [vmem:[#allocation5 + $0x240] sm:$0xf]
    %v211 = vld [vmem:[#allocation5 + $0x244] sm:$0xff]
    %v212 = vld [vmem:[#allocation5 + $0x24c] sm:$0xff]
    %v213 = vld [vmem:[#allocation5 + $0x254] sm:$0xf]
    %v214 = vld [vmem:[#allocation5 + $0x258] sm:$0xff]
    %v215 = vld [vmem:[#allocation5 + $0x260] sm:$0xff]
    %v216 = vld [vmem:[#allocation5 + $0x268] sm:$0xf]
    %v217 = vld [vmem:[#allocation5 + $0x26c] sm:$0xff]
    %v218 = vld [vmem:[#allocation5 + $0x274] sm:$0xff]
    %v219 = vld [vmem:[#allocation5 + $0x27c] sm:$0xf]
    %v220 = vld [vmem:[#allocation5 + $0x280] sm:$0xff]
    %v221 = vld [vmem:[#allocation5 + $0x288] sm:$0xff]
    %v222 = vld [vmem:[#allocation5 + $0x290] sm:$0xf]
    %v223 = vld [vmem:[#allocation5 + $0x294] sm:$0xff]
    %v224 = vld [vmem:[#allocation5 + $0x29c] sm:$0xff]
    %v225 = vld [vmem:[#allocation5 + $0x2a4] sm:$0xf]
    %v226 = vld [vmem:[#allocation5 + $0x2a8] sm:$0xff]
    %v227 = vld [vmem:[#allocation5 + $0x2b0] sm:$0xff]
    %v228 = vld [vmem:[#allocation5 + $0x2b8] sm:$0xf]
    %v229 = vld [vmem:[#allocation5 + $0x2bc] sm:$0xff]
    %v230 = vld [vmem:[#allocation5 + $0x2c4] sm:$0xff]
    %v231 = vld [vmem:[#allocation5 + $0x2cc] sm:$0xf]
    %v232 = vld [vmem:[#allocation5 + $0x2d0] sm:$0xff]
    %v233 = vld [vmem:[#allocation5 + $0x2d8] sm:$0xff]
    %v234 = vld [vmem:[#allocation5 + $0x2e0] sm:$0xf]
    %v235 = vld [vmem:[#allocation5 + $0x2e4] sm:$0xff]
    %v236 = vld [vmem:[#allocation5 + $0x2ec] sm:$0xff]
    %v237 = vld [vmem:[#allocation5 + $0x2f4] sm:$0xf]
    %v238 = vld [vmem:[#allocation5 + $0x2f8] sm:$0xff]
    %v239 = vld [vmem:[#allocation5 + $0x300] sm:$0xff]
    %v240 = vld [vmem:[#allocation5 + $0x308] sm:$0xf]
    %v241 = vld [vmem:[#allocation5 + $0x30c] sm:$0xff]
    %v242 = vld [vmem:[#allocation5 + $0x314] sm:$0xff]
    %v243 = vld [vmem:[#allocation5 + $0x31c] sm:$0xf]
    %v244 = vld [vmem:[#allocation5 + $0x320] sm:$0xff]
    %v245 = vld [vmem:[#allocation5 + $0x328] sm:$0xff]
    %v246 = vld [vmem:[#allocation5 + $0x330] sm:$0xf]
    %v247 = vld [vmem:[#allocation5 + $0x334] sm:$0xff]
    %v248 = vld [vmem:[#allocation5 + $0x33c] sm:$0xff]
    %v249 = vld [vmem:[#allocation5 + $0x344] sm:$0xf]
    %v250 = vld [vmem:[#allocation5 + $0x348] sm:$0xff]
    %v251 = vld [vmem:[#allocation5 + $0x350] sm:$0xff]
    %v252 = vld [vmem:[#allocation5 + $0x358] sm:$0xf]
    %v253 = vld [vmem:[#allocation5 + $0x35c] sm:$0xff]
    %v254 = vld [vmem:[#allocation5 + $0x364] sm:$0xff]
    %v255 = vld [vmem:[#allocation5 + $0x36c] sm:$0xf]
    %v256 = vld [vmem:[#allocation5 + $0x370] sm:$0xff]
    %v257 = vld [vmem:[#allocation5 + $0x378] sm:$0xff]
    %v258 = vld [vmem:[#allocation5 + $0x380] sm:$0xf]
    %v259 = vld [vmem:[#allocation5 + $0x384] sm:$0xff]
    %v260 = vld [vmem:[#allocation5 + $0x38c] sm:$0xff]
    %v261 = vld [vmem:[#allocation5 + $0x394] sm:$0xf]
    %v262 = vld [vmem:[#allocation5 + $0x398] sm:$0xff]
    %v263 = vld [vmem:[#allocation5 + $0x3a0] sm:$0xff]
    %v264 = vld [vmem:[#allocation5 + $0x3a8] sm:$0xf]
    %v265 = vld [vmem:[#allocation5 + $0x3ac] sm:$0xff]
    %v266 = vld [vmem:[#allocation5 + $0x3b4] sm:$0xff]
    %v267 = vld [vmem:[#allocation5 + $0x3bc] sm:$0xf]
    %v268 = vld [vmem:[#allocation5 + $0x3c0] sm:$0xff]
    %v269 = vld [vmem:[#allocation5 + $0x3c8] sm:$0xff]
    %v270 = vld [vmem:[#allocation5 + $0x3d0] sm:$0xf]
    %v271 = vld [vmem:[#allocation5 + $0x3d4] sm:$0xff]
    %v272 = vld [vmem:[#allocation5 + $0x3dc] sm:$0xff]
    %v273 = vld [vmem:[#allocation5 + $0x3e4] sm:$0xf]
    %v274 = vld [vmem:[#allocation5 + $0x3e8] sm:$0xff]
    %v275 = vld [vmem:[#allocation5 + $0x3f0] sm:$0xff]
    %v276 = vld [vmem:[#allocation5 + $0x3f8] sm:$0xf]
    %v277 = vld [vmem:[#allocation5 + $0x3fc] sm:$0xff]
    %v278 = vld [vmem:[#allocation5 + $0x404] sm:$0xff]
    %v279 = vld [vmem:[#allocation5 + $0x40c] sm:$0xf]
    %v280 = vld [vmem:[#allocation5 + $0x410] sm:$0xff]
    %v281 = vld [vmem:[#allocation5 + $0x418] sm:$0xff]
    %v282 = vld [vmem:[#allocation5 + $0x420] sm:$0xf]
    %v283 = vld [vmem:[#allocation5 + $0x424] sm:$0xff]
    %v284 = vld [vmem:[#allocation5 + $0x42c] sm:$0xff]
    %v285 = vld [vmem:[#allocation5 + $0x434] sm:$0xf]
    %v286 = vld [vmem:[#allocation5 + $0x438] sm:$0xff]
    %v287 = vld [vmem:[#allocation5 + $0x440] sm:$0xff]
    %v288 = vld [vmem:[#allocation5 + $0x448] sm:$0xf]
    %v289 = vld [vmem:[#allocation5 + $0x44c] sm:$0xff]
    %v290 = vld [vmem:[#allocation5 + $0x454] sm:$0xff]
    %v291 = vld [vmem:[#allocation5 + $0x45c] sm:$0xf]
    %v292 = vld [vmem:[#allocation5 + $0x460] sm:$0xff]
    %v293 = vld [vmem:[#allocation5 + $0x468] sm:$0xff]
    %v294 = vld [vmem:[#allocation5 + $0x470] sm:$0xf]
    %v295 = vld [vmem:[#allocation5 + $0x474] sm:$0xff]
    %v296 = vld [vmem:[#allocation5 + $0x47c] sm:$0xff]
    %v297 = vld [vmem:[#allocation5 + $0x484] sm:$0xf]
    %v298 = vld [vmem:[#allocation5 + $0x488] sm:$0xff]
    %v299 = vld [vmem:[#allocation5 + $0x490] sm:$0xff]
    %v300 = vld [vmem:[#allocation5 + $0x498] sm:$0xf]
    %v301 = vld [vmem:[#allocation5 + $0x49c] sm:$0xff]
    %v302 = vld [vmem:[#allocation5 + $0x4a4] sm:$0xff]
    %v303 = vld [vmem:[#allocation5 + $0x4ac] sm:$0xf]
    %v304 = vld [vmem:[#allocation5 + $0x4b0] sm:$0xff]
    %v305 = vld [vmem:[#allocation5 + $0x4b8] sm:$0xff]
    %v306 = vld [vmem:[#allocation5 + $0x4c0] sm:$0xf]
    %v307 = vld [vmem:[#allocation5 + $0x4c4] sm:$0xff]
    %v308 = vld [vmem:[#allocation5 + $0x4cc] sm:$0xff]
    %v309 = vld [vmem:[#allocation5 + $0x4d4] sm:$0xf]
    %v310 = vld [vmem:[#allocation5 + $0x4d8] sm:$0xff]
    %v311 = vld [vmem:[#allocation5 + $0x4e0] sm:$0xff]
    %v312 = vld [vmem:[#allocation5 + $0x4e8] sm:$0xf]
    %v313 = vld [vmem:[#allocation5 + $0x4ec] sm:$0xff]
    %v314 = vld [vmem:[#allocation5 + $0x4f4] sm:$0xff]
    %v315 = vld [vmem:[#allocation5 + $0x4fc] sm:$0xf]
    %v316 = vld [vmem:[#allocation5 + $0x500] sm:$0xff]
    %v317 = vld [vmem:[#allocation5 + $0x508] sm:$0xff]
    %v318 = vld [vmem:[#allocation5 + $0x510] sm:$0xf]
    %v319 = vld [vmem:[#allocation5 + $0x514] sm:$0xff]
    %v320 = vld [vmem:[#allocation5 + $0x51c] sm:$0xff]
    %v321 = vld [vmem:[#allocation5 + $0x524] sm:$0xf]
    %v322 = vld [vmem:[#allocation5 + $0x528] sm:$0xff]
    %v323 = vld [vmem:[#allocation5 + $0x530] sm:$0xff]
    %v324 = vld [vmem:[#allocation5 + $0x538] sm:$0xf]
    %v325 = vld [vmem:[#allocation5 + $0x53c] sm:$0xff]
    %v326 = vld [vmem:[#allocation5 + $0x544] sm:$0xff]
    %v327 = vld [vmem:[#allocation5 + $0x54c] sm:$0xf]
    %v328 = vld [vmem:[#allocation5 + $0x550] sm:$0xff]
    %v329 = vld [vmem:[#allocation5 + $0x558] sm:$0xff]
    %v330 = vld [vmem:[#allocation5 + $0x560] sm:$0xf]
    %v331 = vld [vmem:[#allocation5 + $0x564] sm:$0xff]
    %v332 = vld [vmem:[#allocation5 + $0x56c] sm:$0xff]
    %v333 = vld [vmem:[#allocation5 + $0x574] sm:$0xf]
    %v334 = vld [vmem:[#allocation5 + $0x578] sm:$0xff]
    %v335 = vld [vmem:[#allocation5 + $0x580] sm:$0xff]
    %v336 = vld [vmem:[#allocation5 + $0x588] sm:$0xf]
    %v337 = vld [vmem:[#allocation5 + $0x58c] sm:$0xff]
    %v338 = vld [vmem:[#allocation5 + $0x594] sm:$0xff]
    %v339 = vld [vmem:[#allocation5 + $0x59c] sm:$0xf]
    %v340 = vld [vmem:[#allocation5 + $0x5a0] sm:$0xff]
    %v341 = vld [vmem:[#allocation5 + $0x5a8] sm:$0xff]
    %v342 = vld [vmem:[#allocation5 + $0x5b0] sm:$0xf]
    %v343 = vld [vmem:[#allocation5 + $0x5b4] sm:$0xff]
    %v344 = vld [vmem:[#allocation5 + $0x5bc] sm:$0xff]
    %v345 = vld [vmem:[#allocation5 + $0x5c4] sm:$0xf]
    %v346 = vld [vmem:[#allocation5 + $0x5c8] sm:$0xff]
    %v347 = vld [vmem:[#allocation5 + $0x5d0] sm:$0xff]
    %v348 = vld [vmem:[#allocation5 + $0x5d8] sm:$0xf]
    %v349 = vld [vmem:[#allocation5 + $0x5dc] sm:$0xff]
    %v350 = vld [vmem:[#allocation5 + $0x5e4] sm:$0xff]
    %v351 = vld [vmem:[#allocation5 + $0x5ec] sm:$0xf]
    %v352 = vld [vmem:[#allocation5 + $0x5f0] sm:$0xff]
    %v353 = vld [vmem:[#allocation5 + $0x5f8] sm:$0xff]
    %v354 = vld [vmem:[#allocation5 + $0x600] sm:$0xf]
    %v355 = vld [vmem:[#allocation5 + $0x604] sm:$0xff]
    %v356 = vld [vmem:[#allocation5 + $0x60c] sm:$0xff]
    %v357 = vld [vmem:[#allocation5 + $0x614] sm:$0xf]
    %v358 = vld [vmem:[#allocation5 + $0x618] sm:$0xff]
    %v359 = vld [vmem:[#allocation5 + $0x620] sm:$0xff]
    %v360 = vld [vmem:[#allocation5 + $0x628] sm:$0xf]
    %v361 = vld [vmem:[#allocation5 + $0x62c] sm:$0xff]
    %v362 = vld [vmem:[#allocation5 + $0x634] sm:$0xff]
    %v363 = vld [vmem:[#allocation5 + $0x63c] sm:$0xf]
    %v364 = vld [vmem:[#allocation5 + $0x640] sm:$0xff]
    %v365 = vld [vmem:[#allocation5 + $0x648] sm:$0xff]
    %v366 = vld [vmem:[#allocation5 + $0x650] sm:$0xf]
    %v367 = vld [vmem:[#allocation5 + $0x654] sm:$0xff]
    %v368 = vld [vmem:[#allocation5 + $0x65c] sm:$0xff]
    %v369 = vld [vmem:[#allocation5 + $0x664] sm:$0xf]
    %v370 = vld [vmem:[#allocation5 + $0x668] sm:$0xff]
    %v371 = vld [vmem:[#allocation5 + $0x670] sm:$0xff]
    %v372 = vld [vmem:[#allocation5 + $0x678] sm:$0xf]
    %v373 = vld [vmem:[#allocation5 + $0x67c] sm:$0xff]
    %v374 = vld [vmem:[#allocation5 + $0x684] sm:$0xff]
    %v375 = vld [vmem:[#allocation5 + $0x68c] sm:$0xf]
    %v376 = vld [vmem:[#allocation5 + $0x690] sm:$0xff]
    %v377 = vld [vmem:[#allocation5 + $0x698] sm:$0xff]
    %v378 = vld [vmem:[#allocation5 + $0x6a0] sm:$0xf]
    %v379 = vld [vmem:[#allocation5 + $0x6a4] sm:$0xff]
    %v380 = vld [vmem:[#allocation5 + $0x6ac] sm:$0xff]
    %v381 = vld [vmem:[#allocation5 + $0x6b4] sm:$0xf]
    %v382 = vld [vmem:[#allocation5 + $0x6b8] sm:$0xff]
    %v383 = vld [vmem:[#allocation5 + $0x6c0] sm:$0xff]
    %v384 = vld [vmem:[#allocation5 + $0x6c8] sm:$0xf]
    %v385 = vld [vmem:[#allocation5 + $0x6cc] sm:$0xff]
    %v386 = vld [vmem:[#allocation5 + $0x6d4] sm:$0xff]
    %v387 = vld [vmem:[#allocation5 + $0x6dc] sm:$0xf]
    %v388 = vld [vmem:[#allocation5 + $0x6e0] sm:$0xff]
    %v389 = vld [vmem:[#allocation5 + $0x6e8] sm:$0xff]
    %v390 = vld [vmem:[#allocation5 + $0x6f0] sm:$0xf]
    %v391 = vld [vmem:[#allocation5 + $0x6f4] sm:$0xff]
    %v392 = vld [vmem:[#allocation5 + $0x6fc] sm:$0xff]
    %v393 = vld [vmem:[#allocation5 + $0x704] sm:$0xf]
    %v394 = vld [vmem:[#allocation5 + $0x708] sm:$0xff]
    %v395 = vld [vmem:[#allocation5 + $0x710] sm:$0xff]
    %v396 = vld [vmem:[#allocation5 + $0x718] sm:$0xf]
    %v397 = vld [vmem:[#allocation5 + $0x71c] sm:$0xff]
    %v398 = vld [vmem:[#allocation5 + $0x724] sm:$0xff]
    %v399 = vld [vmem:[#allocation5 + $0x72c] sm:$0xf]
    %v400 = vld [vmem:[#allocation5 + $0x730] sm:$0xff]
    %v401 = vld [vmem:[#allocation5 + $0x738] sm:$0xff]
    %v402 = vld [vmem:[#allocation5 + $0x740] sm:$0xf]
    %v403 = vld [vmem:[#allocation5 + $0x744] sm:$0xff]
    %v404 = vld [vmem:[#allocation5 + $0x74c] sm:$0xff]
    %v405 = vld [vmem:[#allocation5 + $0x754] sm:$0xf]
    %v406 = vld [vmem:[#allocation5 + $0x758] sm:$0xff]
    %v407 = vld [vmem:[#allocation5 + $0x760] sm:$0xff]
    %v408 = vld [vmem:[#allocation5 + $0x768] sm:$0xf]
    %v409 = vld [vmem:[#allocation5 + $0x76c] sm:$0xff]
    %v410 = vld [vmem:[#allocation5 + $0x774] sm:$0xff]
    %v411 = vld [vmem:[#allocation5 + $0x77c] sm:$0xf]
    %v412 = vld [vmem:[#allocation5 + $0x780] sm:$0xff]
    %v413 = vld [vmem:[#allocation5 + $0x788] sm:$0xff]
    %v414 = vld [vmem:[#allocation5 + $0x790] sm:$0xf]
    %v415 = vld [vmem:[#allocation5 + $0x794] sm:$0xff]
    %v416 = vld [vmem:[#allocation5 + $0x79c] sm:$0xff]
    %v417 = vld [vmem:[#allocation5 + $0x7a4] sm:$0xf]
    %v418 = vld [vmem:[%s2] sm:$0x1f]
    %v420 = vlaneseq
    %v421 = vshrl.u32 %v420, 7
    %v422 = vsub.s32 0, %v421
    %v423 = vrot.slane %v418, %v422
    %v424 = vlaneseq
    %v425 = vshrl.u32 %v424, 7
    %v426 = vsub.s32 1, %v425
    %v427 = vrot.slane %v418, %v426
    %v428 = vlaneseq
    %v429 = vshrl.u32 %v428, 7
    %v430 = vsub.s32 2, %v429
    %v431 = vrot.slane %v418, %v430
    %v432 = vlaneseq
    %v433 = vshrl.u32 %v432, 7
    %v434 = vsub.s32 3, %v433
    %v435 = vrot.slane %v418, %v434
    %v436 = vlaneseq
    %v437 = vshrl.u32 %v436, 7
    %v438 = vsub.s32 4, %v437
    %v439 = vrot.slane %v418, %v438
    %v449 = vunpack.c.l.b16 %v120
    %v450 = vunpack.c.h.b16 %v120
    %v451 = vunpack.c.l.b16 %v121
    %v452 = vunpack.c.h.b16 %v121
    %v453 = vunpack.c.l.b16 %v122
    %v454 = vunpack.c.h.b16 %v122
    %v455 = vunpack.c.l.b16 %v123
    %v456 = vpack.c.b16 %v449, %v449
    %v457 = vpack.c.b16 %v450, %v450
    %v458 = vpack.c.b16 %v451, %v451
    %v459 = vpack.c.b16 %v452, %v452
    %v460 = vpack.c.b16 %v453, %v453
    %v461 = vpack.c.b16 %v454, %v454
    %v462 = vpack.c.b16 %v455, %v455
    %v763 = vunpack.c.l.b16 %v124
    %v764 = vunpack.c.h.b16 %v124
    %v765 = vunpack.c.l.b16 %v125
    %v766 = vunpack.c.h.b16 %v125
    %v767 = vunpack.c.l.b16 %v126
    %v768 = vunpack.c.l.b16 %v127
    %v769 = vunpack.c.h.b16 %v127
    %v770 = vunpack.c.l.b16 %v128
    %v771 = vunpack.c.h.b16 %v128
    %v772 = vunpack.c.l.b16 %v129
    %v773 = vunpack.c.l.b16 %v130
    %v774 = vunpack.c.h.b16 %v130
    %v775 = vunpack.c.l.b16 %v131
    %v776 = vunpack.c.h.b16 %v131
    %v777 = vunpack.c.l.b16 %v132
    %v778 = vunpack.c.l.b16 %v133
    %v779 = vunpack.c.h.b16 %v133
    %v780 = vunpack.c.l.b16 %v134
    %v781 = vunpack.c.h.b16 %v134
    %v782 = vunpack.c.l.b16 %v135
    %v783 = vunpack.c.l.b16 %v136
    %v784 = vunpack.c.h.b16 %v136
    %v785 = vunpack.c.l.b16 %v137
    %v786 = vunpack.c.h.b16 %v137
    %v787 = vunpack.c.l.b16 %v138
    %v788 = vunpack.c.l.b16 %v139
    %v789 = vunpack.c.h.b16 %v139
    %v790 = vunpack.c.l.b16 %v140
    %v791 = vunpack.c.h.b16 %v140
    %v792 = vunpack.c.l.b16 %v141
    %v793 = vunpack.c.l.b16 %v142
    %v794 = vunpack.c.h.b16 %v142
    %v795 = vunpack.c.l.b16 %v143
    %v796 = vunpack.c.h.b16 %v143
    %v797 = vunpack.c.l.b16 %v144
    %v798 = vunpack.c.l.b16 %v145
    %v799 = vunpack.c.h.b16 %v145
    %v800 = vunpack.c.l.b16 %v146
    %v801 = vunpack.c.h.b16 %v146
    %v802 = vunpack.c.l.b16 %v147
    %v803 = vunpack.c.l.b16 %v148
    %v804 = vunpack.c.h.b16 %v148
    %v805 = vunpack.c.l.b16 %v149
    %v806 = vunpack.c.h.b16 %v149
    %v807 = vunpack.c.l.b16 %v150
    %v808 = vunpack.c.l.b16 %v151
    %v809 = vunpack.c.h.b16 %v151
    %v810 = vunpack.c.l.b16 %v152
    %v811 = vunpack.c.h.b16 %v152
    %v812 = vunpack.c.l.b16 %v153
    %v813 = vunpack.c.l.b16 %v154
    %v814 = vunpack.c.h.b16 %v154
    %v815 = vunpack.c.l.b16 %v155
    %v816 = vunpack.c.h.b16 %v155
    %v817 = vunpack.c.l.b16 %v156
    %v818 = vunpack.c.l.b16 %v157
    %v819 = vunpack.c.h.b16 %v157
    %v820 = vunpack.c.l.b16 %v158
    %v821 = vunpack.c.h.b16 %v158
    %v822 = vunpack.c.l.b16 %v159
    %v823 = vunpack.c.l.b16 %v160
    %v824 = vunpack.c.h.b16 %v160
    %v825 = vunpack.c.l.b16 %v161
    %v826 = vunpack.c.h.b16 %v161
    %v827 = vunpack.c.l.b16 %v162
    %v828 = vunpack.c.l.b16 %v163
    %v829 = vunpack.c.h.b16 %v163
    %v830 = vunpack.c.l.b16 %v164
    %v831 = vunpack.c.h.b16 %v164
    %v832 = vunpack.c.l.b16 %v165
    %v833 = vunpack.c.l.b16 %v166
    %v834 = vunpack.c.h.b16 %v166
    %v835 = vunpack.c.l.b16 %v167
    %v836 = vunpack.c.h.b16 %v167
    %v837 = vunpack.c.l.b16 %v168
    %v838 = vunpack.c.l.b16 %v169
    %v839 = vunpack.c.h.b16 %v169
    %v840 = vunpack.c.l.b16 %v170
    %v841 = vunpack.c.h.b16 %v170
    %v842 = vunpack.c.l.b16 %v171
    %v843 = vunpack.c.l.b16 %v172
    %v844 = vunpack.c.h.b16 %v172
    %v845 = vunpack.c.l.b16 %v173
    %v846 = vunpack.c.h.b16 %v173
    %v847 = vunpack.c.l.b16 %v174
    %v848 = vunpack.c.l.b16 %v175
    %v849 = vunpack.c.h.b16 %v175
    %v850 = vunpack.c.l.b16 %v176
    %v851 = vunpack.c.h.b16 %v176
    %v852 = vunpack.c.l.b16 %v177
    %v853 = vunpack.c.l.b16 %v178
    %v854 = vunpack.c.h.b16 %v178
    %v855 = vunpack.c.l.b16 %v179
    %v856 = vunpack.c.h.b16 %v179
    %v857 = vunpack.c.l.b16 %v180
    %v858 = vunpack.c.l.b16 %v181
    %v859 = vunpack.c.h.b16 %v181
    %v860 = vunpack.c.l.b16 %v182
    %v861 = vunpack.c.h.b16 %v182
    %v862 = vunpack.c.l.b16 %v183
    %v863 = vunpack.c.l.b16 %v184
    %v864 = vunpack.c.h.b16 %v184
    %v865 = vunpack.c.l.b16 %v185
    %v866 = vunpack.c.h.b16 %v185
    %v867 = vunpack.c.l.b16 %v186
    %v868 = vunpack.c.l.b16 %v187
    %v869 = vunpack.c.h.b16 %v187
    %v870 = vunpack.c.l.b16 %v188
    %v871 = vunpack.c.h.b16 %v188
    %v872 = vunpack.c.l.b16 %v189
    %v873 = vunpack.c.l.b16 %v190
    %v874 = vunpack.c.h.b16 %v190
    %v875 = vunpack.c.l.b16 %v191
    %v876 = vunpack.c.h.b16 %v191
    %v877 = vunpack.c.l.b16 %v192
    %v878 = vunpack.c.l.b16 %v193
    %v879 = vunpack.c.h.b16 %v193
    %v880 = vunpack.c.l.b16 %v194
    %v881 = vunpack.c.h.b16 %v194
    %v882 = vunpack.c.l.b16 %v195
    %v883 = vunpack.c.l.b16 %v196
    %v884 = vunpack.c.h.b16 %v196
    %v885 = vunpack.c.l.b16 %v197
    %v886 = vunpack.c.h.b16 %v197
    %v887 = vunpack.c.l.b16 %v198
    %v888 = vunpack.c.l.b16 %v199
    %v889 = vunpack.c.h.b16 %v199
    %v890 = vunpack.c.l.b16 %v200
    %v891 = vunpack.c.h.b16 %v200
    %v892 = vunpack.c.l.b16 %v201
    %v893 = vunpack.c.l.b16 %v202
    %v894 = vunpack.c.h.b16 %v202
    %v895 = vunpack.c.l.b16 %v203
    %v896 = vunpack.c.h.b16 %v203
    %v897 = vunpack.c.l.b16 %v204
    %v898 = vunpack.c.l.b16 %v205
    %v899 = vunpack.c.h.b16 %v205
    %v900 = vunpack.c.l.b16 %v206
    %v901 = vunpack.c.h.b16 %v206
    %v902 = vunpack.c.l.b16 %v207
    %v903 = vunpack.c.l.b16 %v208
    %v904 = vunpack.c.h.b16 %v208
    %v905 = vunpack.c.l.b16 %v209
    %v906 = vunpack.c.h.b16 %v209
    %v907 = vunpack.c.l.b16 %v210
    %v908 = vunpack.c.l.b16 %v211
    %v909 = vunpack.c.h.b16 %v211
    %v910 = vunpack.c.l.b16 %v212
    %v911 = vunpack.c.h.b16 %v212
    %v912 = vunpack.c.l.b16 %v213
    %v913 = vunpack.c.l.b16 %v214
    %v914 = vunpack.c.h.b16 %v214
    %v915 = vunpack.c.l.b16 %v215
    %v916 = vunpack.c.h.b16 %v215
    %v917 = vunpack.c.l.b16 %v216
    %v918 = vunpack.c.l.b16 %v217
    %v919 = vunpack.c.h.b16 %v217
    %v920 = vunpack.c.l.b16 %v218
    %v921 = vunpack.c.h.b16 %v218
    %v922 = vunpack.c.l.b16 %v219
    %v923 = vunpack.c.l.b16 %v220
    %v924 = vunpack.c.h.b16 %v220
    %v925 = vunpack.c.l.b16 %v221
    %v926 = vunpack.c.h.b16 %v221
    %v927 = vunpack.c.l.b16 %v222
    %v928 = vunpack.c.l.b16 %v223
    %v929 = vunpack.c.h.b16 %v223
    %v930 = vunpack.c.l.b16 %v224
    %v931 = vunpack.c.h.b16 %v224
    %v932 = vunpack.c.l.b16 %v225
    %v933 = vunpack.c.l.b16 %v226
    %v934 = vunpack.c.h.b16 %v226
    %v935 = vunpack.c.l.b16 %v227
    %v936 = vunpack.c.h.b16 %v227
    %v937 = vunpack.c.l.b16 %v228
    %v938 = vunpack.c.l.b16 %v229
    %v939 = vunpack.c.h.b16 %v229
    %v940 = vunpack.c.l.b16 %v230
    %v941 = vunpack.c.h.b16 %v230
    %v942 = vunpack.c.l.b16 %v231
    %v943 = vunpack.c.l.b16 %v232
    %v944 = vunpack.c.h.b16 %v232
    %v945 = vunpack.c.l.b16 %v233
    %v946 = vunpack.c.h.b16 %v233
    %v947 = vunpack.c.l.b16 %v234
    %v948 = vunpack.c.l.b16 %v235
    %v949 = vunpack.c.h.b16 %v235
    %v950 = vunpack.c.l.b16 %v236
    %v951 = vunpack.c.h.b16 %v236
    %v952 = vunpack.c.l.b16 %v237
    %v953 = vunpack.c.l.b16 %v238
    %v954 = vunpack.c.h.b16 %v238
    %v955 = vunpack.c.l.b16 %v239
    %v956 = vunpack.c.h.b16 %v239
    %v957 = vunpack.c.l.b16 %v240
    %v958 = vunpack.c.l.b16 %v241
    %v959 = vunpack.c.h.b16 %v241
    %v960 = vunpack.c.l.b16 %v242
    %v961 = vunpack.c.h.b16 %v242
    %v962 = vunpack.c.l.b16 %v243
    %v963 = vunpack.c.l.b16 %v244
    %v964 = vunpack.c.h.b16 %v244
    %v965 = vunpack.c.l.b16 %v245
    %v966 = vunpack.c.h.b16 %v245
    %v967 = vunpack.c.l.b16 %v246
    %v968 = vunpack.c.l.b16 %v247
    %v969 = vunpack.c.h.b16 %v247
    %v970 = vunpack.c.l.b16 %v248
    %v971 = vunpack.c.h.b16 %v248
    %v972 = vunpack.c.l.b16 %v249
    %v973 = vunpack.c.l.b16 %v250
    %v974 = vunpack.c.h.b16 %v250
    %v975 = vunpack.c.l.b16 %v251
    %v976 = vunpack.c.h.b16 %v251
    %v977 = vunpack.c.l.b16 %v252
    %v978 = vunpack.c.l.b16 %v253
    %v979 = vunpack.c.h.b16 %v253
    %v980 = vunpack.c.l.b16 %v254
    %v981 = vunpack.c.h.b16 %v254
    %v982 = vunpack.c.l.b16 %v255
    %v983 = vunpack.c.l.b16 %v256
    %v984 = vunpack.c.h.b16 %v256
    %v985 = vunpack.c.l.b16 %v257
    %v986 = vunpack.c.h.b16 %v257
    %v987 = vunpack.c.l.b16 %v258
    %v988 = vunpack.c.l.b16 %v259
    %v989 = vunpack.c.h.b16 %v259
    %v990 = vunpack.c.l.b16 %v260
    %v991 = vunpack.c.h.b16 %v260
    %v992 = vunpack.c.l.b16 %v261
    %v993 = vunpack.c.l.b16 %v262
    %v994 = vunpack.c.h.b16 %v262
    %v995 = vunpack.c.l.b16 %v263
    %v996 = vunpack.c.h.b16 %v263
    %v997 = vunpack.c.l.b16 %v264
    %v998 = vunpack.c.l.b16 %v265
    %v999 = vunpack.c.h.b16 %v265
    %v1000 = vunpack.c.l.b16 %v266
    %v1001 = vunpack.c.h.b16 %v266
    %v1002 = vunpack.c.l.b16 %v267
    %v1003 = vunpack.c.l.b16 %v268
    %v1004 = vunpack.c.h.b16 %v268
    %v1005 = vunpack.c.l.b16 %v269
    %v1006 = vunpack.c.h.b16 %v269
    %v1007 = vunpack.c.l.b16 %v270
    %v1008 = vunpack.c.l.b16 %v271
    %v1009 = vunpack.c.h.b16 %v271
    %v1010 = vunpack.c.l.b16 %v272
    %v1011 = vunpack.c.h.b16 %v272
    %v1012 = vunpack.c.l.b16 %v273
    %v1013 = vunpack.c.l.b16 %v274
    %v1014 = vunpack.c.h.b16 %v274
    %v1015 = vunpack.c.l.b16 %v275
    %v1016 = vunpack.c.h.b16 %v275
    %v1017 = vunpack.c.l.b16 %v276
    %v1018 = vunpack.c.l.b16 %v277
    %v1019 = vunpack.c.h.b16 %v277
    %v1020 = vunpack.c.l.b16 %v278
    %v1021 = vunpack.c.h.b16 %v278
    %v1022 = vunpack.c.l.b16 %v279
    %v1023 = vunpack.c.l.b16 %v280
    %v1024 = vunpack.c.h.b16 %v280
    %v1025 = vunpack.c.l.b16 %v281
    %v1026 = vunpack.c.h.b16 %v281
    %v1027 = vunpack.c.l.b16 %v282
    %v1028 = vunpack.c.l.b16 %v283
    %v1029 = vunpack.c.h.b16 %v283
    %v1030 = vunpack.c.l.b16 %v284
    %v1031 = vunpack.c.h.b16 %v284
    %v1032 = vunpack.c.l.b16 %v285
    %v1033 = vunpack.c.l.b16 %v286
    %v1034 = vunpack.c.h.b16 %v286
    %v1035 = vunpack.c.l.b16 %v287
    %v1036 = vunpack.c.h.b16 %v287
    %v1037 = vunpack.c.l.b16 %v288
    %v1038 = vunpack.c.l.b16 %v289
    %v1039 = vunpack.c.h.b16 %v289
    %v1040 = vunpack.c.l.b16 %v290
    %v1041 = vunpack.c.h.b16 %v290
    %v1042 = vunpack.c.l.b16 %v291
    %v1043 = vunpack.c.l.b16 %v292
    %v1044 = vunpack.c.h.b16 %v292
    %v1045 = vunpack.c.l.b16 %v293
    %v1046 = vunpack.c.h.b16 %v293
    %v1047 = vunpack.c.l.b16 %v294
    %v1048 = vunpack.c.l.b16 %v295
    %v1049 = vunpack.c.h.b16 %v295
    %v1050 = vunpack.c.l.b16 %v296
    %v1051 = vunpack.c.h.b16 %v296
    %v1052 = vunpack.c.l.b16 %v297
    %v1053 = vunpack.c.l.b16 %v298
    %v1054 = vunpack.c.h.b16 %v298
    %v1055 = vunpack.c.l.b16 %v299
    %v1056 = vunpack.c.h.b16 %v299
    %v1057 = vunpack.c.l.b16 %v300
    %v1058 = vunpack.c.l.b16 %v301
    %v1059 = vunpack.c.h.b16 %v301
    %v1060 = vunpack.c.l.b16 %v302
    %v1061 = vunpack.c.h.b16 %v302
    %v1062 = vunpack.c.l.b16 %v303
    %v1063 = vunpack.c.l.b16 %v304
    %v1064 = vunpack.c.h.b16 %v304
    %v1065 = vunpack.c.l.b16 %v305
    %v1066 = vunpack.c.h.b16 %v305
    %v1067 = vunpack.c.l.b16 %v306
    %v1068 = vunpack.c.l.b16 %v307
    %v1069 = vunpack.c.h.b16 %v307
    %v1070 = vunpack.c.l.b16 %v308
    %v1071 = vunpack.c.h.b16 %v308
    %v1072 = vunpack.c.l.b16 %v309
    %v1073 = vunpack.c.l.b16 %v310
    %v1074 = vunpack.c.h.b16 %v310
    %v1075 = vunpack.c.l.b16 %v311
    %v1076 = vunpack.c.h.b16 %v311
    %v1077 = vunpack.c.l.b16 %v312
    %v1078 = vunpack.c.l.b16 %v313
    %v1079 = vunpack.c.h.b16 %v313
    %v1080 = vunpack.c.l.b16 %v314
    %v1081 = vunpack.c.h.b16 %v314
    %v1082 = vunpack.c.l.b16 %v315
    %v1083 = vunpack.c.l.b16 %v316
    %v1084 = vunpack.c.h.b16 %v316
    %v1085 = vunpack.c.l.b16 %v317
    %v1086 = vunpack.c.h.b16 %v317
    %v1087 = vunpack.c.l.b16 %v318
    %v1088 = vunpack.c.l.b16 %v319
    %v1089 = vunpack.c.h.b16 %v319
    %v1090 = vunpack.c.l.b16 %v320
    %v1091 = vunpack.c.h.b16 %v320
    %v1092 = vunpack.c.l.b16 %v321
    %v1093 = vunpack.c.l.b16 %v322
    %v1094 = vunpack.c.h.b16 %v322
    %v1095 = vunpack.c.l.b16 %v323
    %v1096 = vunpack.c.h.b16 %v323
    %v1097 = vunpack.c.l.b16 %v324
    %v1098 = vunpack.c.l.b16 %v325
    %v1099 = vunpack.c.h.b16 %v325
    %v1100 = vunpack.c.l.b16 %v326
    %v1101 = vunpack.c.h.b16 %v326
    %v1102 = vunpack.c.l.b16 %v327
    %v1103 = vunpack.c.l.b16 %v328
    %v1104 = vunpack.c.h.b16 %v328
    %v1105 = vunpack.c.l.b16 %v329
    %v1106 = vunpack.c.h.b16 %v329
    %v1107 = vunpack.c.l.b16 %v330
    %v1108 = vunpack.c.l.b16 %v331
    %v1109 = vunpack.c.h.b16 %v331
    %v1110 = vunpack.c.l.b16 %v332
    %v1111 = vunpack.c.h.b16 %v332
    %v1112 = vunpack.c.l.b16 %v333
    %v1113 = vunpack.c.l.b16 %v334
    %v1114 = vunpack.c.h.b16 %v334
    %v1115 = vunpack.c.l.b16 %v335
    %v1116 = vunpack.c.h.b16 %v335
    %v1117 = vunpack.c.l.b16 %v336
    %v1118 = vunpack.c.l.b16 %v337
    %v1119 = vunpack.c.h.b16 %v337
    %v1120 = vunpack.c.l.b16 %v338
    %v1121 = vunpack.c.h.b16 %v338
    %v1122 = vunpack.c.l.b16 %v339
    %v1123 = vunpack.c.l.b16 %v340
    %v1124 = vunpack.c.h.b16 %v340
    %v1125 = vunpack.c.l.b16 %v341
    %v1126 = vunpack.c.h.b16 %v341
    %v1127 = vunpack.c.l.b16 %v342
    %v1128 = vunpack.c.l.b16 %v343
    %v1129 = vunpack.c.h.b16 %v343
    %v1130 = vunpack.c.l.b16 %v344
    %v1131 = vunpack.c.h.b16 %v344
    %v1132 = vunpack.c.l.b16 %v345
    %v1133 = vunpack.c.l.b16 %v346
    %v1134 = vunpack.c.h.b16 %v346
    %v1135 = vunpack.c.l.b16 %v347
    %v1136 = vunpack.c.h.b16 %v347
    %v1137 = vunpack.c.l.b16 %v348
    %v1138 = vunpack.c.l.b16 %v349
    %v1139 = vunpack.c.h.b16 %v349
    %v1140 = vunpack.c.l.b16 %v350
    %v1141 = vunpack.c.h.b16 %v350
    %v1142 = vunpack.c.l.b16 %v351
    %v1143 = vunpack.c.l.b16 %v352
    %v1144 = vunpack.c.h.b16 %v352
    %v1145 = vunpack.c.l.b16 %v353
    %v1146 = vunpack.c.h.b16 %v353
    %v1147 = vunpack.c.l.b16 %v354
    %v1148 = vunpack.c.l.b16 %v355
    %v1149 = vunpack.c.h.b16 %v355
    %v1150 = vunpack.c.l.b16 %v356
    %v1151 = vunpack.c.h.b16 %v356
    %v1152 = vunpack.c.l.b16 %v357
    %v1153 = vunpack.c.l.b16 %v358
    %v1154 = vunpack.c.h.b16 %v358
    %v1155 = vunpack.c.l.b16 %v359
    %v1156 = vunpack.c.h.b16 %v359
    %v1157 = vunpack.c.l.b16 %v360
    %v1158 = vunpack.c.l.b16 %v361
    %v1159 = vunpack.c.h.b16 %v361
    %v1160 = vunpack.c.l.b16 %v362
    %v1161 = vunpack.c.h.b16 %v362
    %v1162 = vunpack.c.l.b16 %v363
    %v1163 = vunpack.c.l.b16 %v364
    %v1164 = vunpack.c.h.b16 %v364
    %v1165 = vunpack.c.l.b16 %v365
    %v1166 = vunpack.c.h.b16 %v365
    %v1167 = vunpack.c.l.b16 %v366
    %v1168 = vunpack.c.l.b16 %v367
    %v1169 = vunpack.c.h.b16 %v367
    %v1170 = vunpack.c.l.b16 %v368
    %v1171 = vunpack.c.h.b16 %v368
    %v1172 = vunpack.c.l.b16 %v369
    %v1173 = vunpack.c.l.b16 %v370
    %v1174 = vunpack.c.h.b16 %v370
    %v1175 = vunpack.c.l.b16 %v371
    %v1176 = vunpack.c.h.b16 %v371
    %v1177 = vunpack.c.l.b16 %v372
    %v1178 = vunpack.c.l.b16 %v373
    %v1179 = vunpack.c.h.b16 %v373
    %v1180 = vunpack.c.l.b16 %v374
    %v1181 = vunpack.c.h.b16 %v374
    %v1182 = vunpack.c.l.b16 %v375
    %v1183 = vunpack.c.l.b16 %v376
    %v1184 = vunpack.c.h.b16 %v376
    %v1185 = vunpack.c.l.b16 %v377
    %v1186 = vunpack.c.h.b16 %v377
    %v1187 = vunpack.c.l.b16 %v378
    %v1188 = vunpack.c.l.b16 %v379
    %v1189 = vunpack.c.h.b16 %v379
    %v1190 = vunpack.c.l.b16 %v380
    %v1191 = vunpack.c.h.b16 %v380
    %v1192 = vunpack.c.l.b16 %v381
    %v1193 = vunpack.c.l.b16 %v382
    %v1194 = vunpack.c.h.b16 %v382
    %v1195 = vunpack.c.l.b16 %v383
    %v1196 = vunpack.c.h.b16 %v383
    %v1197 = vunpack.c.l.b16 %v384
    %v1198 = vunpack.c.l.b16 %v385
    %v1199 = vunpack.c.h.b16 %v385
    %v1200 = vunpack.c.l.b16 %v386
    %v1201 = vunpack.c.h.b16 %v386
    %v1202 = vunpack.c.l.b16 %v387
    %v1203 = vunpack.c.l.b16 %v388
    %v1204 = vunpack.c.h.b16 %v388
    %v1205 = vunpack.c.l.b16 %v389
    %v1206 = vunpack.c.h.b16 %v389
    %v1207 = vunpack.c.l.b16 %v390
    %v1208 = vunpack.c.l.b16 %v391
    %v1209 = vunpack.c.h.b16 %v391
    %v1210 = vunpack.c.l.b16 %v392
    %v1211 = vunpack.c.h.b16 %v392
    %v1212 = vunpack.c.l.b16 %v393
    %v1213 = vunpack.c.l.b16 %v394
    %v1214 = vunpack.c.h.b16 %v394
    %v1215 = vunpack.c.l.b16 %v395
    %v1216 = vunpack.c.h.b16 %v395
    %v1217 = vunpack.c.l.b16 %v396
    %v1218 = vunpack.c.l.b16 %v397
    %v1219 = vunpack.c.h.b16 %v397
    %v1220 = vunpack.c.l.b16 %v398
    %v1221 = vunpack.c.h.b16 %v398
    %v1222 = vunpack.c.l.b16 %v399
    %v1223 = vunpack.c.l.b16 %v400
    %v1224 = vunpack.c.h.b16 %v400
    %v1225 = vunpack.c.l.b16 %v401
    %v1226 = vunpack.c.h.b16 %v401
    %v1227 = vunpack.c.l.b16 %v402
    %v1228 = vunpack.c.l.b16 %v403
    %v1229 = vunpack.c.h.b16 %v403
    %v1230 = vunpack.c.l.b16 %v404
    %v1231 = vunpack.c.h.b16 %v404
    %v1232 = vunpack.c.l.b16 %v405
    %v1233 = vunpack.c.l.b16 %v406
    %v1234 = vunpack.c.h.b16 %v406
    %v1235 = vunpack.c.l.b16 %v407
    %v1236 = vunpack.c.h.b16 %v407
    %v1237 = vunpack.c.l.b16 %v408
    %v1238 = vunpack.c.l.b16 %v409
    %v1239 = vunpack.c.h.b16 %v409
    %v1240 = vunpack.c.l.b16 %v410
    %v1241 = vunpack.c.h.b16 %v410
    %v1242 = vunpack.c.l.b16 %v411
    %v1243 = vunpack.c.l.b16 %v412
    %v1244 = vunpack.c.h.b16 %v412
    %v1245 = vunpack.c.l.b16 %v413
    %v1246 = vunpack.c.h.b16 %v413
    %v1247 = vunpack.c.l.b16 %v414
    %v1248 = vunpack.c.l.b16 %v415
    %v1249 = vunpack.c.h.b16 %v415
    %v1250 = vunpack.c.l.b16 %v416
    %v1251 = vunpack.c.h.b16 %v416
    %v1252 = vunpack.c.l.b16 %v417
    %v1253 = vpack.c.b16 %v768, %v763
    %v1254 = vpack.c.b16 %v769, %v764
    %v1255 = vpack.c.b16 %v770, %v765
    %v1256 = vpack.c.b16 %v771, %v766
    %v1257 = vpack.c.b16 %v772, %v767
    %v1258 = vpack.c.b16 %v778, %v773
    %v1259 = vpack.c.b16 %v779, %v774
    %v1260 = vpack.c.b16 %v780, %v775
    %v1261 = vpack.c.b16 %v781, %v776
    %v1262 = vpack.c.b16 %v782, %v777
    %v1263 = vpack.c.b16 %v788, %v783
    %v1264 = vpack.c.b16 %v789, %v784
    %v1265 = vpack.c.b16 %v790, %v785
    %v1266 = vpack.c.b16 %v791, %v786
    %v1267 = vpack.c.b16 %v792, %v787
    %v1268 = vpack.c.b16 %v798, %v793
    %v1269 = vpack.c.b16 %v799, %v794
    %v1270 = vpack.c.b16 %v800, %v795
    %v1271 = vpack.c.b16 %v801, %v796
    %v1272 = vpack.c.b16 %v802, %v797
    %v1273 = vpack.c.b16 %v808, %v803
    %v1274 = vpack.c.b16 %v809, %v804
    %v1275 = vpack.c.b16 %v810, %v805
    %v1276 = vpack.c.b16 %v811, %v806
    %v1277 = vpack.c.b16 %v812, %v807
    %v1278 = vpack.c.b16 %v818, %v813
    %v1279 = vpack.c.b16 %v819, %v814
    %v1280 = vpack.c.b16 %v820, %v815
    %v1281 = vpack.c.b16 %v821, %v816
    %v1282 = vpack.c.b16 %v822, %v817
    %v1283 = vpack.c.b16 %v828, %v823
    %v1284 = vpack.c.b16 %v829, %v824
    %v1285 = vpack.c.b16 %v830, %v825
    %v1286 = vpack.c.b16 %v831, %v826
    %v1287 = vpack.c.b16 %v832, %v827
    %v1288 = vpack.c.b16 %v838, %v833
    %v1289 = vpack.c.b16 %v839, %v834
    %v1290 = vpack.c.b16 %v840, %v835
    %v1291 = vpack.c.b16 %v841, %v836
    %v1292 = vpack.c.b16 %v842, %v837
    %v1293 = vpack.c.b16 %v848, %v843
    %v1294 = vpack.c.b16 %v849, %v844
    %v1295 = vpack.c.b16 %v850, %v845
    %v1296 = vpack.c.b16 %v851, %v846
    %v1297 = vpack.c.b16 %v852, %v847
    %v1298 = vpack.c.b16 %v858, %v853
    %v1299 = vpack.c.b16 %v859, %v854
    %v1300 = vpack.c.b16 %v860, %v855
    %v1301 = vpack.c.b16 %v861, %v856
    %v1302 = vpack.c.b16 %v862, %v857
    %v1303 = vpack.c.b16 %v868, %v863
    %v1304 = vpack.c.b16 %v869, %v864
    %v1305 = vpack.c.b16 %v870, %v865
    %v1306 = vpack.c.b16 %v871, %v866
    %v1307 = vpack.c.b16 %v872, %v867
    %v1308 = vpack.c.b16 %v878, %v873
    %v1309 = vpack.c.b16 %v879, %v874
    %v1310 = vpack.c.b16 %v880, %v875
    %v1311 = vpack.c.b16 %v881, %v876
    %v1312 = vpack.c.b16 %v882, %v877
    %v1313 = vpack.c.b16 %v888, %v883
    %v1314 = vpack.c.b16 %v889, %v884
    %v1315 = vpack.c.b16 %v890, %v885
    %v1316 = vpack.c.b16 %v891, %v886
    %v1317 = vpack.c.b16 %v892, %v887
    %v1318 = vpack.c.b16 %v898, %v893
    %v1319 = vpack.c.b16 %v899, %v894
    %v1320 = vpack.c.b16 %v900, %v895
    %v1321 = vpack.c.b16 %v901, %v896
    %v1322 = vpack.c.b16 %v902, %v897
    %v1323 = vpack.c.b16 %v908, %v903
    %v1324 = vpack.c.b16 %v909, %v904
    %v1325 = vpack.c.b16 %v910, %v905
    %v1326 = vpack.c.b16 %v911, %v906
    %v1327 = vpack.c.b16 %v912, %v907
    %v1328 = vpack.c.b16 %v918, %v913
    %v1329 = vpack.c.b16 %v919, %v914
    %v1330 = vpack.c.b16 %v920, %v915
    %v1331 = vpack.c.b16 %v921, %v916
    %v1332 = vpack.c.b16 %v922, %v917
    %v1333 = vpack.c.b16 %v928, %v923
    %v1334 = vpack.c.b16 %v929, %v924
    %v1335 = vpack.c.b16 %v930, %v925
    %v1336 = vpack.c.b16 %v931, %v926
    %v1337 = vpack.c.b16 %v932, %v927
    %v1338 = vpack.c.b16 %v938, %v933
    %v1339 = vpack.c.b16 %v939, %v934
    %v1340 = vpack.c.b16 %v940, %v935
    %v1341 = vpack.c.b16 %v941, %v936
    %v1342 = vpack.c.b16 %v942, %v937
    %v1343 = vpack.c.b16 %v948, %v943
    %v1344 = vpack.c.b16 %v949, %v944
    %v1345 = vpack.c.b16 %v950, %v945
    %v1346 = vpack.c.b16 %v951, %v946
    %v1347 = vpack.c.b16 %v952, %v947
    %v1348 = vpack.c.b16 %v958, %v953
    %v1349 = vpack.c.b16 %v959, %v954
    %v1350 = vpack.c.b16 %v960, %v955
    %v1351 = vpack.c.b16 %v961, %v956
    %v1352 = vpack.c.b16 %v962, %v957
    %v1353 = vpack.c.b16 %v968, %v963
    %v1354 = vpack.c.b16 %v969, %v964
    %v1355 = vpack.c.b16 %v970, %v965
    %v1356 = vpack.c.b16 %v971, %v966
    %v1357 = vpack.c.b16 %v972, %v967
    %v1358 = vpack.c.b16 %v978, %v973
    %v1359 = vpack.c.b16 %v979, %v974
    %v1360 = vpack.c.b16 %v980, %v975
    %v1361 = vpack.c.b16 %v981, %v976
    %v1362 = vpack.c.b16 %v982, %v977
    %v1363 = vpack.c.b16 %v988, %v983
    %v1364 = vpack.c.b16 %v989, %v984
    %v1365 = vpack.c.b16 %v990, %v985
    %v1366 = vpack.c.b16 %v991, %v986
    %v1367 = vpack.c.b16 %v992, %v987
    %v1368 = vpack.c.b16 %v998, %v993
    %v1369 = vpack.c.b16 %v999, %v994
    %v1370 = vpack.c.b16 %v1000, %v995
    %v1371 = vpack.c.b16 %v1001, %v996
    %v1372 = vpack.c.b16 %v1002, %v997
    %v1373 = vpack.c.b16 %v1008, %v1003
    %v1374 = vpack.c.b16 %v1009, %v1004
    %v1375 = vpack.c.b16 %v1010, %v1005
    %v1376 = vpack.c.b16 %v1011, %v1006
    %v1377 = vpack.c.b16 %v1012, %v1007
    %v1378 = vpack.c.b16 %v1018, %v1013
    %v1379 = vpack.c.b16 %v1019, %v1014
    %v1380 = vpack.c.b16 %v1020, %v1015
    %v1381 = vpack.c.b16 %v1021, %v1016
    %v1382 = vpack.c.b16 %v1022, %v1017
    %v1383 = vpack.c.b16 %v1028, %v1023
    %v1384 = vpack.c.b16 %v1029, %v1024
    %v1385 = vpack.c.b16 %v1030, %v1025
    %v1386 = vpack.c.b16 %v1031, %v1026
    %v1387 = vpack.c.b16 %v1032, %v1027
    %v1388 = vpack.c.b16 %v1038, %v1033
    %v1389 = vpack.c.b16 %v1039, %v1034
    %v1390 = vpack.c.b16 %v1040, %v1035
    %v1391 = vpack.c.b16 %v1041, %v1036
    %v1392 = vpack.c.b16 %v1042, %v1037
    %v1393 = vpack.c.b16 %v1048, %v1043
    %v1394 = vpack.c.b16 %v1049, %v1044
    %v1395 = vpack.c.b16 %v1050, %v1045
    %v1396 = vpack.c.b16 %v1051, %v1046
    %v1397 = vpack.c.b16 %v1052, %v1047
    %v1398 = vpack.c.b16 %v1058, %v1053
    %v1399 = vpack.c.b16 %v1059, %v1054
    %v1400 = vpack.c.b16 %v1060, %v1055
    %v1401 = vpack.c.b16 %v1061, %v1056
    %v1402 = vpack.c.b16 %v1062, %v1057
    %v1403 = vpack.c.b16 %v1068, %v1063
    %v1404 = vpack.c.b16 %v1069, %v1064
    %v1405 = vpack.c.b16 %v1070, %v1065
    %v1406 = vpack.c.b16 %v1071, %v1066
    %v1407 = vpack.c.b16 %v1072, %v1067
    %v1408 = vpack.c.b16 %v1078, %v1073
    %v1409 = vpack.c.b16 %v1079, %v1074
    %v1410 = vpack.c.b16 %v1080, %v1075
    %v1411 = vpack.c.b16 %v1081, %v1076
    %v1412 = vpack.c.b16 %v1082, %v1077
    %v1413 = vpack.c.b16 %v1088, %v1083
    %v1414 = vpack.c.b16 %v1089, %v1084
    %v1415 = vpack.c.b16 %v1090, %v1085
    %v1416 = vpack.c.b16 %v1091, %v1086
    %v1417 = vpack.c.b16 %v1092, %v1087
    %v1418 = vpack.c.b16 %v1098, %v1093
    %v1419 = vpack.c.b16 %v1099, %v1094
    %v1420 = vpack.c.b16 %v1100, %v1095
    %v1421 = vpack.c.b16 %v1101, %v1096
    %v1422 = vpack.c.b16 %v1102, %v1097
    %v1423 = vpack.c.b16 %v1108, %v1103
    %v1424 = vpack.c.b16 %v1109, %v1104
    %v1425 = vpack.c.b16 %v1110, %v1105
    %v1426 = vpack.c.b16 %v1111, %v1106
    %v1427 = vpack.c.b16 %v1112, %v1107
    %v1428 = vpack.c.b16 %v1118, %v1113
    %v1429 = vpack.c.b16 %v1119, %v1114
    %v1430 = vpack.c.b16 %v1120, %v1115
    %v1431 = vpack.c.b16 %v1121, %v1116
    %v1432 = vpack.c.b16 %v1122, %v1117
    %v1433 = vpack.c.b16 %v1128, %v1123
    %v1434 = vpack.c.b16 %v1129, %v1124
    %v1435 = vpack.c.b16 %v1130, %v1125
    %v1436 = vpack.c.b16 %v1131, %v1126
    %v1437 = vpack.c.b16 %v1132, %v1127
    %v1438 = vpack.c.b16 %v1138, %v1133
    %v1439 = vpack.c.b16 %v1139, %v1134
    %v1440 = vpack.c.b16 %v1140, %v1135
    %v1441 = vpack.c.b16 %v1141, %v1136
    %v1442 = vpack.c.b16 %v1142, %v1137
    %v1443 = vpack.c.b16 %v1148, %v1143
    %v1444 = vpack.c.b16 %v1149, %v1144
    %v1445 = vpack.c.b16 %v1150, %v1145
    %v1446 = vpack.c.b16 %v1151, %v1146
    %v1447 = vpack.c.b16 %v1152, %v1147
    %v1448 = vpack.c.b16 %v1158, %v1153
    %v1449 = vpack.c.b16 %v1159, %v1154
    %v1450 = vpack.c.b16 %v1160, %v1155
    %v1451 = vpack.c.b16 %v1161, %v1156
    %v1452 = vpack.c.b16 %v1162, %v1157
    %v1453 = vpack.c.b16 %v1168, %v1163
    %v1454 = vpack.c.b16 %v1169, %v1164
    %v1455 = vpack.c.b16 %v1170, %v1165
    %v1456 = vpack.c.b16 %v1171, %v1166
    %v1457 = vpack.c.b16 %v1172, %v1167
    %v1458 = vpack.c.b16 %v1178, %v1173
    %v1459 = vpack.c.b16 %v1179, %v1174
    %v1460 = vpack.c.b16 %v1180, %v1175
    %v1461 = vpack.c.b16 %v1181, %v1176
    %v1462 = vpack.c.b16 %v1182, %v1177
    %v1463 = vpack.c.b16 %v1188, %v1183
    %v1464 = vpack.c.b16 %v1189, %v1184
    %v1465 = vpack.c.b16 %v1190, %v1185
    %v1466 = vpack.c.b16 %v1191, %v1186
    %v1467 = vpack.c.b16 %v1192, %v1187
    %v1468 = vpack.c.b16 %v1198, %v1193
    %v1469 = vpack.c.b16 %v1199, %v1194
    %v1470 = vpack.c.b16 %v1200, %v1195
    %v1471 = vpack.c.b16 %v1201, %v1196
    %v1472 = vpack.c.b16 %v1202, %v1197
    %v1473 = vpack.c.b16 %v1208, %v1203
    %v1474 = vpack.c.b16 %v1209, %v1204
    %v1475 = vpack.c.b16 %v1210, %v1205
    %v1476 = vpack.c.b16 %v1211, %v1206
    %v1477 = vpack.c.b16 %v1212, %v1207
    %v1478 = vpack.c.b16 %v1218, %v1213
    %v1479 = vpack.c.b16 %v1219, %v1214
    %v1480 = vpack.c.b16 %v1220, %v1215
    %v1481 = vpack.c.b16 %v1221, %v1216
    %v1482 = vpack.c.b16 %v1222, %v1217
    %v1483 = vpack.c.b16 %v1228, %v1223
    %v1484 = vpack.c.b16 %v1229, %v1224
    %v1485 = vpack.c.b16 %v1230, %v1225
    %v1486 = vpack.c.b16 %v1231, %v1226
    %v1487 = vpack.c.b16 %v1232, %v1227
    %v1488 = vpack.c.b16 %v1238, %v1233
    %v1489 = vpack.c.b16 %v1239, %v1234
    %v1490 = vpack.c.b16 %v1240, %v1235
    %v1491 = vpack.c.b16 %v1241, %v1236
    %v1492 = vpack.c.b16 %v1242, %v1237
    %v1493 = vpack.c.b16 %v1248, %v1243
    %v1494 = vpack.c.b16 %v1249, %v1244
    %v1495 = vpack.c.b16 %v1250, %v1245
    %v1496 = vpack.c.b16 %v1251, %v1246
    %v1497 = vpack.c.b16 %v1252, %v1247
    %vm1743 = vcmask 130048
    %v1745 = vsel %vm1743, %v462, 0
    %1747 = vmatprep.subr.bf16.mxu0 %v1254
    %1748 = vmatpush1.bf16.msra.mxu0 %v1253
    %1749 = vmatprep.subr.bf16.mxu0 %v1259
    %1750 = vmatpush1.bf16.msra.mxu0 %v1258
    %1751 = vmatprep.subr.bf16.mxu0 %v1264
    %1752 = vmatpush1.bf16.msra.mxu0 %v1263
    %1753 = vmatprep.subr.bf16.mxu0 %v1269
    %1754 = vmatpush1.bf16.msra.mxu0 %v1268
    %1755 = vmatprep.subr.bf16.mxu0 %v1274
    %1756 = vmatpush1.bf16.msra.mxu0 %v1273
    %1757 = vmatprep.subr.bf16.mxu0 %v1279
    %1758 = vmatpush1.bf16.msra.mxu0 %v1278
    %1759 = vmatprep.subr.bf16.mxu0 %v1284
    %1760 = vmatpush1.bf16.msra.mxu0 %v1283
    %1761 = vmatprep.subr.bf16.mxu0 %v1289
    %1762 = vmatpush1.bf16.msra.mxu0 %v1288
    %1763 = vmatprep.subr.bf16.mxu0 %v1294
    %1764 = vmatpush1.bf16.msra.mxu0 %v1293
    %1765 = vmatprep.subr.bf16.mxu0 %v1299
    %1766 = vmatpush1.bf16.msra.mxu0 %v1298
    %1767 = vmatprep.subr.bf16.mxu0 %v1304
    %1768 = vmatpush1.bf16.msra.mxu0 %v1303
    %1769 = vmatprep.subr.bf16.mxu0 %v1309
    %1770 = vmatpush1.bf16.msra.mxu0 %v1308
    %1771 = vmatprep.subr.bf16.mxu0 %v1314
    %1772 = vmatpush1.bf16.msra.mxu0 %v1313
    %1773 = vmatprep.subr.bf16.mxu0 %v1319
    %1774 = vmatpush1.bf16.msra.mxu0 %v1318
    %1775 = vmatprep.subr.bf16.mxu0 %v1324
    %1776 = vmatpush1.bf16.msra.mxu0 %v1323
    %1777 = vmatprep.subr.bf16.mxu0 %v1329
    %1778 = vmatpush1.bf16.msra.mxu0 %v1328
    %1779 = vmatprep.mubr.bf16.mxu0 %v457
    %1780 = vmatmul.mubr.bf16.gmra.mrb[0].mxu0 %v456
    %v1781 = vpop.f32.mrb[0].mxu0
    %v1782 = vadd.f32 %v423, %v1781
    %v1783 = vpop.f32.mrb[0].mxu0
    %v1784 = vadd.f32 %v427, %v1783
    %v1785 = vpop.f32.mrb[0].mxu0
    %v1786 = vpop.f32.mrb[0].mxu0
    %1787 = vdwg.mxu0
    %1788 = vmatprep.subr.bf16.mxu0 %v1334
    %1789 = vmatpush1.bf16.msra.mxu0 %v1333
    %1790 = vmatprep.subr.bf16.mxu0 %v1339
    %1791 = vmatpush1.bf16.msra.mxu0 %v1338
    %1792 = vmatprep.subr.bf16.mxu0 %v1344
    %1793 = vmatpush1.bf16.msra.mxu0 %v1343
    %1794 = vmatprep.subr.bf16.mxu0 %v1349
    %1795 = vmatpush1.bf16.msra.mxu0 %v1348
    %1796 = vmatprep.subr.bf16.mxu0 %v1354
    %1797 = vmatpush1.bf16.msra.mxu0 %v1353
    %1798 = vmatprep.subr.bf16.mxu0 %v1359
    %1799 = vmatpush1.bf16.msra.mxu0 %v1358
    %1800 = vmatprep.subr.bf16.mxu0 %v1364
    %1801 = vmatpush1.bf16.msra.mxu0 %v1363
    %1802 = vmatprep.subr.bf16.mxu0 %v1369
    %1803 = vmatpush1.bf16.msra.mxu0 %v1368
    %1804 = vmatprep.subr.bf16.mxu0 %v1374
    %1805 = vmatpush1.bf16.msra.mxu0 %v1373
    %1806 = vmatprep.subr.bf16.mxu0 %v1379
    %1807 = vmatpush1.bf16.msra.mxu0 %v1378
    %1808 = vmatprep.subr.bf16.mxu0 %v1384
    %1809 = vmatpush1.bf16.msra.mxu0 %v1383
    %1810 = vmatprep.subr.bf16.mxu0 %v1389
    %1811 = vmatpush1.bf16.msra.mxu0 %v1388
    %1812 = vmatprep.subr.bf16.mxu0 %v1394
    %1813 = vmatpush1.bf16.msra.mxu0 %v1393
    %1814 = vmatprep.subr.bf16.mxu0 %v1399
    %1815 = vmatpush1.bf16.msra.mxu0 %v1398
    %1816 = vmatprep.subr.bf16.mxu0 %v1404
    %1817 = vmatpush1.bf16.msra.mxu0 %v1403
    %1818 = vmatprep.subr.bf16.mxu0 %v1409
    %1819 = vmatpush1.bf16.msra.mxu0 %v1408
    %1820 = vmatprep.mubr.bf16.mxu0 %v459
    %1821 = vmatmul.mubr.bf16.gmra.mrb[0].mxu0 %v458
    %v1822 = vpop.f32.mrb[0].mxu0
    %v1823 = vadd.f32 %v1782, %v1822
    %v1824 = vpop.f32.mrb[0].mxu0
    %v1825 = vadd.f32 %v1784, %v1824
    %v1826 = vpop.f32.mrb[0].mxu0
    %v1827 = vpop.f32.mrb[0].mxu0
    %1828 = vdwg.mxu0
    %1829 = vmatprep.subr.bf16.mxu0 %v1414
    %1830 = vmatpush1.bf16.msra.mxu0 %v1413
    %1831 = vmatprep.subr.bf16.mxu0 %v1419
    %1832 = vmatpush1.bf16.msra.mxu0 %v1418
    %1833 = vmatprep.subr.bf16.mxu0 %v1424
    %1834 = vmatpush1.bf16.msra.mxu0 %v1423
    %1835 = vmatprep.subr.bf16.mxu0 %v1429
    %1836 = vmatpush1.bf16.msra.mxu0 %v1428
    %1837 = vmatprep.subr.bf16.mxu0 %v1434
    %1838 = vmatpush1.bf16.msra.mxu0 %v1433
    %1839 = vmatprep.subr.bf16.mxu0 %v1439
    %1840 = vmatpush1.bf16.msra.mxu0 %v1438
    %1841 = vmatprep.subr.bf16.mxu0 %v1444
    %1842 = vmatpush1.bf16.msra.mxu0 %v1443
    %1843 = vmatprep.subr.bf16.mxu0 %v1449
    %1844 = vmatpush1.bf16.msra.mxu0 %v1448
    %1845 = vmatprep.subr.bf16.mxu0 %v1454
    %1846 = vmatpush1.bf16.msra.mxu0 %v1453
    %1847 = vmatprep.subr.bf16.mxu0 %v1459
    %1848 = vmatpush1.bf16.msra.mxu0 %v1458
    %1849 = vmatprep.subr.bf16.mxu0 %v1464
    %1850 = vmatpush1.bf16.msra.mxu0 %v1463
    %1851 = vmatprep.subr.bf16.mxu0 %v1469
    %1852 = vmatpush1.bf16.msra.mxu0 %v1468
    %1853 = vmatprep.subr.bf16.mxu0 %v1474
    %1854 = vmatpush1.bf16.msra.mxu0 %v1473
    %1855 = vmatprep.subr.bf16.mxu0 %v1479
    %1856 = vmatpush1.bf16.msra.mxu0 %v1478
    %1857 = vmatprep.subr.bf16.mxu0 %v1484
    %1858 = vmatpush1.bf16.msra.mxu0 %v1483
    %1859 = vmatprep.subr.bf16.mxu0 %v1489
    %1860 = vmatpush1.bf16.msra.mxu0 %v1488
    %1861 = vmatprep.mubr.bf16.mxu0 %v461
    %1862 = vmatmul.mubr.bf16.gmra.mrb[0].mxu0 %v460
    %v1863 = vpop.f32.mrb[0].mxu0
    %v1864 = vadd.f32 %v1823, %v1863
    %v1865 = vpop.f32.mrb[0].mxu0
    %v1866 = vadd.f32 %v1825, %v1865
    %v1867 = vpop.f32.mrb[0].mxu0
    %v1868 = vpop.f32.mrb[0].mxu0
    %1869 = vdwg.mxu0
    %1870 = vmatprep.subr.bf16.mxu0 %v1494
    %1871 = vmatpush1.bf16.msra.mxu0 %v1493
    %1872 = vmatprep.subr.bf16.mxu0 0
    %1873 = vmatpush1.bf16.msra.mxu0 0
    %1874 = vmatprep.subr.bf16.mxu0 0
    %1875 = vmatpush1.bf16.msra.mxu0 0
    %1876 = vmatprep.subr.bf16.mxu0 0
    %1877 = vmatpush1.bf16.msra.mxu0 0
    %1878 = vmatprep.subr.bf16.mxu0 0
    %1879 = vmatpush1.bf16.msra.mxu0 0
    %1880 = vmatprep.subr.bf16.mxu0 0
    %1881 = vmatpush1.bf16.msra.mxu0 0
    %1882 = vmatprep.subr.bf16.mxu0 0
    %1883 = vmatpush1.bf16.msra.mxu0 0
    %1884 = vmatprep.subr.bf16.mxu0 0
    %1885 = vmatpush1.bf16.msra.mxu0 0
    %1886 = vmatprep.subr.bf16.mxu0 0
    %1887 = vmatpush1.bf16.msra.mxu0 0
    %1888 = vmatprep.subr.bf16.mxu0 0
    %1889 = vmatpush1.bf16.msra.mxu0 0
    %1890 = vmatprep.subr.bf16.mxu0 0
    %1891 = vmatpush1.bf16.msra.mxu0 0
    %1892 = vmatprep.subr.bf16.mxu0 0
    %1893 = vmatpush1.bf16.msra.mxu0 0
    %1894 = vmatprep.subr.bf16.mxu0 0
    %1895 = vmatpush1.bf16.msra.mxu0 0
    %1896 = vmatprep.subr.bf16.mxu0 0
    %1897 = vmatpush1.bf16.msra.mxu0 0
    %1898 = vmatprep.subr.bf16.mxu0 0
    %1899 = vmatpush1.bf16.msra.mxu0 0
    %1900 = vmatprep.subr.bf16.mxu0 0
    %1901 = vmatpush1.bf16.msra.mxu0 0
    %1902 = vmatprep.mubr.bf16.mxu0 0
    %1903 = vmatmul.mubr.bf16.gmra.mrb[0].mxu0 %v1745
    %v1904 = vpop.f32.mrb[0].mxu0
    %v1905 = vadd.f32 %v1864, %v1904
    %v1906 = vpop.f32.mrb[0].mxu0
    %v1907 = vadd.f32 %v1866, %v1906
    %v1908 = vpop.f32.mrb[0].mxu0
    %v1909 = vpop.f32.mrb[0].mxu0
    %1910 = vdwg.mxu0
    %1911 = vmatprep.subr.bf16.mxu0 %v1256
    %1912 = vmatpush1.bf16.msra.mxu0 %v1255
    %1913 = vmatprep.subr.bf16.mxu0 %v1261
    %1914 = vmatpush1.bf16.msra.mxu0 %v1260
    %1915 = vmatprep.subr.bf16.mxu0 %v1266
    %1916 = vmatpush1.bf16.msra.mxu0 %v1265
    %1917 = vmatprep.subr.bf16.mxu0 %v1271
    %1918 = vmatpush1.bf16.msra.mxu0 %v1270
    %1919 = vmatprep.subr.bf16.mxu0 %v1276
    %1920 = vmatpush1.bf16.msra.mxu0 %v1275
    %1921 = vmatprep.subr.bf16.mxu0 %v1281
    %1922 = vmatpush1.bf16.msra.mxu0 %v1280
    %1923 = vmatprep.subr.bf16.mxu0 %v1286
    %1924 = vmatpush1.bf16.msra.mxu0 %v1285
    %1925 = vmatprep.subr.bf16.mxu0 %v1291
    %1926 = vmatpush1.bf16.msra.mxu0 %v1290
    %1927 = vmatprep.subr.bf16.mxu0 %v1296
    %1928 = vmatpush1.bf16.msra.mxu0 %v1295
    %1929 = vmatprep.subr.bf16.mxu0 %v1301
    %1930 = vmatpush1.bf16.msra.mxu0 %v1300
    %1931 = vmatprep.subr.bf16.mxu0 %v1306
    %1932 = vmatpush1.bf16.msra.mxu0 %v1305
    %1933 = vmatprep.subr.bf16.mxu0 %v1311
    %1934 = vmatpush1.bf16.msra.mxu0 %v1310
    %1935 = vmatprep.subr.bf16.mxu0 %v1316
    %1936 = vmatpush1.bf16.msra.mxu0 %v1315
    %1937 = vmatprep.subr.bf16.mxu0 %v1321
    %1938 = vmatpush1.bf16.msra.mxu0 %v1320
    %1939 = vmatprep.subr.bf16.mxu0 %v1326
    %1940 = vmatpush1.bf16.msra.mxu0 %v1325
    %1941 = vmatprep.subr.bf16.mxu0 %v1331
    %1942 = vmatpush1.bf16.msra.mxu0 %v1330
    %1943 = vmatprep.mubr.bf16.mxu0 %v457
    %1944 = vmatmul.mubr.bf16.gmra.mrb[0].mxu0 %v456
    %v1945 = vpop.f32.mrb[0].mxu0
    %v1946 = vadd.f32 %v431, %v1945
    %v1947 = vpop.f32.mrb[0].mxu0
    %v1948 = vadd.f32 %v435, %v1947
    %v1949 = vpop.f32.mrb[0].mxu0
    %v1950 = vpop.f32.mrb[0].mxu0
    %1951 = vdwg.mxu0
    %1952 = vmatprep.subr.bf16.mxu0 %v1336
    %1953 = vmatpush1.bf16.msra.mxu0 %v1335
    %1954 = vmatprep.subr.bf16.mxu0 %v1341
    %1955 = vmatpush1.bf16.msra.mxu0 %v1340
    %1956 = vmatprep.subr.bf16.mxu0 %v1346
    %1957 = vmatpush1.bf16.msra.mxu0 %v1345
    %1958 = vmatprep.subr.bf16.mxu0 %v1351
    %1959 = vmatpush1.bf16.msra.mxu0 %v1350
    %1960 = vmatprep.subr.bf16.mxu0 %v1356
    %1961 = vmatpush1.bf16.msra.mxu0 %v1355
    %1962 = vmatprep.subr.bf16.mxu0 %v1361
    %1963 = vmatpush1.bf16.msra.mxu0 %v1360
    %1964 = vmatprep.subr.bf16.mxu0 %v1366
    %1965 = vmatpush1.bf16.msra.mxu0 %v1365
    %1966 = vmatprep.subr.bf16.mxu0 %v1371
    %1967 = vmatpush1.bf16.msra.mxu0 %v1370
    %1968 = vmatprep.subr.bf16.mxu0 %v1376
    %1969 = vmatpush1.bf16.msra.mxu0 %v1375
    %1970 = vmatprep.subr.bf16.mxu0 %v1381
    %1971 = vmatpush1.bf16.msra.mxu0 %v1380
    %1972 = vmatprep.subr.bf16.mxu0 %v1386
    %1973 = vmatpush1.bf16.msra.mxu0 %v1385
    %1974 = vmatprep.subr.bf16.mxu0 %v1391
    %1975 = vmatpush1.bf16.msra.mxu0 %v1390
    %1976 = vmatprep.subr.bf16.mxu0 %v1396
    %1977 = vmatpush1.bf16.msra.mxu0 %v1395
    %1978 = vmatprep.subr.bf16.mxu0 %v1401
    %1979 = vmatpush1.bf16.msra.mxu0 %v1400
    %1980 = vmatprep.subr.bf16.mxu0 %v1406
    %1981 = vmatpush1.bf16.msra.mxu0 %v1405
    %1982 = vmatprep.subr.bf16.mxu0 %v1411
    %1983 = vmatpush1.bf16.msra.mxu0 %v1410
    %1984 = vmatprep.mubr.bf16.mxu0 %v459
    %1985 = vmatmul.mubr.bf16.gmra.mrb[0].mxu0 %v458
    %v1986 = vpop.f32.mrb[0].mxu0
    %v1987 = vadd.f32 %v1946, %v1986
    %v1988 = vpop.f32.mrb[0].mxu0
    %v1989 = vadd.f32 %v1948, %v1988
    %v1990 = vpop.f32.mrb[0].mxu0
    %v1991 = vpop.f32.mrb[0].mxu0
    %1992 = vdwg.mxu0
    %1993 = vmatprep.subr.bf16.mxu0 %v1416
    %1994 = vmatpush1.bf16.msra.mxu0 %v1415
    %1995 = vmatprep.subr.bf16.mxu0 %v1421
    %1996 = vmatpush1.bf16.msra.mxu0 %v1420
    %1997 = vmatprep.subr.bf16.mxu0 %v1426
    %1998 = vmatpush1.bf16.msra.mxu0 %v1425
    %1999 = vmatprep.subr.bf16.mxu0 %v1431
    %2000 = vmatpush1.bf16.msra.mxu0 %v1430
    %2001 = vmatprep.subr.bf16.mxu0 %v1436
    %2002 = vmatpush1.bf16.msra.mxu0 %v1435
    %2003 = vmatprep.subr.bf16.mxu0 %v1441
    %2004 = vmatpush1.bf16.msra.mxu0 %v1440
    %2005 = vmatprep.subr.bf16.mxu0 %v1446
    %2006 = vmatpush1.bf16.msra.mxu0 %v1445
    %2007 = vmatprep.subr.bf16.mxu0 %v1451
    %2008 = vmatpush1.bf16.msra.mxu0 %v1450
    %2009 = vmatprep.subr.bf16.mxu0 %v1456
    %2010 = vmatpush1.bf16.msra.mxu0 %v1455
    %2011 = vmatprep.subr.bf16.mxu0 %v1461
    %2012 = vmatpush1.bf16.msra.mxu0 %v1460
    %2013 = vmatprep.subr.bf16.mxu0 %v1466
    %2014 = vmatpush1.bf16.msra.mxu0 %v1465
    %2015 = vmatprep.subr.bf16.mxu0 %v1471
    %2016 = vmatpush1.bf16.msra.mxu0 %v1470
    %2017 = vmatprep.subr.bf16.mxu0 %v1476
    %2018 = vmatpush1.bf16.msra.mxu0 %v1475
    %2019 = vmatprep.subr.bf16.mxu0 %v1481
    %2020 = vmatpush1.bf16.msra.mxu0 %v1480
    %2021 = vmatprep.subr.bf16.mxu0 %v1486
    %2022 = vmatpush1.bf16.msra.mxu0 %v1485
    %2023 = vmatprep.subr.bf16.mxu0 %v1491
    %2024 = vmatpush1.bf16.msra.mxu0 %v1490
    %2025 = vmatprep.mubr.bf16.mxu0 %v461
    %2026 = vmatmul.mubr.bf16.gmra.mrb[0].mxu0 %v460
    %v2027 = vpop.f32.mrb[0].mxu0
    %v2028 = vadd.f32 %v1987, %v2027
    %v2029 = vpop.f32.mrb[0].mxu0
    %v2030 = vadd.f32 %v1989, %v2029
    %v2031 = vpop.f32.mrb[0].mxu0
    %v2032 = vpop.f32.mrb[0].mxu0
    %2033 = vdwg.mxu0
    %2034 = vmatprep.subr.bf16.mxu0 %v1496
    %2035 = vmatpush1.bf16.msra.mxu0 %v1495
    %2036 = vmatprep.subr.bf16.mxu0 0
    %2037 = vmatpush1.bf16.msra.mxu0 0
    %2038 = vmatprep.subr.bf16.mxu0 0
    %2039 = vmatpush1.bf16.msra.mxu0 0
    %2040 = vmatprep.subr.bf16.mxu0 0
    %2041 = vmatpush1.bf16.msra.mxu0 0
    %2042 = vmatprep.subr.bf16.mxu0 0
    %2043 = vmatpush1.bf16.msra.mxu0 0
    %2044 = vmatprep.subr.bf16.mxu0 0
    %2045 = vmatpush1.bf16.msra.mxu0 0
    %2046 = vmatprep.subr.bf16.mxu0 0
    %2047 = vmatpush1.bf16.msra.mxu0 0
    %2048 = vmatprep.subr.bf16.mxu0 0
    %2049 = vmatpush1.bf16.msra.mxu0 0
    %2050 = vmatprep.subr.bf16.mxu0 0
    %2051 = vmatpush1.bf16.msra.mxu0 0
    %2052 = vmatprep.subr.bf16.mxu0 0
    %2053 = vmatpush1.bf16.msra.mxu0 0
    %2054 = vmatprep.subr.bf16.mxu0 0
    %2055 = vmatpush1.bf16.msra.mxu0 0
    %2056 = vmatprep.subr.bf16.mxu0 0
    %2057 = vmatpush1.bf16.msra.mxu0 0
    %2058 = vmatprep.subr.bf16.mxu0 0
    %2059 = vmatpush1.bf16.msra.mxu0 0
    %2060 = vmatprep.subr.bf16.mxu0 0
    %2061 = vmatpush1.bf16.msra.mxu0 0
    %2062 = vmatprep.subr.bf16.mxu0 0
    %2063 = vmatpush1.bf16.msra.mxu0 0
    %2064 = vmatprep.subr.bf16.mxu0 0
    %2065 = vmatpush1.bf16.msra.mxu0 0
    %2066 = vmatprep.mubr.bf16.mxu0 0
    %2067 = vmatmul.mubr.bf16.gmra.mrb[0].mxu0 %v1745
    %v2068 = vpop.f32.mrb[0].mxu0
    %v2069 = vadd.f32 %v2028, %v2068
    %v2070 = vpop.f32.mrb[0].mxu0
    %v2071 = vadd.f32 %v2030, %v2070
    %v2072 = vpop.f32.mrb[0].mxu0
    %v2073 = vpop.f32.mrb[0].mxu0
    %2074 = vdwg.mxu0
    %2075 = vmatprep.subr.bf16.mxu0 0
    %2076 = vmatpush1.bf16.msra.mxu0 %v1257
    %2077 = vmatprep.subr.bf16.mxu0 0
    %2078 = vmatpush1.bf16.msra.mxu0 %v1262
    %2079 = vmatprep.subr.bf16.mxu0 0
    %2080 = vmatpush1.bf16.msra.mxu0 %v1267
    %2081 = vmatprep.subr.bf16.mxu0 0
    %2082 = vmatpush1.bf16.msra.mxu0 %v1272
    %2083 = vmatprep.subr.bf16.mxu0 0
    %2084 = vmatpush1.bf16.msra.mxu0 %v1277
    %2085 = vmatprep.subr.bf16.mxu0 0
    %2086 = vmatpush1.bf16.msra.mxu0 %v1282
    %2087 = vmatprep.subr.bf16.mxu0 0
    %2088 = vmatpush1.bf16.msra.mxu0 %v1287
    %2089 = vmatprep.subr.bf16.mxu0 0
    %2090 = vmatpush1.bf16.msra.mxu0 %v1292
    %2091 = vmatprep.subr.bf16.mxu0 0
    %2092 = vmatpush1.bf16.msra.mxu0 %v1297
    %2093 = vmatprep.subr.bf16.mxu0 0
    %2094 = vmatpush1.bf16.msra.mxu0 %v1302
    %2095 = vmatprep.subr.bf16.mxu0 0
    %2096 = vmatpush1.bf16.msra.mxu0 %v1307
    %2097 = vmatprep.subr.bf16.mxu0 0
    %2098 = vmatpush1.bf16.msra.mxu0 %v1312
    %2099 = vmatprep.subr.bf16.mxu0 0
    %2100 = vmatpush1.bf16.msra.mxu0 %v1317
    %2101 = vmatprep.subr.bf16.mxu0 0
    %2102 = vmatpush1.bf16.msra.mxu0 %v1322
    %2103 = vmatprep.subr.bf16.mxu0 0
    %2104 = vmatpush1.bf16.msra.mxu0 %v1327
    %2105 = vmatprep.subr.bf16.mxu0 0
    %2106 = vmatpush1.bf16.msra.mxu0 %v1332
    %2107 = vmatprep.mubr.bf16.mxu0 %v457
    %2108 = vmatmul.mubr.bf16.gmra.mrb[0].mxu0 %v456
    %v2109 = vpop.f32.mrb[0].mxu0
    %v2110 = vadd.f32 %v439, %v2109
    %v2111 = vpop.f32.mrb[0].mxu0
    %v2112 = vpop.f32.mrb[0].mxu0
    %v2113 = vpop.f32.mrb[0].mxu0
    %2114 = vdwg.mxu0
    %2115 = vmatprep.subr.bf16.mxu0 0
    %2116 = vmatpush1.bf16.msra.mxu0 %v1337
    %2117 = vmatprep.subr.bf16.mxu0 0
    %2118 = vmatpush1.bf16.msra.mxu0 %v1342
    %2119 = vmatprep.subr.bf16.mxu0 0
    %2120 = vmatpush1.bf16.msra.mxu0 %v1347
    %2121 = vmatprep.subr.bf16.mxu0 0
    %2122 = vmatpush1.bf16.msra.mxu0 %v1352
    %2123 = vmatprep.subr.bf16.mxu0 0
    %2124 = vmatpush1.bf16.msra.mxu0 %v1357
    %2125 = vmatprep.subr.bf16.mxu0 0
    %2126 = vmatpush1.bf16.msra.mxu0 %v1362
    %2127 = vmatprep.subr.bf16.mxu0 0
    %2128 = vmatpush1.bf16.msra.mxu0 %v1367
    %2129 = vmatprep.subr.bf16.mxu0 0
    %2130 = vmatpush1.bf16.msra.mxu0 %v1372
    %2131 = vmatprep.subr.bf16.mxu0 0
    %2132 = vmatpush1.bf16.msra.mxu0 %v1377
    %2133 = vmatprep.subr.bf16.mxu0 0
    %2134 = vmatpush1.bf16.msra.mxu0 %v1382
    %2135 = vmatprep.subr.bf16.mxu0 0
    %2136 = vmatpush1.bf16.msra.mxu0 %v1387
    %2137 = vmatprep.subr.bf16.mxu0 0
    %2138 = vmatpush1.bf16.msra.mxu0 %v1392
    %2139 = vmatprep.subr.bf16.mxu0 0
    %2140 = vmatpush1.bf16.msra.mxu0 %v1397
    %2141 = vmatprep.subr.bf16.mxu0 0
    %2142 = vmatpush1.bf16.msra.mxu0 %v1402
    %2143 = vmatprep.subr.bf16.mxu0 0
    %2144 = vmatpush1.bf16.msra.mxu0 %v1407
    %2145 = vmatprep.subr.bf16.mxu0 0
    %2146 = vmatpush1.bf16.msra.mxu0 %v1412
    %2147 = vmatprep.mubr.bf16.mxu0 %v459
    %2148 = vmatmul.mubr.bf16.gmra.mrb[0].mxu0 %v458
    %v2149 = vpop.f32.mrb[0].mxu0
    %v2150 = vadd.f32 %v2110, %v2149
    %v2151 = vpop.f32.mrb[0].mxu0
    %v2152 = vpop.f32.mrb[0].mxu0
    %v2153 = vpop.f32.mrb[0].mxu0
    %2154 = vdwg.mxu0
    %2155 = vmatprep.subr.bf16.mxu0 0
    %2156 = vmatpush1.bf16.msra.mxu0 %v1417
    %2157 = vmatprep.subr.bf16.mxu0 0
    %2158 = vmatpush1.bf16.msra.mxu0 %v1422
    %2159 = vmatprep.subr.bf16.mxu0 0
    %2160 = vmatpush1.bf16.msra.mxu0 %v1427
    %2161 = vmatprep.subr.bf16.mxu0 0
    %2162 = vmatpush1.bf16.msra.mxu0 %v1432
    %2163 = vmatprep.subr.bf16.mxu0 0
    %2164 = vmatpush1.bf16.msra.mxu0 %v1437
    %2165 = vmatprep.subr.bf16.mxu0 0
    %2166 = vmatpush1.bf16.msra.mxu0 %v1442
    %2167 = vmatprep.subr.bf16.mxu0 0
    %2168 = vmatpush1.bf16.msra.mxu0 %v1447
    %2169 = vmatprep.subr.bf16.mxu0 0
    %2170 = vmatpush1.bf16.msra.mxu0 %v1452
    %2171 = vmatprep.subr.bf16.mxu0 0
    %2172 = vmatpush1.bf16.msra.mxu0 %v1457
    %2173 = vmatprep.subr.bf16.mxu0 0
    %2174 = vmatpush1.bf16.msra.mxu0 %v1462
    %2175 = vmatprep.subr.bf16.mxu0 0
    %2176 = vmatpush1.bf16.msra.mxu0 %v1467
    %2177 = vmatprep.subr.bf16.mxu0 0
    %2178 = vmatpush1.bf16.msra.mxu0 %v1472
    %2179 = vmatprep.subr.bf16.mxu0 0
    %2180 = vmatpush1.bf16.msra.mxu0 %v1477
    %2181 = vmatprep.subr.bf16.mxu0 0
    %2182 = vmatpush1.bf16.msra.mxu0 %v1482
    %2183 = vmatprep.subr.bf16.mxu0 0
    %2184 = vmatpush1.bf16.msra.mxu0 %v1487
    %2185 = vmatprep.subr.bf16.mxu0 0
    %2186 = vmatpush1.bf16.msra.mxu0 %v1492
    %2187 = vmatprep.mubr.bf16.mxu0 %v461
    %2188 = vmatmul.mubr.bf16.gmra.mrb[0].mxu0 %v460
    %v2189 = vpop.f32.mrb[0].mxu0
    %v2190 = vadd.f32 %v2150, %v2189
    %v2191 = vpop.f32.mrb[0].mxu0
    %v2192 = vpop.f32.mrb[0].mxu0
    %v2193 = vpop.f32.mrb[0].mxu0
    %2194 = vdwg.mxu0
    %2195 = vmatprep.subr.bf16.mxu0 0
    %2196 = vmatpush1.bf16.msra.mxu0 %v1497
    %2197 = vmatprep.subr.bf16.mxu0 0
    %2198 = vmatpush1.bf16.msra.mxu0 0
    %2199 = vmatprep.subr.bf16.mxu0 0
    %2200 = vmatpush1.bf16.msra.mxu0 0
    %2201 = vmatprep.subr.bf16.mxu0 0
    %2202 = vmatpush1.bf16.msra.mxu0 0
    %2203 = vmatprep.subr.bf16.mxu0 0
    %2204 = vmatpush1.bf16.msra.mxu0 0
    %2205 = vmatprep.subr.bf16.mxu0 0
    %2206 = vmatpush1.bf16.msra.mxu0 0
    %2207 = vmatprep.subr.bf16.mxu0 0
    %2208 = vmatpush1.bf16.msra.mxu0 0
    %2209 = vmatprep.subr.bf16.mxu0 0
    %2210 = vmatpush1.bf16.msra.mxu0 0
    %2211 = vmatprep.subr.bf16.mxu0 0
    %2212 = vmatpush1.bf16.msra.mxu0 0
    %2213 = vmatprep.subr.bf16.mxu0 0
    %2214 = vmatpush1.bf16.msra.mxu0 0
    %2215 = vmatprep.subr.bf16.mxu0 0
    %2216 = vmatpush1.bf16.msra.mxu0 0
    %2217 = vmatprep.subr.bf16.mxu0 0
    %2218 = vmatpush1.bf16.msra.mxu0 0
    %2219 = vmatprep.subr.bf16.mxu0 0
    %2220 = vmatpush1.bf16.msra.mxu0 0
    %2221 = vmatprep.subr.bf16.mxu0 0
    %2222 = vmatpush1.bf16.msra.mxu0 0
    %2223 = vmatprep.subr.bf16.mxu0 0
    %2224 = vmatpush1.bf16.msra.mxu0 0
    %2225 = vmatprep.subr.bf16.mxu0 0
    %2226 = vmatpush1.bf16.msra.mxu0 0
    %2227 = vmatprep.mubr.bf16.mxu0 0
    %2228 = vmatmul.mubr.bf16.gmra.mrb[0].mxu0 %v1745
    %v2229 = vpop.f32.mrb[0].mxu0
    %v2230 = vadd.f32 %v2190, %v2229
    %v2231 = vpop.f32.mrb[0].mxu0
    %v2232 = vpop.f32.mrb[0].mxu0
    %v2233 = vpop.f32.mrb[0].mxu0
    %2234 = vdwg.mxu0
    %v2235 = vmax.f32 %v1905, 0.0
    %v2236 = vmax.f32 %v1907, 0.0
    %v2237 = vmax.f32 %v2069, 0.0
    %v2238 = vmax.f32 %v2071, 0.0
    %v2239 = vmax.f32 %v2230, 0.0
    %v2240 = vpack.c.bf16 %v2235, %v2235
    %v2241 = vpack.c.bf16 %v2236, %v2236
    %v2242 = vpack.c.bf16 %v2237, %v2237
    %v2243 = vpack.c.bf16 %v2238, %v2238
    %v2244 = vpack.c.bf16 %v2239, %v2239
    %v2245 = vld [vmem:[#allocation7] sm:$0xff]
    %v2246 = vld [vmem:[#allocation7 + $0x8] sm:$0xf]
    %v2247 = vld [vmem:[#allocation7 + $0xc] sm:$0xff]
    %v2248 = vld [vmem:[#allocation7 + $0x14] sm:$0xf]
    %v2249 = vld [vmem:[#allocation7 + $0x18] sm:$0xff]
    %v2250 = vld [vmem:[#allocation7 + $0x20] sm:$0xf]
    %v2251 = vld [vmem:[#allocation7 + $0x24] sm:$0xff]
    %v2252 = vld [vmem:[#allocation7 + $0x2c] sm:$0xf]
    %v2253 = vld [vmem:[#allocation7 + $0x30] sm:$0xff]
    %v2254 = vld [vmem:[#allocation7 + $0x38] sm:$0xf]
    %v2255 = vld [vmem:[#allocation7 + $0x3c] sm:$0xff]
    %v2256 = vld [vmem:[#allocation7 + $0x44] sm:$0xf]
    %v2257 = vld [vmem:[#allocation7 + $0x48] sm:$0xff]
    %v2258 = vld [vmem:[#allocation7 + $0x50] sm:$0xf]
    %v2259 = vld [vmem:[#allocation7 + $0x54] sm:$0xff]
    %v2260 = vld [vmem:[#allocation7 + $0x5c] sm:$0xf]
    %v2261 = vld [vmem:[#allocation7 + $0x60] sm:$0xff]
    %v2262 = vld [vmem:[#allocation7 + $0x68] sm:$0xf]
    %v2263 = vld [vmem:[#allocation7 + $0x6c] sm:$0xff]
    %v2264 = vld [vmem:[#allocation7 + $0x74] sm:$0xf]
    %v2265 = vld [vmem:[#allocation7 + $0x78] sm:$0xff]
    %v2266 = vld [vmem:[#allocation7 + $0x80] sm:$0xf]
    %v2267 = vld [vmem:[#allocation7 + $0x84] sm:$0xff]
    %v2268 = vld [vmem:[#allocation7 + $0x8c] sm:$0xf]
    %v2269 = vld [vmem:[#allocation7 + $0x90] sm:$0xff]
    %v2270 = vld [vmem:[#allocation7 + $0x98] sm:$0xf]
    %v2271 = vld [vmem:[#allocation7 + $0x9c] sm:$0xff]
    %v2272 = vld [vmem:[#allocation7 + $0xa4] sm:$0xf]
    %v2273 = vld [vmem:[#allocation7 + $0xa8] sm:$0xff]
    %v2274 = vld [vmem:[#allocation7 + $0xb0] sm:$0xf]
    %v2275 = vld [vmem:[#allocation7 + $0xb4] sm:$0xff]
    %v2276 = vld [vmem:[#allocation7 + $0xbc] sm:$0xf]
    %v2277 = vld [vmem:[#allocation7 + $0xc0] sm:$0xff]
    %v2278 = vld [vmem:[#allocation7 + $0xc8] sm:$0xf]
    %v2279 = vld [vmem:[#allocation7 + $0xcc] sm:$0xff]
    %v2280 = vld [vmem:[#allocation7 + $0xd4] sm:$0xf]
    %v2281 = vld [vmem:[#allocation7 + $0xd8] sm:$0xff]
    %v2282 = vld [vmem:[#allocation7 + $0xe0] sm:$0xf]
    %v2283 = vld [vmem:[#allocation7 + $0xe4] sm:$0xff]
    %v2284 = vld [vmem:[#allocation7 + $0xec] sm:$0xf]
    %v2285 = vld [vmem:[#allocation7 + $0xf0] sm:$0xff]
    %v2286 = vld [vmem:[#allocation7 + $0xf8] sm:$0xf]
    %v2287 = vld [vmem:[#allocation7 + $0xfc] sm:$0xff]
    %v2288 = vld [vmem:[#allocation7 + $0x104] sm:$0xf]
    %v2289 = vld [vmem:[#allocation7 + $0x108] sm:$0xff]
    %v2290 = vld [vmem:[#allocation7 + $0x110] sm:$0xf]
    %v2291 = vld [vmem:[#allocation7 + $0x114] sm:$0xff]
    %v2292 = vld [vmem:[#allocation7 + $0x11c] sm:$0xf]
    %v2293 = vld [vmem:[#allocation7 + $0x120] sm:$0xff]
    %v2294 = vld [vmem:[#allocation7 + $0x128] sm:$0xf]
    %v2295 = vld [vmem:[#allocation7 + $0x12c] sm:$0xff]
    %v2296 = vld [vmem:[#allocation7 + $0x134] sm:$0xf]
    %v2297 = vld [vmem:[#allocation7 + $0x138] sm:$0xff]
    %v2298 = vld [vmem:[#allocation7 + $0x140] sm:$0xf]
    %v2299 = vld [vmem:[#allocation7 + $0x144] sm:$0xff]
    %v2300 = vld [vmem:[#allocation7 + $0x14c] sm:$0xf]
    %v2301 = vld [vmem:[#allocation7 + $0x150] sm:$0xff]
    %v2302 = vld [vmem:[#allocation7 + $0x158] sm:$0xf]
    %v2303 = vld [vmem:[#allocation7 + $0x15c] sm:$0xff]
    %v2304 = vld [vmem:[#allocation7 + $0x164] sm:$0xf]
    %v2305 = vld [vmem:[#allocation7 + $0x168] sm:$0xff]
    %v2306 = vld [vmem:[#allocation7 + $0x170] sm:$0xf]
    %v2307 = vld [vmem:[#allocation7 + $0x174] sm:$0xff]
    %v2308 = vld [vmem:[#allocation7 + $0x17c] sm:$0xf]
    %v2309 = vld [vmem:[#allocation7 + $0x180] sm:$0xff]
    %v2310 = vld [vmem:[#allocation7 + $0x188] sm:$0xf]
    %v2311 = vld [vmem:[#allocation7 + $0x18c] sm:$0xff]
    %v2312 = vld [vmem:[#allocation7 + $0x194] sm:$0xf]
    %v2313 = vld [vmem:[#allocation7 + $0x198] sm:$0xff]
    %v2314 = vld [vmem:[#allocation7 + $0x1a0] sm:$0xf]
    %v2315 = vld [vmem:[#allocation7 + $0x1a4] sm:$0xff]
    %v2316 = vld [vmem:[#allocation7 + $0x1ac] sm:$0xf]
    %v2317 = vld [vmem:[#allocation7 + $0x1b0] sm:$0xff]
    %v2318 = vld [vmem:[#allocation7 + $0x1b8] sm:$0xf]
    %v2319 = vld [vmem:[#allocation7 + $0x1bc] sm:$0xff]
    %v2320 = vld [vmem:[#allocation7 + $0x1c4] sm:$0xf]
    %v2321 = vld [vmem:[#allocation7 + $0x1c8] sm:$0xff]
    %v2322 = vld [vmem:[#allocation7 + $0x1d0] sm:$0xf]
    %v2323 = vld [vmem:[#allocation7 + $0x1d4] sm:$0xff]
    %v2324 = vld [vmem:[#allocation7 + $0x1dc] sm:$0xf]
    %v2325 = vld [vmem:[#allocation7 + $0x1e0] sm:$0xff]
    %v2326 = vld [vmem:[#allocation7 + $0x1e8] sm:$0xf]
    %v2327 = vld [vmem:[#allocation7 + $0x1ec] sm:$0xff]
    %v2328 = vld [vmem:[#allocation7 + $0x1f4] sm:$0xf]
    %v2329 = vld [vmem:[#allocation7 + $0x1f8] sm:$0xff]
    %v2330 = vld [vmem:[#allocation7 + $0x200] sm:$0xf]
    %v2331 = vld [vmem:[#allocation7 + $0x204] sm:$0xff]
    %v2332 = vld [vmem:[#allocation7 + $0x20c] sm:$0xf]
    %v2333 = vld [vmem:[#allocation7 + $0x210] sm:$0xff]
    %v2334 = vld [vmem:[#allocation7 + $0x218] sm:$0xf]
    %v2335 = vld [vmem:[#allocation7 + $0x21c] sm:$0xff]
    %v2336 = vld [vmem:[#allocation7 + $0x224] sm:$0xf]
    %v2337 = vld [vmem:[#allocation7 + $0x228] sm:$0xff]
    %v2338 = vld [vmem:[#allocation7 + $0x230] sm:$0xf]
    %v2339 = vld [vmem:[#allocation7 + $0x234] sm:$0xff]
    %v2340 = vld [vmem:[#allocation7 + $0x23c] sm:$0xf]
    %v2341 = vld [vmem:[#allocation7 + $0x240] sm:$0xff]
    %v2342 = vld [vmem:[#allocation7 + $0x248] sm:$0xf]
    %v2343 = vld [vmem:[#allocation7 + $0x24c] sm:$0xff]
    %v2344 = vld [vmem:[#allocation7 + $0x254] sm:$0xf]
    %v2345 = vld [vmem:[#allocation7 + $0x258] sm:$0xff]
    %v2346 = vld [vmem:[#allocation7 + $0x260] sm:$0xf]
    %v2347 = vld [vmem:[#allocation7 + $0x264] sm:$0xff]
    %v2348 = vld [vmem:[#allocation7 + $0x26c] sm:$0xf]
    %v2349 = vld [vmem:[#allocation7 + $0x270] sm:$0xff]
    %v2350 = vld [vmem:[#allocation7 + $0x278] sm:$0xf]
    %v2351 = vld [vmem:[#allocation7 + $0x27c] sm:$0xff]
    %v2352 = vld [vmem:[#allocation7 + $0x284] sm:$0xf]
    %v2353 = vld [vmem:[#allocation7 + $0x288] sm:$0xff]
    %v2354 = vld [vmem:[#allocation7 + $0x290] sm:$0xf]
    %v2355 = vld [vmem:[#allocation7 + $0x294] sm:$0xff]
    %v2356 = vld [vmem:[#allocation7 + $0x29c] sm:$0xf]
    %v2357 = vld [vmem:[#allocation7 + $0x2a0] sm:$0xff]
    %v2358 = vld [vmem:[#allocation7 + $0x2a8] sm:$0xf]
    %v2359 = vld [vmem:[#allocation7 + $0x2ac] sm:$0xff]
    %v2360 = vld [vmem:[#allocation7 + $0x2b4] sm:$0xf]
    %v2361 = vld [vmem:[#allocation7 + $0x2b8] sm:$0xff]
    %v2362 = vld [vmem:[#allocation7 + $0x2c0] sm:$0xf]
    %v2363 = vld [vmem:[#allocation7 + $0x2c4] sm:$0xff]
    %v2364 = vld [vmem:[#allocation7 + $0x2cc] sm:$0xf]
    %v2365 = vld [vmem:[#allocation7 + $0x2d0] sm:$0xff]
    %v2366 = vld [vmem:[#allocation7 + $0x2d8] sm:$0xf]
    %v2367 = vld [vmem:[#allocation7 + $0x2dc] sm:$0xff]
    %v2368 = vld [vmem:[#allocation7 + $0x2e4] sm:$0xf]
    %v2369 = vld [vmem:[#allocation7 + $0x2e8] sm:$0xff]
    %v2370 = vld [vmem:[#allocation7 + $0x2f0] sm:$0xf]
    %v2371 = vld [vmem:[#allocation7 + $0x2f4] sm:$0xff]
    %v2372 = vld [vmem:[#allocation7 + $0x2fc] sm:$0xf]
    %v2373 = vld [vmem:[#allocation7 + $0x300] sm:$0xff]
    %v2374 = vld [vmem:[#allocation7 + $0x308] sm:$0xf]
    %v2375 = vld [vmem:[#allocation7 + $0x30c] sm:$0xff]
    %v2376 = vld [vmem:[#allocation7 + $0x314] sm:$0xf]
    %v2377 = vld [vmem:[#allocation7 + $0x318] sm:$0xff]
    %v2378 = vld [vmem:[#allocation7 + $0x320] sm:$0xf]
    %v2379 = vld [vmem:[#allocation7 + $0x324] sm:$0xff]
    %v2380 = vld [vmem:[#allocation7 + $0x32c] sm:$0xf]
    %v2381 = vld [vmem:[#allocation7 + $0x330] sm:$0xff]
    %v2382 = vld [vmem:[#allocation7 + $0x338] sm:$0xf]
    %v2383 = vld [vmem:[#allocation7 + $0x33c] sm:$0xff]
    %v2384 = vld [vmem:[#allocation7 + $0x344] sm:$0xf]
    %v2385 = vld [vmem:[#allocation7 + $0x348] sm:$0xff]
    %v2386 = vld [vmem:[#allocation7 + $0x350] sm:$0xf]
    %v2387 = vld [vmem:[#allocation7 + $0x354] sm:$0xff]
    %v2388 = vld [vmem:[#allocation7 + $0x35c] sm:$0xf]
    %v2389 = vld [vmem:[#allocation7 + $0x360] sm:$0xff]
    %v2390 = vld [vmem:[#allocation7 + $0x368] sm:$0xf]
    %v2391 = vld [vmem:[#allocation7 + $0x36c] sm:$0xff]
    %v2392 = vld [vmem:[#allocation7 + $0x374] sm:$0xf]
    %v2393 = vld [vmem:[#allocation7 + $0x378] sm:$0xff]
    %v2394 = vld [vmem:[#allocation7 + $0x380] sm:$0xf]
    %v2395 = vld [vmem:[#allocation7 + $0x384] sm:$0xff]
    %v2396 = vld [vmem:[#allocation7 + $0x38c] sm:$0xf]
    %v2397 = vld [vmem:[#allocation7 + $0x390] sm:$0xff]
    %v2398 = vld [vmem:[#allocation7 + $0x398] sm:$0xf]
    %v2399 = vld [vmem:[#allocation7 + $0x39c] sm:$0xff]
    %v2400 = vld [vmem:[#allocation7 + $0x3a4] sm:$0xf]
    %v2401 = vld [vmem:[#allocation7 + $0x3a8] sm:$0xff]
    %v2402 = vld [vmem:[#allocation7 + $0x3b0] sm:$0xf]
    %v2403 = vld [vmem:[#allocation7 + $0x3b4] sm:$0xff]
    %v2404 = vld [vmem:[#allocation7 + $0x3bc] sm:$0xf]
    %v2405 = vld [vmem:[%s4] sm:$0x7]
    %v2407 = vlaneseq
    %v2408 = vshrl.u32 %v2407, 7
    %v2409 = vsub.s32 0, %v2408
    %v2410 = vrot.slane %v2405, %v2409
    %v2411 = vlaneseq
    %v2412 = vshrl.u32 %v2411, 7
    %v2413 = vsub.s32 1, %v2412
    %v2414 = vrot.slane %v2405, %v2413
    %v2415 = vlaneseq
    %v2416 = vshrl.u32 %v2415, 7
    %v2417 = vsub.s32 2, %v2416
    %v2418 = vrot.slane %v2405, %v2417
    %v2582 = vunpack.c.l.b16 %v2245
    %v2583 = vunpack.c.h.b16 %v2245
    %v2584 = vunpack.c.l.b16 %v2246
    %v2585 = vunpack.c.l.b16 %v2247
    %v2586 = vunpack.c.h.b16 %v2247
    %v2587 = vunpack.c.l.b16 %v2248
    %v2588 = vunpack.c.l.b16 %v2249
    %v2589 = vunpack.c.h.b16 %v2249
    %v2590 = vunpack.c.l.b16 %v2250
    %v2591 = vunpack.c.l.b16 %v2251
    %v2592 = vunpack.c.h.b16 %v2251
    %v2593 = vunpack.c.l.b16 %v2252
    %v2594 = vunpack.c.l.b16 %v2253
    %v2595 = vunpack.c.h.b16 %v2253
    %v2596 = vunpack.c.l.b16 %v2254
    %v2597 = vunpack.c.l.b16 %v2255
    %v2598 = vunpack.c.h.b16 %v2255
    %v2599 = vunpack.c.l.b16 %v2256
    %v2600 = vunpack.c.l.b16 %v2257
    %v2601 = vunpack.c.h.b16 %v2257
    %v2602 = vunpack.c.l.b16 %v2258
    %v2603 = vunpack.c.l.b16 %v2259
    %v2604 = vunpack.c.h.b16 %v2259
    %v2605 = vunpack.c.l.b16 %v2260
    %v2606 = vunpack.c.l.b16 %v2261
    %v2607 = vunpack.c.h.b16 %v2261
    %v2608 = vunpack.c.l.b16 %v2262
    %v2609 = vunpack.c.l.b16 %v2263
    %v2610 = vunpack.c.h.b16 %v2263
    %v2611 = vunpack.c.l.b16 %v2264
    %v2612 = vunpack.c.l.b16 %v2265
    %v2613 = vunpack.c.h.b16 %v2265
    %v2614 = vunpack.c.l.b16 %v2266
    %v2615 = vunpack.c.l.b16 %v2267
    %v2616 = vunpack.c.h.b16 %v2267
    %v2617 = vunpack.c.l.b16 %v2268
    %v2618 = vunpack.c.l.b16 %v2269
    %v2619 = vunpack.c.h.b16 %v2269
    %v2620 = vunpack.c.l.b16 %v2270
    %v2621 = vunpack.c.l.b16 %v2271
    %v2622 = vunpack.c.h.b16 %v2271
    %v2623 = vunpack.c.l.b16 %v2272
    %v2624 = vunpack.c.l.b16 %v2273
    %v2625 = vunpack.c.h.b16 %v2273
    %v2626 = vunpack.c.l.b16 %v2274
    %v2627 = vunpack.c.l.b16 %v2275
    %v2628 = vunpack.c.h.b16 %v2275
    %v2629 = vunpack.c.l.b16 %v2276
    %v2630 = vunpack.c.l.b16 %v2277
    %v2631 = vunpack.c.h.b16 %v2277
    %v2632 = vunpack.c.l.b16 %v2278
    %v2633 = vunpack.c.l.b16 %v2279
    %v2634 = vunpack.c.h.b16 %v2279
    %v2635 = vunpack.c.l.b16 %v2280
    %v2636 = vunpack.c.l.b16 %v2281
    %v2637 = vunpack.c.h.b16 %v2281
    %v2638 = vunpack.c.l.b16 %v2282
    %v2639 = vunpack.c.l.b16 %v2283
    %v2640 = vunpack.c.h.b16 %v2283
    %v2641 = vunpack.c.l.b16 %v2284
    %v2642 = vunpack.c.l.b16 %v2285
    %v2643 = vunpack.c.h.b16 %v2285
    %v2644 = vunpack.c.l.b16 %v2286
    %v2645 = vunpack.c.l.b16 %v2287
    %v2646 = vunpack.c.h.b16 %v2287
    %v2647 = vunpack.c.l.b16 %v2288
    %v2648 = vunpack.c.l.b16 %v2289
    %v2649 = vunpack.c.h.b16 %v2289
    %v2650 = vunpack.c.l.b16 %v2290
    %v2651 = vunpack.c.l.b16 %v2291
    %v2652 = vunpack.c.h.b16 %v2291
    %v2653 = vunpack.c.l.b16 %v2292
    %v2654 = vunpack.c.l.b16 %v2293
    %v2655 = vunpack.c.h.b16 %v2293
    %v2656 = vunpack.c.l.b16 %v2294
    %v2657 = vunpack.c.l.b16 %v2295
    %v2658 = vunpack.c.h.b16 %v2295
    %v2659 = vunpack.c.l.b16 %v2296
    %v2660 = vunpack.c.l.b16 %v2297
    %v2661 = vunpack.c.h.b16 %v2297
    %v2662 = vunpack.c.l.b16 %v2298
    %v2663 = vunpack.c.l.b16 %v2299
    %v2664 = vunpack.c.h.b16 %v2299
    %v2665 = vunpack.c.l.b16 %v2300
    %v2666 = vunpack.c.l.b16 %v2301
    %v2667 = vunpack.c.h.b16 %v2301
    %v2668 = vunpack.c.l.b16 %v2302
    %v2669 = vunpack.c.l.b16 %v2303
    %v2670 = vunpack.c.h.b16 %v2303
    %v2671 = vunpack.c.l.b16 %v2304
    %v2672 = vunpack.c.l.b16 %v2305
    %v2673 = vunpack.c.h.b16 %v2305
    %v2674 = vunpack.c.l.b16 %v2306
    %v2675 = vunpack.c.l.b16 %v2307
    %v2676 = vunpack.c.h.b16 %v2307
    %v2677 = vunpack.c.l.b16 %v2308
    %v2678 = vunpack.c.l.b16 %v2309
    %v2679 = vunpack.c.h.b16 %v2309
    %v2680 = vunpack.c.l.b16 %v2310
    %v2681 = vunpack.c.l.b16 %v2311
    %v2682 = vunpack.c.h.b16 %v2311
    %v2683 = vunpack.c.l.b16 %v2312
    %v2684 = vunpack.c.l.b16 %v2313
    %v2685 = vunpack.c.h.b16 %v2313
    %v2686 = vunpack.c.l.b16 %v2314
    %v2687 = vunpack.c.l.b16 %v2315
    %v2688 = vunpack.c.h.b16 %v2315
    %v2689 = vunpack.c.l.b16 %v2316
    %v2690 = vunpack.c.l.b16 %v2317
    %v2691 = vunpack.c.h.b16 %v2317
    %v2692 = vunpack.c.l.b16 %v2318
    %v2693 = vunpack.c.l.b16 %v2319
    %v2694 = vunpack.c.h.b16 %v2319
    %v2695 = vunpack.c.l.b16 %v2320
    %v2696 = vunpack.c.l.b16 %v2321
    %v2697 = vunpack.c.h.b16 %v2321
    %v2698 = vunpack.c.l.b16 %v2322
    %v2699 = vunpack.c.l.b16 %v2323
    %v2700 = vunpack.c.h.b16 %v2323
    %v2701 = vunpack.c.l.b16 %v2324
    %v2702 = vunpack.c.l.b16 %v2325
    %v2703 = vunpack.c.h.b16 %v2325
    %v2704 = vunpack.c.l.b16 %v2326
    %v2705 = vunpack.c.l.b16 %v2327
    %v2706 = vunpack.c.h.b16 %v2327
    %v2707 = vunpack.c.l.b16 %v2328
    %v2708 = vunpack.c.l.b16 %v2329
    %v2709 = vunpack.c.h.b16 %v2329
    %v2710 = vunpack.c.l.b16 %v2330
    %v2711 = vunpack.c.l.b16 %v2331
    %v2712 = vunpack.c.h.b16 %v2331
    %v2713 = vunpack.c.l.b16 %v2332
    %v2714 = vunpack.c.l.b16 %v2333
    %v2715 = vunpack.c.h.b16 %v2333
    %v2716 = vunpack.c.l.b16 %v2334
    %v2717 = vunpack.c.l.b16 %v2335
    %v2718 = vunpack.c.h.b16 %v2335
    %v2719 = vunpack.c.l.b16 %v2336
    %v2720 = vunpack.c.l.b16 %v2337
    %v2721 = vunpack.c.h.b16 %v2337
    %v2722 = vunpack.c.l.b16 %v2338
    %v2723 = vunpack.c.l.b16 %v2339
    %v2724 = vunpack.c.h.b16 %v2339
    %v2725 = vunpack.c.l.b16 %v2340
    %v2726 = vunpack.c.l.b16 %v2341
    %v2727 = vunpack.c.h.b16 %v2341
    %v2728 = vunpack.c.l.b16 %v2342
    %v2729 = vunpack.c.l.b16 %v2343
    %v2730 = vunpack.c.h.b16 %v2343
    %v2731 = vunpack.c.l.b16 %v2344
    %v2732 = vunpack.c.l.b16 %v2345
    %v2733 = vunpack.c.h.b16 %v2345
    %v2734 = vunpack.c.l.b16 %v2346
    %v2735 = vunpack.c.l.b16 %v2347
    %v2736 = vunpack.c.h.b16 %v2347
    %v2737 = vunpack.c.l.b16 %v2348
    %v2738 = vunpack.c.l.b16 %v2349
    %v2739 = vunpack.c.h.b16 %v2349
    %v2740 = vunpack.c.l.b16 %v2350
    %v2741 = vunpack.c.l.b16 %v2351
    %v2742 = vunpack.c.h.b16 %v2351
    %v2743 = vunpack.c.l.b16 %v2352
    %v2744 = vunpack.c.l.b16 %v2353
    %v2745 = vunpack.c.h.b16 %v2353
    %v2746 = vunpack.c.l.b16 %v2354
    %v2747 = vunpack.c.l.b16 %v2355
    %v2748 = vunpack.c.h.b16 %v2355
    %v2749 = vunpack.c.l.b16 %v2356
    %v2750 = vunpack.c.l.b16 %v2357
    %v2751 = vunpack.c.h.b16 %v2357
    %v2752 = vunpack.c.l.b16 %v2358
    %v2753 = vunpack.c.l.b16 %v2359
    %v2754 = vunpack.c.h.b16 %v2359
    %v2755 = vunpack.c.l.b16 %v2360
    %v2756 = vunpack.c.l.b16 %v2361
    %v2757 = vunpack.c.h.b16 %v2361
    %v2758 = vunpack.c.l.b16 %v2362
    %v2759 = vunpack.c.l.b16 %v2363
    %v2760 = vunpack.c.h.b16 %v2363
    %v2761 = vunpack.c.l.b16 %v2364
    %v2762 = vunpack.c.l.b16 %v2365
    %v2763 = vunpack.c.h.b16 %v2365
    %v2764 = vunpack.c.l.b16 %v2366
    %v2765 = vunpack.c.l.b16 %v2367
    %v2766 = vunpack.c.h.b16 %v2367
    %v2767 = vunpack.c.l.b16 %v2368
    %v2768 = vunpack.c.l.b16 %v2369
    %v2769 = vunpack.c.h.b16 %v2369
    %v2770 = vunpack.c.l.b16 %v2370
    %v2771 = vunpack.c.l.b16 %v2371
    %v2772 = vunpack.c.h.b16 %v2371
    %v2773 = vunpack.c.l.b16 %v2372
    %v2774 = vunpack.c.l.b16 %v2373
    %v2775 = vunpack.c.h.b16 %v2373
    %v2776 = vunpack.c.l.b16 %v2374
    %v2777 = vunpack.c.l.b16 %v2375
    %v2778 = vunpack.c.h.b16 %v2375
    %v2779 = vunpack.c.l.b16 %v2376
    %v2780 = vunpack.c.l.b16 %v2377
    %v2781 = vunpack.c.h.b16 %v2377
    %v2782 = vunpack.c.l.b16 %v2378
    %v2783 = vunpack.c.l.b16 %v2379
    %v2784 = vunpack.c.h.b16 %v2379
    %v2785 = vunpack.c.l.b16 %v2380
    %v2786 = vunpack.c.l.b16 %v2381
    %v2787 = vunpack.c.h.b16 %v2381
    %v2788 = vunpack.c.l.b16 %v2382
    %v2789 = vunpack.c.l.b16 %v2383
    %v2790 = vunpack.c.h.b16 %v2383
    %v2791 = vunpack.c.l.b16 %v2384
    %v2792 = vunpack.c.l.b16 %v2385
    %v2793 = vunpack.c.h.b16 %v2385
    %v2794 = vunpack.c.l.b16 %v2386
    %v2795 = vunpack.c.l.b16 %v2387
    %v2796 = vunpack.c.h.b16 %v2387
    %v2797 = vunpack.c.l.b16 %v2388
    %v2798 = vunpack.c.l.b16 %v2389
    %v2799 = vunpack.c.h.b16 %v2389
    %v2800 = vunpack.c.l.b16 %v2390
    %v2801 = vunpack.c.l.b16 %v2391
    %v2802 = vunpack.c.h.b16 %v2391
    %v2803 = vunpack.c.l.b16 %v2392
    %v2804 = vunpack.c.l.b16 %v2393
    %v2805 = vunpack.c.h.b16 %v2393
    %v2806 = vunpack.c.l.b16 %v2394
    %v2807 = vunpack.c.l.b16 %v2395
    %v2808 = vunpack.c.h.b16 %v2395
    %v2809 = vunpack.c.l.b16 %v2396
    %v2810 = vunpack.c.l.b16 %v2397
    %v2811 = vunpack.c.h.b16 %v2397
    %v2812 = vunpack.c.l.b16 %v2398
    %v2813 = vunpack.c.l.b16 %v2399
    %v2814 = vunpack.c.h.b16 %v2399
    %v2815 = vunpack.c.l.b16 %v2400
    %v2816 = vunpack.c.l.b16 %v2401
    %v2817 = vunpack.c.h.b16 %v2401
    %v2818 = vunpack.c.l.b16 %v2402
    %v2819 = vunpack.c.l.b16 %v2403
    %v2820 = vunpack.c.h.b16 %v2403
    %v2821 = vunpack.c.l.b16 %v2404
    %v2822 = vpack.c.b16 %v2585, %v2582
    %v2823 = vpack.c.b16 %v2586, %v2583
    %v2824 = vpack.c.b16 %v2587, %v2584
    %v2825 = vpack.c.b16 %v2591, %v2588
    %v2826 = vpack.c.b16 %v2592, %v2589
    %v2827 = vpack.c.b16 %v2593, %v2590
    %v2828 = vpack.c.b16 %v2597, %v2594
    %v2829 = vpack.c.b16 %v2598, %v2595
    %v2830 = vpack.c.b16 %v2599, %v2596
    %v2831 = vpack.c.b16 %v2603, %v2600
    %v2832 = vpack.c.b16 %v2604, %v2601
    %v2833 = vpack.c.b16 %v2605, %v2602
    %v2834 = vpack.c.b16 %v2609, %v2606
    %v2835 = vpack.c.b16 %v2610, %v2607
    %v2836 = vpack.c.b16 %v2611, %v2608
    %v2837 = vpack.c.b16 %v2615, %v2612
    %v2838 = vpack.c.b16 %v2616, %v2613
    %v2839 = vpack.c.b16 %v2617, %v2614
    %v2840 = vpack.c.b16 %v2621, %v2618
    %v2841 = vpack.c.b16 %v2622, %v2619
    %v2842 = vpack.c.b16 %v2623, %v2620
    %v2843 = vpack.c.b16 %v2627, %v2624
    %v2844 = vpack.c.b16 %v2628, %v2625
    %v2845 = vpack.c.b16 %v2629, %v2626
    %v2846 = vpack.c.b16 %v2633, %v2630
    %v2847 = vpack.c.b16 %v2634, %v2631
    %v2848 = vpack.c.b16 %v2635, %v2632
    %v2849 = vpack.c.b16 %v2639, %v2636
    %v2850 = vpack.c.b16 %v2640, %v2637
    %v2851 = vpack.c.b16 %v2641, %v2638
    %v2852 = vpack.c.b16 %v2645, %v2642
    %v2853 = vpack.c.b16 %v2646, %v2643
    %v2854 = vpack.c.b16 %v2647, %v2644
    %v2855 = vpack.c.b16 %v2651, %v2648
    %v2856 = vpack.c.b16 %v2652, %v2649
    %v2857 = vpack.c.b16 %v2653, %v2650
    %v2858 = vpack.c.b16 %v2657, %v2654
    %v2859 = vpack.c.b16 %v2658, %v2655
    %v2860 = vpack.c.b16 %v2659, %v2656
    %v2861 = vpack.c.b16 %v2663, %v2660
    %v2862 = vpack.c.b16 %v2664, %v2661
    %v2863 = vpack.c.b16 %v2665, %v2662
    %v2864 = vpack.c.b16 %v2669, %v2666
    %v2865 = vpack.c.b16 %v2670, %v2667
    %v2866 = vpack.c.b16 %v2671, %v2668
    %v2867 = vpack.c.b16 %v2675, %v2672
    %v2868 = vpack.c.b16 %v2676, %v2673
    %v2869 = vpack.c.b16 %v2677, %v2674
    %v2870 = vpack.c.b16 %v2681, %v2678
    %v2871 = vpack.c.b16 %v2682, %v2679
    %v2872 = vpack.c.b16 %v2683, %v2680
    %v2873 = vpack.c.b16 %v2687, %v2684
    %v2874 = vpack.c.b16 %v2688, %v2685
    %v2875 = vpack.c.b16 %v2689, %v2686
    %v2876 = vpack.c.b16 %v2693, %v2690
    %v2877 = vpack.c.b16 %v2694, %v2691
    %v2878 = vpack.c.b16 %v2695, %v2692
    %v2879 = vpack.c.b16 %v2699, %v2696
    %v2880 = vpack.c.b16 %v2700, %v2697
    %v2881 = vpack.c.b16 %v2701, %v2698
    %v2882 = vpack.c.b16 %v2705, %v2702
    %v2883 = vpack.c.b16 %v2706, %v2703
    %v2884 = vpack.c.b16 %v2707, %v2704
    %v2885 = vpack.c.b16 %v2711, %v2708
    %v2886 = vpack.c.b16 %v2712, %v2709
    %v2887 = vpack.c.b16 %v2713, %v2710
    %v2888 = vpack.c.b16 %v2717, %v2714
    %v2889 = vpack.c.b16 %v2718, %v2715
    %v2890 = vpack.c.b16 %v2719, %v2716
    %v2891 = vpack.c.b16 %v2723, %v2720
    %v2892 = vpack.c.b16 %v2724, %v2721
    %v2893 = vpack.c.b16 %v2725, %v2722
    %v2894 = vpack.c.b16 %v2729, %v2726
    %v2895 = vpack.c.b16 %v2730, %v2727
    %v2896 = vpack.c.b16 %v2731, %v2728
    %v2897 = vpack.c.b16 %v2735, %v2732
    %v2898 = vpack.c.b16 %v2736, %v2733
    %v2899 = vpack.c.b16 %v2737, %v2734
    %v2900 = vpack.c.b16 %v2741, %v2738
    %v2901 = vpack.c.b16 %v2742, %v2739
    %v2902 = vpack.c.b16 %v2743, %v2740
    %v2903 = vpack.c.b16 %v2747, %v2744
    %v2904 = vpack.c.b16 %v2748, %v2745
    %v2905 = vpack.c.b16 %v2749, %v2746
    %v2906 = vpack.c.b16 %v2753, %v2750
    %v2907 = vpack.c.b16 %v2754, %v2751
    %v2908 = vpack.c.b16 %v2755, %v2752
    %v2909 = vpack.c.b16 %v2759, %v2756
    %v2910 = vpack.c.b16 %v2760, %v2757
    %v2911 = vpack.c.b16 %v2761, %v2758
    %v2912 = vpack.c.b16 %v2765, %v2762
    %v2913 = vpack.c.b16 %v2766, %v2763
    %v2914 = vpack.c.b16 %v2767, %v2764
    %v2915 = vpack.c.b16 %v2771, %v2768
    %v2916 = vpack.c.b16 %v2772, %v2769
    %v2917 = vpack.c.b16 %v2773, %v2770
    %v2918 = vpack.c.b16 %v2777, %v2774
    %v2919 = vpack.c.b16 %v2778, %v2775
    %v2920 = vpack.c.b16 %v2779, %v2776
    %v2921 = vpack.c.b16 %v2783, %v2780
    %v2922 = vpack.c.b16 %v2784, %v2781
    %v2923 = vpack.c.b16 %v2785, %v2782
    %v2924 = vpack.c.b16 %v2789, %v2786
    %v2925 = vpack.c.b16 %v2790, %v2787
    %v2926 = vpack.c.b16 %v2791, %v2788
    %v2927 = vpack.c.b16 %v2795, %v2792
    %v2928 = vpack.c.b16 %v2796, %v2793
    %v2929 = vpack.c.b16 %v2797, %v2794
    %v2930 = vpack.c.b16 %v2801, %v2798
    %v2931 = vpack.c.b16 %v2802, %v2799
    %v2932 = vpack.c.b16 %v2803, %v2800
    %v2933 = vpack.c.b16 %v2807, %v2804
    %v2934 = vpack.c.b16 %v2808, %v2805
    %v2935 = vpack.c.b16 %v2809, %v2806
    %v2936 = vpack.c.b16 %v2813, %v2810
    %v2937 = vpack.c.b16 %v2814, %v2811
    %v2938 = vpack.c.b16 %v2815, %v2812
    %v2939 = vpack.c.b16 %v2819, %v2816
    %v2940 = vpack.c.b16 %v2820, %v2817
    %v2941 = vpack.c.b16 %v2821, %v2818
    %3062 = vmatprep.subr.bf16.mxu0 %v2823
    %3063 = vmatpush1.bf16.msra.mxu0 %v2822
    %3064 = vmatprep.subr.bf16.mxu0 %v2826
    %3065 = vmatpush1.bf16.msra.mxu0 %v2825
    %3066 = vmatprep.subr.bf16.mxu0 %v2829
    %3067 = vmatpush1.bf16.msra.mxu0 %v2828
    %3068 = vmatprep.subr.bf16.mxu0 %v2832
    %3069 = vmatpush1.bf16.msra.mxu0 %v2831
    %3070 = vmatprep.subr.bf16.mxu0 %v2835
    %3071 = vmatpush1.bf16.msra.mxu0 %v2834
    %3072 = vmatprep.subr.bf16.mxu0 %v2838
    %3073 = vmatpush1.bf16.msra.mxu0 %v2837
    %3074 = vmatprep.subr.bf16.mxu0 %v2841
    %3075 = vmatpush1.bf16.msra.mxu0 %v2840
    %3076 = vmatprep.subr.bf16.mxu0 %v2844
    %3077 = vmatpush1.bf16.msra.mxu0 %v2843
    %3078 = vmatprep.subr.bf16.mxu0 %v2847
    %3079 = vmatpush1.bf16.msra.mxu0 %v2846
    %3080 = vmatprep.subr.bf16.mxu0 %v2850
    %3081 = vmatpush1.bf16.msra.mxu0 %v2849
    %3082 = vmatprep.subr.bf16.mxu0 %v2853
    %3083 = vmatpush1.bf16.msra.mxu0 %v2852
    %3084 = vmatprep.subr.bf16.mxu0 %v2856
    %3085 = vmatpush1.bf16.msra.mxu0 %v2855
    %3086 = vmatprep.subr.bf16.mxu0 %v2859
    %3087 = vmatpush1.bf16.msra.mxu0 %v2858
    %3088 = vmatprep.subr.bf16.mxu0 %v2862
    %3089 = vmatpush1.bf16.msra.mxu0 %v2861
    %3090 = vmatprep.subr.bf16.mxu0 %v2865
    %3091 = vmatpush1.bf16.msra.mxu0 %v2864
    %3092 = vmatprep.subr.bf16.mxu0 %v2868
    %3093 = vmatpush1.bf16.msra.mxu0 %v2867
    %3094 = vmatprep.mubr.bf16.mxu0 %v2241
    %3095 = vmatmul.mubr.bf16.gmra.mrb[0].mxu0 %v2240
    %v3096 = vpop.f32.mrb[0].mxu0
    %v3097 = vadd.f32 %v2410, %v3096
    %v3098 = vpop.f32.mrb[0].mxu0
    %v3099 = vadd.f32 %v2414, %v3098
    %v3100 = vpop.f32.mrb[0].mxu0
    %v3101 = vpop.f32.mrb[0].mxu0
    %3102 = vdwg.mxu0
    %3103 = vmatprep.subr.bf16.mxu0 %v2871
    %3104 = vmatpush1.bf16.msra.mxu0 %v2870
    %3105 = vmatprep.subr.bf16.mxu0 %v2874
    %3106 = vmatpush1.bf16.msra.mxu0 %v2873
    %3107 = vmatprep.subr.bf16.mxu0 %v2877
    %3108 = vmatpush1.bf16.msra.mxu0 %v2876
    %3109 = vmatprep.subr.bf16.mxu0 %v2880
    %3110 = vmatpush1.bf16.msra.mxu0 %v2879
    %3111 = vmatprep.subr.bf16.mxu0 %v2883
    %3112 = vmatpush1.bf16.msra.mxu0 %v2882
    %3113 = vmatprep.subr.bf16.mxu0 %v2886
    %3114 = vmatpush1.bf16.msra.mxu0 %v2885
    %3115 = vmatprep.subr.bf16.mxu0 %v2889
    %3116 = vmatpush1.bf16.msra.mxu0 %v2888
    %3117 = vmatprep.subr.bf16.mxu0 %v2892
    %3118 = vmatpush1.bf16.msra.mxu0 %v2891
    %3119 = vmatprep.subr.bf16.mxu0 %v2895
    %3120 = vmatpush1.bf16.msra.mxu0 %v2894
    %3121 = vmatprep.subr.bf16.mxu0 %v2898
    %3122 = vmatpush1.bf16.msra.mxu0 %v2897
    %3123 = vmatprep.subr.bf16.mxu0 %v2901
    %3124 = vmatpush1.bf16.msra.mxu0 %v2900
    %3125 = vmatprep.subr.bf16.mxu0 %v2904
    %3126 = vmatpush1.bf16.msra.mxu0 %v2903
    %3127 = vmatprep.subr.bf16.mxu0 %v2907
    %3128 = vmatpush1.bf16.msra.mxu0 %v2906
    %3129 = vmatprep.subr.bf16.mxu0 %v2910
    %3130 = vmatpush1.bf16.msra.mxu0 %v2909
    %3131 = vmatprep.subr.bf16.mxu0 %v2913
    %3132 = vmatpush1.bf16.msra.mxu0 %v2912
    %3133 = vmatprep.subr.bf16.mxu0 %v2916
    %3134 = vmatpush1.bf16.msra.mxu0 %v2915
    %3135 = vmatprep.mubr.bf16.mxu0 %v2243
    %3136 = vmatmul.mubr.bf16.gmra.mrb[0].mxu0 %v2242
    %v3137 = vpop.f32.mrb[0].mxu0
    %v3138 = vadd.f32 %v3097, %v3137
    %v3139 = vpop.f32.mrb[0].mxu0
    %v3140 = vadd.f32 %v3099, %v3139
    %v3141 = vpop.f32.mrb[0].mxu0
    %v3142 = vpop.f32.mrb[0].mxu0
    %3143 = vdwg.mxu0
    %3144 = vmatprep.subr.bf16.mxu0 %v2919
    %3145 = vmatpush1.bf16.msra.mxu0 %v2918
    %3146 = vmatprep.subr.bf16.mxu0 %v2922
    %3147 = vmatpush1.bf16.msra.mxu0 %v2921
    %3148 = vmatprep.subr.bf16.mxu0 %v2925
    %3149 = vmatpush1.bf16.msra.mxu0 %v2924
    %3150 = vmatprep.subr.bf16.mxu0 %v2928
    %3151 = vmatpush1.bf16.msra.mxu0 %v2927
    %3152 = vmatprep.subr.bf16.mxu0 %v2931
    %3153 = vmatpush1.bf16.msra.mxu0 %v2930
    %3154 = vmatprep.subr.bf16.mxu0 %v2934
    %3155 = vmatpush1.bf16.msra.mxu0 %v2933
    %3156 = vmatprep.subr.bf16.mxu0 %v2937
    %3157 = vmatpush1.bf16.msra.mxu0 %v2936
    %3158 = vmatprep.subr.bf16.mxu0 %v2940
    %3159 = vmatpush1.bf16.msra.mxu0 %v2939
    %3160 = vmatprep.subr.bf16.mxu0 0
    %3161 = vmatpush1.bf16.msra.mxu0 0
    %3162 = vmatprep.subr.bf16.mxu0 0
    %3163 = vmatpush1.bf16.msra.mxu0 0
    %3164 = vmatprep.subr.bf16.mxu0 0
    %3165 = vmatpush1.bf16.msra.mxu0 0
    %3166 = vmatprep.subr.bf16.mxu0 0
    %3167 = vmatpush1.bf16.msra.mxu0 0
    %3168 = vmatprep.subr.bf16.mxu0 0
    %3169 = vmatpush1.bf16.msra.mxu0 0
    %3170 = vmatprep.subr.bf16.mxu0 0
    %3171 = vmatpush1.bf16.msra.mxu0 0
    %3172 = vmatprep.subr.bf16.mxu0 0
    %3173 = vmatpush1.bf16.msra.mxu0 0
    %3174 = vmatprep.subr.bf16.mxu0 0
    %3175 = vmatpush1.bf16.msra.mxu0 0
    %3176 = vmatprep.mubr.bf16.mxu0 0
    %3177 = vmatmul.mubr.bf16.gmra.mrb[0].mxu0 %v2244
    %v3178 = vpop.f32.mrb[0].mxu0
    %v3179 = vadd.f32 %v3138, %v3178
    %v3180 = vpop.f32.mrb[0].mxu0
    %v3181 = vadd.f32 %v3140, %v3180
    %v3182 = vpop.f32.mrb[0].mxu0
    %v3183 = vpop.f32.mrb[0].mxu0
    %3184 = vdwg.mxu0
    %3185 = vmatprep.subr.bf16.mxu0 0
    %3186 = vmatpush1.bf16.msra.mxu0 %v2824
    %3187 = vmatprep.subr.bf16.mxu0 0
    %3188 = vmatpush1.bf16.msra.mxu0 %v2827
    %3189 = vmatprep.subr.bf16.mxu0 0
    %3190 = vmatpush1.bf16.msra.mxu0 %v2830
    %3191 = vmatprep.subr.bf16.mxu0 0
    %3192 = vmatpush1.bf16.msra.mxu0 %v2833
    %3193 = vmatprep.subr.bf16.mxu0 0
    %3194 = vmatpush1.bf16.msra.mxu0 %v2836
    %3195 = vmatprep.subr.bf16.mxu0 0
    %3196 = vmatpush1.bf16.msra.mxu0 %v2839
    %3197 = vmatprep.subr.bf16.mxu0 0
    %3198 = vmatpush1.bf16.msra.mxu0 %v2842
    %3199 = vmatprep.subr.bf16.mxu0 0
    %3200 = vmatpush1.bf16.msra.mxu0 %v2845
    %3201 = vmatprep.subr.bf16.mxu0 0
    %3202 = vmatpush1.bf16.msra.mxu0 %v2848
    %3203 = vmatprep.subr.bf16.mxu0 0
    %3204 = vmatpush1.bf16.msra.mxu0 %v2851
    %3205 = vmatprep.subr.bf16.mxu0 0
    %3206 = vmatpush1.bf16.msra.mxu0 %v2854
    %3207 = vmatprep.subr.bf16.mxu0 0
    %3208 = vmatpush1.bf16.msra.mxu0 %v2857
    %3209 = vmatprep.subr.bf16.mxu0 0
    %3210 = vmatpush1.bf16.msra.mxu0 %v2860
    %3211 = vmatprep.subr.bf16.mxu0 0
    %3212 = vmatpush1.bf16.msra.mxu0 %v2863
    %3213 = vmatprep.subr.bf16.mxu0 0
    %3214 = vmatpush1.bf16.msra.mxu0 %v2866
    %3215 = vmatprep.subr.bf16.mxu0 0
    %3216 = vmatpush1.bf16.msra.mxu0 %v2869
    %3217 = vmatprep.mubr.bf16.mxu0 %v2241
    %3218 = vmatmul.mubr.bf16.gmra.mrb[0].mxu0 %v2240
    %v3219 = vpop.f32.mrb[0].mxu0
    %v3220 = vadd.f32 %v2418, %v3219
    %v3221 = vpop.f32.mrb[0].mxu0
    %v3222 = vpop.f32.mrb[0].mxu0
    %v3223 = vpop.f32.mrb[0].mxu0
    %3224 = vdwg.mxu0
    %3225 = vmatprep.subr.bf16.mxu0 0
    %3226 = vmatpush1.bf16.msra.mxu0 %v2872
    %3227 = vmatprep.subr.bf16.mxu0 0
    %3228 = vmatpush1.bf16.msra.mxu0 %v2875
    %3229 = vmatprep.subr.bf16.mxu0 0
    %3230 = vmatpush1.bf16.msra.mxu0 %v2878
    %3231 = vmatprep.subr.bf16.mxu0 0
    %3232 = vmatpush1.bf16.msra.mxu0 %v2881
    %3233 = vmatprep.subr.bf16.mxu0 0
    %3234 = vmatpush1.bf16.msra.mxu0 %v2884
    %3235 = vmatprep.subr.bf16.mxu0 0
    %3236 = vmatpush1.bf16.msra.mxu0 %v2887
    %3237 = vmatprep.subr.bf16.mxu0 0
    %3238 = vmatpush1.bf16.msra.mxu0 %v2890
    %3239 = vmatprep.subr.bf16.mxu0 0
    %3240 = vmatpush1.bf16.msra.mxu0 %v2893
    %3241 = vmatprep.subr.bf16.mxu0 0
    %3242 = vmatpush1.bf16.msra.mxu0 %v2896
    %3243 = vmatprep.subr.bf16.mxu0 0
    %3244 = vmatpush1.bf16.msra.mxu0 %v2899
    %3245 = vmatprep.subr.bf16.mxu0 0
    %3246 = vmatpush1.bf16.msra.mxu0 %v2902
    %3247 = vmatprep.subr.bf16.mxu0 0
    %3248 = vmatpush1.bf16.msra.mxu0 %v2905
    %3249 = vmatprep.subr.bf16.mxu0 0
    %3250 = vmatpush1.bf16.msra.mxu0 %v2908
    %3251 = vmatprep.subr.bf16.mxu0 0
    %3252 = vmatpush1.bf16.msra.mxu0 %v2911
    %3253 = vmatprep.subr.bf16.mxu0 0
    %3254 = vmatpush1.bf16.msra.mxu0 %v2914
    %3255 = vmatprep.subr.bf16.mxu0 0
    %3256 = vmatpush1.bf16.msra.mxu0 %v2917
    %3257 = vmatprep.mubr.bf16.mxu0 %v2243
    %3258 = vmatmul.mubr.bf16.gmra.mrb[0].mxu0 %v2242
    %v3259 = vpop.f32.mrb[0].mxu0
    %v3260 = vadd.f32 %v3220, %v3259
    %v3261 = vpop.f32.mrb[0].mxu0
    %v3262 = vpop.f32.mrb[0].mxu0
    %v3263 = vpop.f32.mrb[0].mxu0
    %3264 = vdwg.mxu0
    %3265 = vmatprep.subr.bf16.mxu0 0
    %3266 = vmatpush1.bf16.msra.mxu0 %v2920
    %3267 = vmatprep.subr.bf16.mxu0 0
    %3268 = vmatpush1.bf16.msra.mxu0 %v2923
    %3269 = vmatprep.subr.bf16.mxu0 0
    %3270 = vmatpush1.bf16.msra.mxu0 %v2926
    %3271 = vmatprep.subr.bf16.mxu0 0
    %3272 = vmatpush1.bf16.msra.mxu0 %v2929
    %3273 = vmatprep.subr.bf16.mxu0 0
    %3274 = vmatpush1.bf16.msra.mxu0 %v2932
    %3275 = vmatprep.subr.bf16.mxu0 0
    %3276 = vmatpush1.bf16.msra.mxu0 %v2935
    %3277 = vmatprep.subr.bf16.mxu0 0
    %3278 = vmatpush1.bf16.msra.mxu0 %v2938
    %3279 = vmatprep.subr.bf16.mxu0 0
    %3280 = vmatpush1.bf16.msra.mxu0 %v2941
    %3281 = vmatprep.subr.bf16.mxu0 0
    %3282 = vmatpush1.bf16.msra.mxu0 0
    %3283 = vmatprep.subr.bf16.mxu0 0
    %3284 = vmatpush1.bf16.msra.mxu0 0
    %3285 = vmatprep.subr.bf16.mxu0 0
    %3286 = vmatpush1.bf16.msra.mxu0 0
    %3287 = vmatprep.subr.bf16.mxu0 0
    %3288 = vmatpush1.bf16.msra.mxu0 0
    %3289 = vmatprep.subr.bf16.mxu0 0
    %3290 = vmatpush1.bf16.msra.mxu0 0
    %3291 = vmatprep.subr.bf16.mxu0 0
    %3292 = vmatpush1.bf16.msra.mxu0 0
    %3293 = vmatprep.subr.bf16.mxu0 0
    %3294 = vmatpush1.bf16.msra.mxu0 0
    %3295 = vmatprep.subr.bf16.mxu0 0
    %3296 = vmatpush1.bf16.msra.mxu0 0
    %3297 = vmatprep.mubr.bf16.mxu0 0
    %3298 = vmatmul.mubr.bf16.gmra.mrb[0].mxu0 %v2244
    %v3299 = vpop.f32.mrb[0].mxu0
    %v3300 = vadd.f32 %v3260, %v3299
    %v3301 = vpop.f32.mrb[0].mxu0
    %v3302 = vpop.f32.mrb[0].mxu0
    %v3303 = vpop.f32.mrb[0].mxu0
    %3304 = vdwg.mxu0
    %v3305 = vmax.f32 %v3179, 0.0
    %v3306 = vmax.f32 %v3181, 0.0
    %v3307 = vmax.f32 %v3300, 0.0
    %v3308 = vpack.c.bf16 %v3305, %v3305
    %v3309 = vpack.c.bf16 %v3306, %v3306
    %v3310 = vpack.c.bf16 %v3307, %v3307
    %v3311 = vld [vmem:[#allocation8] sm:$0xff]
    %v3312 = vld [vmem:[#allocation8 + $0x8] sm:$0xff]
    %v3313 = vld [vmem:[#allocation8 + $0x10] sm:$0xff]
    %v3314 = vld [vmem:[#allocation8 + $0x18] sm:$0xff]
    %v3315 = vld [vmem:[#allocation8 + $0x20] sm:$0xff]
    %v3316 = vld [vmem:[#allocation8 + $0x28] sm:$0xff]
    %v3317 = vld [vmem:[#allocation8 + $0x30] sm:$0xff]
    %v3318 = vld [vmem:[#allocation8 + $0x38] sm:$0xff]
    %v3319 = vld [vmem:[#allocation8 + $0x40] sm:$0xff]
    %v3320 = vld [vmem:[#allocation8 + $0x48] sm:$0xff]
    %v3321 = vld [vmem:[#allocation8 + $0x50] sm:$0xff]
    %v3322 = vld [vmem:[#allocation8 + $0x58] sm:$0xff]
    %v3323 = vld [vmem:[#allocation8 + $0x60] sm:$0xff]
    %v3324 = vld [vmem:[#allocation8 + $0x68] sm:$0xff]
    %v3325 = vld [vmem:[#allocation8 + $0x70] sm:$0xff]
    %v3326 = vld [vmem:[#allocation8 + $0x78] sm:$0xff]
    %v3327 = vld [vmem:[#allocation8 + $0x80] sm:$0xff]
    %v3328 = vld [vmem:[#allocation8 + $0x88] sm:$0xff]
    %v3329 = vld [vmem:[#allocation8 + $0x90] sm:$0xff]
    %v3330 = vld [vmem:[#allocation8 + $0x98] sm:$0xff]
    %v3331 = vld [vmem:[#allocation8 + $0xa0] sm:$0xff]
    %v3332 = vld [vmem:[#allocation8 + $0xa8] sm:$0xff]
    %v3333 = vld [vmem:[#allocation8 + $0xb0] sm:$0xff]
    %v3334 = vld [vmem:[#allocation8 + $0xb8] sm:$0xff]
    %v3335 = vld [vmem:[#allocation8 + $0xc0] sm:$0xff]
    %v3336 = vld [vmem:[#allocation8 + $0xc8] sm:$0xff]
    %v3337 = vld [vmem:[#allocation8 + $0xd0] sm:$0xff]
    %v3338 = vld [vmem:[#allocation8 + $0xd8] sm:$0xff]
    %v3339 = vld [vmem:[#allocation8 + $0xe0] sm:$0xff]
    %v3340 = vld [vmem:[#allocation8 + $0xe8] sm:$0xff]
    %v3341 = vld [vmem:[#allocation8 + $0xf0] sm:$0xff]
    %v3342 = vld [vmem:[#allocation8 + $0xf8] sm:$0xff]
    %v3343 = vld [vmem:[#allocation8 + $0x100] sm:$0xff]
    %v3344 = vld [vmem:[#allocation8 + $0x108] sm:$0xff]
    %v3345 = vld [vmem:[#allocation8 + $0x110] sm:$0xff]
    %v3346 = vld [vmem:[#allocation8 + $0x118] sm:$0xff]
    %v3347 = vld [vmem:[#allocation8 + $0x120] sm:$0xff]
    %v3348 = vld [vmem:[#allocation8 + $0x128] sm:$0xff]
    %v3349 = vld [vmem:[#allocation8 + $0x130] sm:$0xff]
    %v3350 = vld [vmem:[#allocation8 + $0x138] sm:$0xff]
    %v3351 = vld [vmem:[#allocation8 + $0x140] sm:$0xff]
    %v3352 = vld [vmem:[#allocation8 + $0x148] sm:$0xff]
    %v3353 = vld [vmem:[#allocation8 + $0x150] sm:$0xff]
    %v3354 = vld [vmem:[#allocation8 + $0x158] sm:$0xff]
    %v3355 = vld [vmem:[#allocation8 + $0x160] sm:$0xff]
    %v3356 = vld [vmem:[#allocation8 + $0x168] sm:$0xff]
    %v3357 = vld [vmem:[#allocation8 + $0x170] sm:$0xff]
    %v3358 = vld [vmem:[#allocation8 + $0x178] sm:$0xff]
    %v3359 = vld [vmem:[%s6] sm:$0x3]
    %v3361 = vlaneseq
    %v3362 = vshrl.u32 %v3361, 7
    %v3363 = vsub.s32 0, %v3362
    %v3364 = vrot.slane %v3359, %v3363
    %v3365 = vlaneseq
    %v3366 = vshrl.u32 %v3365, 7
    %v3367 = vsub.s32 1, %v3366
    %v3368 = vrot.slane %v3359, %v3367
    %v3419 = vunpack.c.l.b16 %v3311
    %v3420 = vunpack.c.h.b16 %v3311
    %v3421 = vunpack.c.l.b16 %v3312
    %v3422 = vunpack.c.h.b16 %v3312
    %v3423 = vunpack.c.l.b16 %v3313
    %v3424 = vunpack.c.h.b16 %v3313
    %v3425 = vunpack.c.l.b16 %v3314
    %v3426 = vunpack.c.h.b16 %v3314
    %v3427 = vunpack.c.l.b16 %v3315
    %v3428 = vunpack.c.h.b16 %v3315
    %v3429 = vunpack.c.l.b16 %v3316
    %v3430 = vunpack.c.h.b16 %v3316
    %v3431 = vunpack.c.l.b16 %v3317
    %v3432 = vunpack.c.h.b16 %v3317
    %v3433 = vunpack.c.l.b16 %v3318
    %v3434 = vunpack.c.h.b16 %v3318
    %v3435 = vunpack.c.l.b16 %v3319
    %v3436 = vunpack.c.h.b16 %v3319
    %v3437 = vunpack.c.l.b16 %v3320
    %v3438 = vunpack.c.h.b16 %v3320
    %v3439 = vunpack.c.l.b16 %v3321
    %v3440 = vunpack.c.h.b16 %v3321
    %v3441 = vunpack.c.l.b16 %v3322
    %v3442 = vunpack.c.h.b16 %v3322
    %v3443 = vunpack.c.l.b16 %v3323
    %v3444 = vunpack.c.h.b16 %v3323
    %v3445 = vunpack.c.l.b16 %v3324
    %v3446 = vunpack.c.h.b16 %v3324
    %v3447 = vunpack.c.l.b16 %v3325
    %v3448 = vunpack.c.h.b16 %v3325
    %v3449 = vunpack.c.l.b16 %v3326
    %v3450 = vunpack.c.h.b16 %v3326
    %v3451 = vunpack.c.l.b16 %v3327
    %v3452 = vunpack.c.h.b16 %v3327
    %v3453 = vunpack.c.l.b16 %v3328
    %v3454 = vunpack.c.h.b16 %v3328
    %v3455 = vunpack.c.l.b16 %v3329
    %v3456 = vunpack.c.h.b16 %v3329
    %v3457 = vunpack.c.l.b16 %v3330
    %v3458 = vunpack.c.h.b16 %v3330
    %v3459 = vunpack.c.l.b16 %v3331
    %v3460 = vunpack.c.h.b16 %v3331
    %v3461 = vunpack.c.l.b16 %v3332
    %v3462 = vunpack.c.h.b16 %v3332
    %v3463 = vunpack.c.l.b16 %v3333
    %v3464 = vunpack.c.h.b16 %v3333
    %v3465 = vunpack.c.l.b16 %v3334
    %v3466 = vunpack.c.h.b16 %v3334
    %v3467 = vunpack.c.l.b16 %v3335
    %v3468 = vunpack.c.h.b16 %v3335
    %v3469 = vunpack.c.l.b16 %v3336
    %v3470 = vunpack.c.h.b16 %v3336
    %v3471 = vunpack.c.l.b16 %v3337
    %v3472 = vunpack.c.h.b16 %v3337
    %v3473 = vunpack.c.l.b16 %v3338
    %v3474 = vunpack.c.h.b16 %v3338
    %v3475 = vunpack.c.l.b16 %v3339
    %v3476 = vunpack.c.h.b16 %v3339
    %v3477 = vunpack.c.l.b16 %v3340
    %v3478 = vunpack.c.h.b16 %v3340
    %v3479 = vunpack.c.l.b16 %v3341
    %v3480 = vunpack.c.h.b16 %v3341
    %v3481 = vunpack.c.l.b16 %v3342
    %v3482 = vunpack.c.h.b16 %v3342
    %v3483 = vunpack.c.l.b16 %v3343
    %v3484 = vunpack.c.h.b16 %v3343
    %v3485 = vunpack.c.l.b16 %v3344
    %v3486 = vunpack.c.h.b16 %v3344
    %v3487 = vunpack.c.l.b16 %v3345
    %v3488 = vunpack.c.h.b16 %v3345
    %v3489 = vunpack.c.l.b16 %v3346
    %v3490 = vunpack.c.h.b16 %v3346
    %v3491 = vunpack.c.l.b16 %v3347
    %v3492 = vunpack.c.h.b16 %v3347
    %v3493 = vunpack.c.l.b16 %v3348
    %v3494 = vunpack.c.h.b16 %v3348
    %v3495 = vunpack.c.l.b16 %v3349
    %v3496 = vunpack.c.h.b16 %v3349
    %v3497 = vunpack.c.l.b16 %v3350
    %v3498 = vunpack.c.h.b16 %v3350
    %v3499 = vunpack.c.l.b16 %v3351
    %v3500 = vunpack.c.h.b16 %v3351
    %v3501 = vunpack.c.l.b16 %v3352
    %v3502 = vunpack.c.h.b16 %v3352
    %v3503 = vunpack.c.l.b16 %v3353
    %v3504 = vunpack.c.h.b16 %v3353
    %v3505 = vunpack.c.l.b16 %v3354
    %v3506 = vunpack.c.h.b16 %v3354
    %v3507 = vunpack.c.l.b16 %v3355
    %v3508 = vunpack.c.h.b16 %v3355
    %v3509 = vunpack.c.l.b16 %v3356
    %v3510 = vunpack.c.h.b16 %v3356
    %v3511 = vunpack.c.l.b16 %v3357
    %v3512 = vunpack.c.h.b16 %v3357
    %v3513 = vunpack.c.l.b16 %v3358
    %v3514 = vunpack.c.h.b16 %v3358
    %v3515 = vpack.c.b16 %v3421, %v3419
    %v3516 = vpack.c.b16 %v3422, %v3420
    %v3517 = vpack.c.b16 %v3425, %v3423
    %v3518 = vpack.c.b16 %v3426, %v3424
    %v3519 = vpack.c.b16 %v3429, %v3427
    %v3520 = vpack.c.b16 %v3430, %v3428
    %v3521 = vpack.c.b16 %v3433, %v3431
    %v3522 = vpack.c.b16 %v3434, %v3432
    %v3523 = vpack.c.b16 %v3437, %v3435
    %v3524 = vpack.c.b16 %v3438, %v3436
    %v3525 = vpack.c.b16 %v3441, %v3439
    %v3526 = vpack.c.b16 %v3442, %v3440
    %v3527 = vpack.c.b16 %v3445, %v3443
    %v3528 = vpack.c.b16 %v3446, %v3444
    %v3529 = vpack.c.b16 %v3449, %v3447
    %v3530 = vpack.c.b16 %v3450, %v3448
    %v3531 = vpack.c.b16 %v3453, %v3451
    %v3532 = vpack.c.b16 %v3454, %v3452
    %v3533 = vpack.c.b16 %v3457, %v3455
    %v3534 = vpack.c.b16 %v3458, %v3456
    %v3535 = vpack.c.b16 %v3461, %v3459
    %v3536 = vpack.c.b16 %v3462, %v3460
    %v3537 = vpack.c.b16 %v3465, %v3463
    %v3538 = vpack.c.b16 %v3466, %v3464
    %v3539 = vpack.c.b16 %v3469, %v3467
    %v3540 = vpack.c.b16 %v3470, %v3468
    %v3541 = vpack.c.b16 %v3473, %v3471
    %v3542 = vpack.c.b16 %v3474, %v3472
    %v3543 = vpack.c.b16 %v3477, %v3475
    %v3544 = vpack.c.b16 %v3478, %v3476
    %v3545 = vpack.c.b16 %v3481, %v3479
    %v3546 = vpack.c.b16 %v3482, %v3480
    %v3547 = vpack.c.b16 %v3485, %v3483
    %v3548 = vpack.c.b16 %v3486, %v3484
    %v3549 = vpack.c.b16 %v3489, %v3487
    %v3550 = vpack.c.b16 %v3490, %v3488
    %v3551 = vpack.c.b16 %v3493, %v3491
    %v3552 = vpack.c.b16 %v3494, %v3492
    %v3553 = vpack.c.b16 %v3497, %v3495
    %v3554 = vpack.c.b16 %v3498, %v3496
    %v3555 = vpack.c.b16 %v3501, %v3499
    %v3556 = vpack.c.b16 %v3502, %v3500
    %v3557 = vpack.c.b16 %v3505, %v3503
    %v3558 = vpack.c.b16 %v3506, %v3504
    %v3559 = vpack.c.b16 %v3509, %v3507
    %v3560 = vpack.c.b16 %v3510, %v3508
    %v3561 = vpack.c.b16 %v3513, %v3511
    %v3562 = vpack.c.b16 %v3514, %v3512
    %3611 = vmatprep.subr.bf16.mxu0 %v3516
    %3612 = vmatpush1.bf16.msra.mxu0 %v3515
    %3613 = vmatprep.subr.bf16.mxu0 %v3518
    %3614 = vmatpush1.bf16.msra.mxu0 %v3517
    %3615 = vmatprep.subr.bf16.mxu0 %v3520
    %3616 = vmatpush1.bf16.msra.mxu0 %v3519
    %3617 = vmatprep.subr.bf16.mxu0 %v3522
    %3618 = vmatpush1.bf16.msra.mxu0 %v3521
    %3619 = vmatprep.subr.bf16.mxu0 %v3524
    %3620 = vmatpush1.bf16.msra.mxu0 %v3523
    %3621 = vmatprep.subr.bf16.mxu0 %v3526
    %3622 = vmatpush1.bf16.msra.mxu0 %v3525
    %3623 = vmatprep.subr.bf16.mxu0 %v3528
    %3624 = vmatpush1.bf16.msra.mxu0 %v3527
    %3625 = vmatprep.subr.bf16.mxu0 %v3530
    %3626 = vmatpush1.bf16.msra.mxu0 %v3529
    %3627 = vmatprep.subr.bf16.mxu0 %v3532
    %3628 = vmatpush1.bf16.msra.mxu0 %v3531
    %3629 = vmatprep.subr.bf16.mxu0 %v3534
    %3630 = vmatpush1.bf16.msra.mxu0 %v3533
    %3631 = vmatprep.subr.bf16.mxu0 %v3536
    %3632 = vmatpush1.bf16.msra.mxu0 %v3535
    %3633 = vmatprep.subr.bf16.mxu0 %v3538
    %3634 = vmatpush1.bf16.msra.mxu0 %v3537
    %3635 = vmatprep.subr.bf16.mxu0 %v3540
    %3636 = vmatpush1.bf16.msra.mxu0 %v3539
    %3637 = vmatprep.subr.bf16.mxu0 %v3542
    %3638 = vmatpush1.bf16.msra.mxu0 %v3541
    %3639 = vmatprep.subr.bf16.mxu0 %v3544
    %3640 = vmatpush1.bf16.msra.mxu0 %v3543
    %3641 = vmatprep.subr.bf16.mxu0 %v3546
    %3642 = vmatpush1.bf16.msra.mxu0 %v3545
    %3643 = vmatprep.mubr.bf16.mxu0 %v3309
    %3644 = vmatmul.mubr.bf16.gmra.mrb[0].mxu0 %v3308
    %v3645 = vpop.f32.mrb[0].mxu0
    %v3646 = vadd.f32 %v3364, %v3645
    %v3647 = vpop.f32.mrb[0].mxu0
    %v3648 = vadd.f32 %v3368, %v3647
    %v3649 = vpop.f32.mrb[0].mxu0
    %v3650 = vpop.f32.mrb[0].mxu0
    %3651 = vdwg.mxu0
    %3652 = vmatprep.subr.bf16.mxu0 %v3548
    %3653 = vmatpush1.bf16.msra.mxu0 %v3547
    %3654 = vmatprep.subr.bf16.mxu0 %v3550
    %3655 = vmatpush1.bf16.msra.mxu0 %v3549
    %3656 = vmatprep.subr.bf16.mxu0 %v3552
    %3657 = vmatpush1.bf16.msra.mxu0 %v3551
    %3658 = vmatprep.subr.bf16.mxu0 %v3554
    %3659 = vmatpush1.bf16.msra.mxu0 %v3553
    %3660 = vmatprep.subr.bf16.mxu0 %v3556
    %3661 = vmatpush1.bf16.msra.mxu0 %v3555
    %3662 = vmatprep.subr.bf16.mxu0 %v3558
    %3663 = vmatpush1.bf16.msra.mxu0 %v3557
    %3664 = vmatprep.subr.bf16.mxu0 %v3560
    %3665 = vmatpush1.bf16.msra.mxu0 %v3559
    %3666 = vmatprep.subr.bf16.mxu0 %v3562
    %3667 = vmatpush1.bf16.msra.mxu0 %v3561
    %3668 = vmatprep.subr.bf16.mxu0 0
    %3669 = vmatpush1.bf16.msra.mxu0 0
    %3670 = vmatprep.subr.bf16.mxu0 0
    %3671 = vmatpush1.bf16.msra.mxu0 0
    %3672 = vmatprep.subr.bf16.mxu0 0
    %3673 = vmatpush1.bf16.msra.mxu0 0
    %3674 = vmatprep.subr.bf16.mxu0 0
    %3675 = vmatpush1.bf16.msra.mxu0 0
    %3676 = vmatprep.subr.bf16.mxu0 0
    %3677 = vmatpush1.bf16.msra.mxu0 0
    %3678 = vmatprep.subr.bf16.mxu0 0
    %3679 = vmatpush1.bf16.msra.mxu0 0
    %3680 = vmatprep.subr.bf16.mxu0 0
    %3681 = vmatpush1.bf16.msra.mxu0 0
    %3682 = vmatprep.subr.bf16.mxu0 0
    %3683 = vmatpush1.bf16.msra.mxu0 0
    %3684 = vmatprep.mubr.bf16.mxu0 0
    %3685 = vmatmul.mubr.bf16.gmra.mrb[0].mxu0 %v3310
    %v3686 = vpop.f32.mrb[0].mxu0
    %v3687 = vadd.f32 %v3646, %v3686
    %v3688 = vpop.f32.mrb[0].mxu0
    %v3689 = vadd.f32 %v3648, %v3688
    %v3690 = vpop.f32.mrb[0].mxu0
    %v3691 = vpop.f32.mrb[0].mxu0
    %3692 = vdwg.mxu0
    %v3693 = vmax.f32 %v3687, 0.0
    %v3694 = vmax.f32 %v3689, 0.0
    %v3695 = vpack.c.bf16 %v3693, %v3693
    %v3696 = vpack.c.bf16 %v3694, %v3694
    %v3697 = vld [vmem:[#allocation10] sm:$0xf]
    %v3698 = vld [vmem:[#allocation10 + $0x4] sm:$0xf]
    %v3699 = vld [vmem:[#allocation10 + $0x8] sm:$0xf]
    %v3700 = vld [vmem:[#allocation10 + $0xc] sm:$0xf]
    %v3701 = vld [vmem:[#allocation10 + $0x10] sm:$0xf]
    %v3702 = vld [vmem:[#allocation10 + $0x14] sm:$0xf]
    %v3703 = vld [vmem:[#allocation10 + $0x18] sm:$0xf]
    %v3704 = vld [vmem:[#allocation10 + $0x1c] sm:$0xf]
    %v3705 = vld [vmem:[#allocation10 + $0x20] sm:$0xf]
    %v3706 = vld [vmem:[#allocation10 + $0x24] sm:$0xf]
    %v3707 = vld [vmem:[#allocation10 + $0x28] sm:$0xf]
    %v3708 = vld [vmem:[#allocation10 + $0x2c] sm:$0xf]
    %v3709 = vld [vmem:[#allocation10 + $0x30] sm:$0xf]
    %v3710 = vld [vmem:[#allocation10 + $0x34] sm:$0xf]
    %v3711 = vld [vmem:[#allocation10 + $0x38] sm:$0xf]
    %v3712 = vld [vmem:[#allocation10 + $0x3c] sm:$0xf]
    %v3713 = vld [vmem:[#allocation10 + $0x40] sm:$0xf]
    %v3714 = vld [vmem:[#allocation10 + $0x44] sm:$0xf]
    %v3715 = vld [vmem:[#allocation10 + $0x48] sm:$0xf]
    %v3716 = vld [vmem:[#allocation10 + $0x4c] sm:$0xf]
    %v3717 = vld [vmem:[#allocation10 + $0x50] sm:$0xf]
    %v3718 = vld [vmem:[#allocation10 + $0x54] sm:$0xf]
    %v3719 = vld [vmem:[#allocation10 + $0x58] sm:$0xf]
    %v3720 = vld [vmem:[#allocation10 + $0x5c] sm:$0xf]
    %v3721 = vld [vmem:[#allocation10 + $0x60] sm:$0xf]
    %v3722 = vld [vmem:[#allocation10 + $0x64] sm:$0xf]
    %v3723 = vld [vmem:[#allocation10 + $0x68] sm:$0xf]
    %v3724 = vld [vmem:[#allocation10 + $0x6c] sm:$0xf]
    %v3725 = vld [vmem:[#allocation10 + $0x70] sm:$0xf]
    %v3726 = vld [vmem:[#allocation10 + $0x74] sm:$0xf]
    %v3727 = vld [vmem:[#allocation10 + $0x78] sm:$0xf]
    %v3728 = vld [vmem:[#allocation10 + $0x7c] sm:$0xf]
    %v3729 = vld [vmem:[%s8] sm:$0x1]
    %v3731 = vlaneseq
    %v3732 = vshrl.u32 %v3731, 7
    %v3733 = vsub.s32 0, %v3732
    %v3734 = vrot.slane %v3729, %v3733
    %v3768 = vunpack.c.l.b16 %v3697
    %v3769 = vunpack.c.l.b16 %v3698
    %v3770 = vunpack.c.l.b16 %v3699
    %v3771 = vunpack.c.l.b16 %v3700
    %v3772 = vunpack.c.l.b16 %v3701
    %v3773 = vunpack.c.l.b16 %v3702
    %v3774 = vunpack.c.l.b16 %v3703
    %v3775 = vunpack.c.l.b16 %v3704
    %v3776 = vunpack.c.l.b16 %v3705
    %v3777 = vunpack.c.l.b16 %v3706
    %v3778 = vunpack.c.l.b16 %v3707
    %v3779 = vunpack.c.l.b16 %v3708
    %v3780 = vunpack.c.l.b16 %v3709
    %v3781 = vunpack.c.l.b16 %v3710
    %v3782 = vunpack.c.l.b16 %v3711
    %v3783 = vunpack.c.l.b16 %v3712
    %v3784 = vunpack.c.l.b16 %v3713
    %v3785 = vunpack.c.l.b16 %v3714
    %v3786 = vunpack.c.l.b16 %v3715
    %v3787 = vunpack.c.l.b16 %v3716
    %v3788 = vunpack.c.l.b16 %v3717
    %v3789 = vunpack.c.l.b16 %v3718
    %v3790 = vunpack.c.l.b16 %v3719
    %v3791 = vunpack.c.l.b16 %v3720
    %v3792 = vunpack.c.l.b16 %v3721
    %v3793 = vunpack.c.l.b16 %v3722
    %v3794 = vunpack.c.l.b16 %v3723
    %v3795 = vunpack.c.l.b16 %v3724
    %v3796 = vunpack.c.l.b16 %v3725
    %v3797 = vunpack.c.l.b16 %v3726
    %v3798 = vunpack.c.l.b16 %v3727
    %v3799 = vunpack.c.l.b16 %v3728
    %v3800 = vpack.c.b16 %v3769, %v3768
    %v3801 = vpack.c.b16 %v3771, %v3770
    %v3802 = vpack.c.b16 %v3773, %v3772
    %v3803 = vpack.c.b16 %v3775, %v3774
    %v3804 = vpack.c.b16 %v3777, %v3776
    %v3805 = vpack.c.b16 %v3779, %v3778
    %v3806 = vpack.c.b16 %v3781, %v3780
    %v3807 = vpack.c.b16 %v3783, %v3782
    %v3808 = vpack.c.b16 %v3785, %v3784
    %v3809 = vpack.c.b16 %v3787, %v3786
    %v3810 = vpack.c.b16 %v3789, %v3788
    %v3811 = vpack.c.b16 %v3791, %v3790
    %v3812 = vpack.c.b16 %v3793, %v3792
    %v3813 = vpack.c.b16 %v3795, %v3794
    %v3814 = vpack.c.b16 %v3797, %v3796
    %v3815 = vpack.c.b16 %v3799, %v3798
    %3832 = vmatprep.subr.bf16.mxu0 0
    %3833 = vmatpush1.bf16.msra.mxu0 %v3800
    %3834 = vmatprep.subr.bf16.mxu0 0
    %3835 = vmatpush1.bf16.msra.mxu0 %v3801
    %3836 = vmatprep.subr.bf16.mxu0 0
    %3837 = vmatpush1.bf16.msra.mxu0 %v3802
    %3838 = vmatprep.subr.bf16.mxu0 0
    %3839 = vmatpush1.bf16.msra.mxu0 %v3803
    %3840 = vmatprep.subr.bf16.mxu0 0
    %3841 = vmatpush1.bf16.msra.mxu0 %v3804
    %3842 = vmatprep.subr.bf16.mxu0 0
    %3843 = vmatpush1.bf16.msra.mxu0 %v3805
    %3844 = vmatprep.subr.bf16.mxu0 0
    %3845 = vmatpush1.bf16.msra.mxu0 %v3806
    %3846 = vmatprep.subr.bf16.mxu0 0
    %3847 = vmatpush1.bf16.msra.mxu0 %v3807
    %3848 = vmatprep.subr.bf16.mxu0 0
    %3849 = vmatpush1.bf16.msra.mxu0 %v3808
    %3850 = vmatprep.subr.bf16.mxu0 0
    %3851 = vmatpush1.bf16.msra.mxu0 %v3809
    %3852 = vmatprep.subr.bf16.mxu0 0
    %3853 = vmatpush1.bf16.msra.mxu0 %v3810
    %3854 = vmatprep.subr.bf16.mxu0 0
    %3855 = vmatpush1.bf16.msra.mxu0 %v3811
    %3856 = vmatprep.subr.bf16.mxu0 0
    %3857 = vmatpush1.bf16.msra.mxu0 %v3812
    %3858 = vmatprep.subr.bf16.mxu0 0
    %3859 = vmatpush1.bf16.msra.mxu0 %v3813
    %3860 = vmatprep.subr.bf16.mxu0 0
    %3861 = vmatpush1.bf16.msra.mxu0 %v3814
    %3862 = vmatprep.subr.bf16.mxu0 0
    %3863 = vmatpush1.bf16.msra.mxu0 %v3815
    %3864 = vmatprep.mubr.bf16.mxu0 %v3696
    %3865 = vmatmul.mubr.bf16.gmra.mrb[0].mxu0 %v3695
    %v3866 = vpop.f32.mrb[0].mxu0
    %v3867 = vadd.f32 %v3734, %v3866
    %v3868 = vpop.f32.mrb[0].mxu0
    %v3869 = vpop.f32.mrb[0].mxu0
    %v3870 = vpop.f32.mrb[0].mxu0
    %3871 = vdwg.mxu0
    %v3872 = vmax.f32 %v3867, 0.0
    %v3873 = vpack.c.bf16 %v3872, %v3872
    %v3874 = vld [vmem:[#allocation11] sm:$0xf]
    %v3875 = vld [vmem:[#allocation11 + $0x4] sm:$0xf]
    %v3876 = vld [vmem:[#allocation11 + $0x8] sm:$0xf]
    %v3877 = vld [vmem:[#allocation11 + $0xc] sm:$0xf]
    %v3878 = vld [vmem:[#allocation11 + $0x10] sm:$0xf]
    %v3879 = vld [vmem:[#allocation11 + $0x14] sm:$0xf]
    %v3880 = vld [vmem:[#allocation11 + $0x18] sm:$0xf]
    %v3881 = vld [vmem:[#allocation11 + $0x1c] sm:$0xf]
    %v3882 = vld [vmem:[#allocation11 + $0x20] sm:$0xf]
    %v3883 = vld [vmem:[#allocation11 + $0x24] sm:$0xf]
    %v3884 = vld [vmem:[#allocation11 + $0x28] sm:$0xf]
    %v3885 = vld [vmem:[#allocation11 + $0x2c] sm:$0xf]
    %v3886 = vld [vmem:[#allocation11 + $0x30] sm:$0xf]
    %v3887 = vld [vmem:[#allocation11 + $0x34] sm:$0xf]
    %v3888 = vld [vmem:[#allocation11 + $0x38] sm:$0xf]
    %v3889 = vld [vmem:[#allocation11 + $0x3c] sm:$0xf]
    %v3890 = vld [vmem:[%s10] sm:$0x1]
    %v3892 = vlaneseq
    %v3893 = vshrl.u32 %v3892, 7
    %v3894 = vsub.s32 0, %v3893
    %v3895 = vrot.slane %v3890, %v3894
    %v3913 = vunpack.c.l.b16 %v3874
    %v3914 = vunpack.c.l.b16 %v3875
    %v3915 = vunpack.c.l.b16 %v3876
    %v3916 = vunpack.c.l.b16 %v3877
    %v3917 = vunpack.c.l.b16 %v3878
    %v3918 = vunpack.c.l.b16 %v3879
    %v3919 = vunpack.c.l.b16 %v3880
    %v3920 = vunpack.c.l.b16 %v3881
    %v3921 = vunpack.c.l.b16 %v3882
    %v3922 = vunpack.c.l.b16 %v3883
    %v3923 = vunpack.c.l.b16 %v3884
    %v3924 = vunpack.c.l.b16 %v3885
    %v3925 = vunpack.c.l.b16 %v3886
    %v3926 = vunpack.c.l.b16 %v3887
    %v3927 = vunpack.c.l.b16 %v3888
    %v3928 = vunpack.c.l.b16 %v3889
    %v3929 = vpack.c.b16 %v3914, %v3913
    %v3930 = vpack.c.b16 %v3916, %v3915
    %v3931 = vpack.c.b16 %v3918, %v3917
    %v3932 = vpack.c.b16 %v3920, %v3919
    %v3933 = vpack.c.b16 %v3922, %v3921
    %v3934 = vpack.c.b16 %v3924, %v3923
    %v3935 = vpack.c.b16 %v3926, %v3925
    %v3936 = vpack.c.b16 %v3928, %v3927
    %3945 = vmatprep.subr.bf16.mxu0 0
    %3946 = vmatpush1.bf16.msra.mxu0 %v3929
    %3947 = vmatprep.subr.bf16.mxu0 0
    %3948 = vmatpush1.bf16.msra.mxu0 %v3930
    %3949 = vmatprep.subr.bf16.mxu0 0
    %3950 = vmatpush1.bf16.msra.mxu0 %v3931
    %3951 = vmatprep.subr.bf16.mxu0 0
    %3952 = vmatpush1.bf16.msra.mxu0 %v3932
    %3953 = vmatprep.subr.bf16.mxu0 0
    %3954 = vmatpush1.bf16.msra.mxu0 %v3933
    %3955 = vmatprep.subr.bf16.mxu0 0
    %3956 = vmatpush1.bf16.msra.mxu0 %v3934
    %3957 = vmatprep.subr.bf16.mxu0 0
    %3958 = vmatpush1.bf16.msra.mxu0 %v3935
    %3959 = vmatprep.subr.bf16.mxu0 0
    %3960 = vmatpush1.bf16.msra.mxu0 %v3936
    %3961 = vmatprep.subr.bf16.mxu0 0
    %3962 = vmatpush1.bf16.msra.mxu0 0
    %3963 = vmatprep.subr.bf16.mxu0 0
    %3964 = vmatpush1.bf16.msra.mxu0 0
    %3965 = vmatprep.subr.bf16.mxu0 0
    %3966 = vmatpush1.bf16.msra.mxu0 0
    %3967 = vmatprep.subr.bf16.mxu0 0
    %3968 = vmatpush1.bf16.msra.mxu0 0
    %3969 = vmatprep.subr.bf16.mxu0 0
    %3970 = vmatpush1.bf16.msra.mxu0 0
    %3971 = vmatprep.subr.bf16.mxu0 0
    %3972 = vmatpush1.bf16.msra.mxu0 0
    %3973 = vmatprep.subr.bf16.mxu0 0
    %3974 = vmatpush1.bf16.msra.mxu0 0
    %3975 = vmatprep.subr.bf16.mxu0 0
    %3976 = vmatpush1.bf16.msra.mxu0 0
    %3977 = vmatprep.mubr.bf16.mxu0 0
    %3978 = vmatmul.mubr.bf16.gmra.mrb[0].mxu0 %v3873
    %v3979 = vpop.f32.mrb[0].mxu0
    %v3980 = vadd.f32 %v3895, %v3979
    %v3981 = vpop.f32.mrb[0].mxu0
    %v3982 = vpop.f32.mrb[0].mxu0
    %v3983 = vpop.f32.mrb[0].mxu0
    %3984 = vdwg.mxu0
    %3985 = vst [vmem:[#allocation13] sm:$0xff] %v3980
    // Predicated region
    $region70: #{tpu_custom_call.1} parent=1 // pred_check
      _
    $region71: #{tpu_custom_call.1} parent=1 // pred_check_branch
      %3987 = sbr.rel (0) target = $region73
    $region72: #{tpu_custom_call.1} parent=1 // pred_region
      %s3989 = ssub.s32 128, 128
      %3990 = vsyncadd [#allocation4], %s3989
      %s3992 = sshll.u32 [#allocation13], 4
      %s3993 = int_to_ptr.vmem [resolvable:$true] %s3992
      %3995 = dma.vmem_to_hbm [thread:$0]  %s3993, 128, %s11, [#allocation4]
    $region73: #{tpu_custom_call.1} parent=1 // pred_fallthru
      _
    // Predicated region
    $region74: #{tpu_custom_call.1} parent=1 // pred_check
      _
    $region75: #{tpu_custom_call.1} parent=1 // pred_check_branch
      %3997 = sbr.rel (0) target = $region77
    $region76: #{tpu_custom_call.1} parent=1 // pred_region
      %3998 = dma.done [#allocation4], 128
    $region77: #{tpu_custom_call.1} parent=1 // pred_fallthru
      _
    %3999 = vsyncpa [#allocation3], 1
    %4000 = vsyncpa [#allocation6], 1
    %4001 = vsyncpa [#allocation9], 1
    %4002 = vsyncpa [#allocation12], 1
    %4003 = vsyncpa [#allocation4], 1

</llo_original>
